<compile_context>
chip_gen: v7x
topology: tpu7x:2x2x1
jax: 0.10.0
libtpu: 0.0.40
codegen_flags: <defaults>
</compile_context>

<pallas_src>
import functools
import math

import jax
import jax.numpy as jnp
from jax.experimental import pallas as pl
from jax.experimental.pallas import tpu as pltpu

PADDING_IDX = 1   # ESM-1b alphabet special tokens
MASK_IDX = 32
CLS_IDX = 0
EOS_IDX = 2
LN_EPS = 1e-5


# ----------------------------- tiling helper --------------------------------

def _pick_tile(dim, target, align):
    """Largest tile <= target that is a multiple of `align` and divides `dim`;
    falls back to the full dim (always legal: block == full array dim)."""
    if dim <= target:
        return dim
    t = (target // align) * align
    while t >= align:
        if dim % t == 0:
            return t
        t -= align
    return dim


# ----------------------------- Pallas kernels --------------------------------

def _linear_kernel(x_ref, w_ref, b_ref, o_ref, acc_ref, *, activation):
    @pl.when(pl.program_id(2) == 0)
    def _init():
        acc_ref[...] = jnp.zeros_like(acc_ref)

    x = x_ref[...].astype(jnp.bfloat16)          # bf16 MXU operands
    w = w_ref[...].astype(jnp.bfloat16)
    acc_ref[...] += jnp.dot(x, w, preferred_element_type=jnp.float32)

    @pl.when(pl.program_id(2) == pl.num_programs(2) - 1)
    def _finalize():
        y = acc_ref[...] + b_ref[...].astype(jnp.float32)
        if activation == "silu":
            y = y * (1.0 / (1.0 + jnp.exp(-y)))
        o_ref[...] = y.astype(o_ref.dtype)


def linear(x, w_t, bias, activation="none", out_dtype=jnp.float32):
    """x: (M, K) f32/bf16; w_t: (K, N) bf16 (pre-transposed); bias: (1, N) f32."""
    M, K = x.shape
    K2, N = w_t.shape
    assert K == K2
    tm = _pick_tile(M, 256, 8)
    tn = _pick_tile(N, 512, 128)
    tk = _pick_tile(K, 512, 128)
    grid = (M // tm, N // tn, K // tk)
    return pl.pallas_call(
        functools.partial(_linear_kernel, activation=activation),
        grid=grid,
        in_specs=[
            pl.BlockSpec((tm, tk), lambda i, j, k: (i, k)),
            pl.BlockSpec((tk, tn), lambda i, j, k: (k, j)),
            pl.BlockSpec((1, tn), lambda i, j, k: (0, j)),
        ],
        out_specs=pl.BlockSpec((tm, tn), lambda i, j, k: (i, j)),
        out_shape=jax.ShapeDtypeStruct((M, N), out_dtype),
        scratch_shapes=[pltpu.VMEM((tm, tn), jnp.float32)],
        compiler_params=pltpu.CompilerParams(
            dimension_semantics=("parallel", "parallel", "arbitrary")),
    )(x, w_t, bias)


def _ln_body(s, g, b, eps):
    mean = jnp.mean(s, axis=-1, keepdims=True)
    xc = s - mean
    var = jnp.mean(xc * xc, axis=-1, keepdims=True)
    return xc * jax.lax.rsqrt(var + eps) * g + b


def _layernorm_kernel(x_ref, g_ref, b_ref, o_ref, *, eps):
    s = x_ref[...].astype(jnp.float32)
    o_ref[...] = _ln_body(s, g_ref[...], b_ref[...], eps).astype(o_ref.dtype)


def _add_layernorm_kernel(x_ref, y_ref, g_ref, b_ref, s_ref, o_ref, *, eps):
    s = x_ref[...].astype(jnp.float32) + y_ref[...].astype(jnp.float32)
    s_ref[...] = s.astype(s_ref.dtype)
    o_ref[...] = _ln_body(s, g_ref[...], b_ref[...], eps).astype(o_ref.dtype)


def layer_norm(x, gamma, beta, eps=LN_EPS):
    M, D = x.shape
    tm = _pick_tile(M, 1024, 8)
    return pl.pallas_call(
        functools.partial(_layernorm_kernel, eps=eps),
        grid=(M // tm,),
        in_specs=[pl.BlockSpec((tm, D), lambda i: (i, 0)),
                  pl.BlockSpec((1, D), lambda i: (0, 0)),
                  pl.BlockSpec((1, D), lambda i: (0, 0))],
        out_specs=pl.BlockSpec((tm, D), lambda i: (i, 0)),
        out_shape=jax.ShapeDtypeStruct((M, D), jnp.float32),
        compiler_params=pltpu.CompilerParams(dimension_semantics=("parallel",)),
    )(x, gamma, beta)


def add_layer_norm(x, y, gamma, beta, eps=LN_EPS):
    """Fused residual add + LayerNorm: returns (x + y, LN(x + y))."""
    M, D = x.shape
    tm = _pick_tile(M, 1024, 8)
    s, o = pl.pallas_call(
        functools.partial(_add_layernorm_kernel, eps=eps),
        grid=(M // tm,),
        in_specs=[pl.BlockSpec((tm, D), lambda i: (i, 0)),
                  pl.BlockSpec((tm, D), lambda i: (i, 0)),
                  pl.BlockSpec((1, D), lambda i: (0, 0)),
                  pl.BlockSpec((1, D), lambda i: (0, 0))],
        out_specs=[pl.BlockSpec((tm, D), lambda i: (i, 0)),
                   pl.BlockSpec((tm, D), lambda i: (i, 0))],
        out_shape=[jax.ShapeDtypeStruct((M, D), jnp.float32),
                   jax.ShapeDtypeStruct((M, D), jnp.float32)],
        compiler_params=pltpu.CompilerParams(dimension_semantics=("parallel",)),
    )(x, y, gamma, beta)
    return s, o


def _rope(x, cos, sin, head_dim):
    # rotate_half via slice+concat (VPU/XLU work; keeps the MXU free).
    half = head_dim // 2
    rot = jnp.concatenate([-x[:, half:], x[:, :half]], axis=-1)
    return x * cos + rot * sin


def _attention_kernel(qkv_ref, bias_ref, cos_ref, sin_ref, o_ref,
                      *, num_heads, head_dim, scale):
    # One grid step = one batch element, all heads.
    E = num_heads * head_dim
    qkv = qkv_ref[0].astype(jnp.float32)            # (T, 3E)
    bias = bias_ref[0]                              # (1, T) additive key-padding bias
    cos = cos_ref[...]
    sin = sin_ref[...]

    outs = []
    for h in range(num_heads):
        lo, hi = h * head_dim, (h + 1) * head_dim
        q = qkv[:, lo:hi] * scale                   # ESM scales q before rotary
        k = qkv[:, E + lo:E + hi]
        v = qkv[:, 2 * E + lo:2 * E + hi]
        qr = _rope(q, cos, sin, head_dim).astype(jnp.bfloat16)
        kr = _rope(k, cos, sin, head_dim).astype(jnp.bfloat16)
        s = jax.lax.dot_general(qr, kr, (((1,), (1,)), ((), ())),
                                preferred_element_type=jnp.float32)   # (T, T)
        s = s + bias
        m = jnp.max(s, axis=-1, keepdims=True)
        p = jnp.exp(s - m)
        denom = jnp.sum(p, axis=-1, keepdims=True)
        p = p * pl.reciprocal(denom, approx=True)
        o = jnp.dot(p.astype(jnp.bfloat16), v.astype(jnp.bfloat16),
                    preferred_element_type=jnp.float32)               # (T, Dh)
        outs.append(o)
    # Single lane-dense (T, E) store instead of per-head sub-128-lane stores.
    o_ref[0] = jnp.concatenate(outs, axis=-1).astype(o_ref.dtype)


# ----------------------------- JAX glue --------------------------------------

def gelu_exact(x):
    # TODO(synk): exact erf-GELU kept as XLA glue (Mosaic erf lowering not guaranteed
    # in-kernel); fusing it into the fc1 epilogue would need the tanh approximation.
    return 0.5 * x * (1.0 + jax.lax.erf(x / math.sqrt(2.0)))


def timestep_embedding(timesteps, dim, max_period=10000):
    half = dim // 2
    freqs = jnp.exp(-math.log(max_period) *
                    jnp.arange(half, dtype=jnp.float32) / half)
    args = timesteps[:, None].astype(jnp.float32) * freqs[None]
    emb = jnp.concatenate([jnp.cos(args), jnp.sin(args)], axis=-1)
    if dim % 2:
        emb = jnp.concatenate([emb, jnp.zeros_like(emb[:, :1])], axis=-1)
    return emb


def rotary_tables(seq_len, dim):
    inv_freq = 1.0 / (10000.0 ** (jnp.arange(0, dim, 2, dtype=jnp.float32) / dim))
    tpos = jnp.arange(seq_len, dtype=jnp.float32)
    freqs = jnp.outer(tpos, inv_freq)                 # (T, dim/2)
    emb = jnp.concatenate([freqs, freqs], axis=-1)    # (T, dim)
    return jnp.cos(emb), jnp.sin(emb)


def multihead_attention(x, p, bias, cos, sin, num_heads):
    B, T, E = x.shape
    Dh = E // num_heads
    x2 = x.reshape(B * T, E)
    qkv = linear(x2, p["qkv_wt"], p["qkv_b"]).reshape(B, T, 3 * E)   # fused Q/K/V

    # TODO(synk): for T >= ~1k, switch this to a flash-style KV-tiled online-softmax
    # loop to bound VMEM (especially on v7x's 64 MiB VMEM).
    o = pl.pallas_call(
        functools.partial(_attention_kernel, num_heads=num_heads,
                          head_dim=Dh, scale=Dh ** -0.5),
        grid=(B,),
        in_specs=[
            pl.BlockSpec((1, T, 3 * E), lambda b: (b, 0, 0)),
            pl.BlockSpec((1, 1, T), lambda b: (b, 0, 0)),
            pl.BlockSpec((T, Dh), lambda b: (0, 0)),
            pl.BlockSpec((T, Dh), lambda b: (0, 0)),
        ],
        out_specs=pl.BlockSpec((1, T, E), lambda b: (b, 0, 0)),
        out_shape=jax.ShapeDtypeStruct((B, T, E), jnp.float32),
        compiler_params=pltpu.CompilerParams(dimension_semantics=("parallel",)),
    )(qkv, bias, cos, sin)

    out = linear(o.reshape(B * T, E), p["out_wt"], p["out_b"])
    return out.reshape(B, T, E)


def esm2_forward(params, tokens, x0, t, *, num_heads, token_dropout=True):
    B, T = tokens.shape
    E = x0.shape[-1]
    Dh = E // num_heads

    # time embedding: sinusoidal -> Linear -> SiLU -> Linear  (SiLU fused in kernel)
    temb = timestep_embedding(t, E)                                   # (B, E)
    temb = linear(temb, params["time_wt1"], params["time_b1"], activation="silu")
    emb_t = linear(temb, params["time_wt2"], params["time_b2"])       # (B, E)

    padding_mask = tokens == PADDING_IDX                              # (B, T)
    x = x0 + emb_t[:, None, :]
    if token_dropout:
        x = jnp.where((tokens == MASK_IDX)[..., None], 0.0, x)
        mask_ratio_train = 0.15 * 0.8
        src_lengths = jnp.maximum(
            jnp.sum(jnp.logical_not(padding_mask), axis=-1).astype(jnp.float32), 1.0)
        mask_ratio_observed = (jnp.sum(tokens == MASK_IDX, axis=-1).astype(jnp.float32)
                               / src_lengths)
        scale_den = jnp.maximum(1.0 - mask_ratio_observed, 1e-3)      # guard /0
        x = x * (1 - mask_ratio_train) / scale_den[:, None, None]
    x = x * (1.0 - padding_mask[..., None].astype(x.dtype))

    # key-padding additive bias: 0 where valid, large finite negative at padded keys
    # (finite value avoids NaN for fully-padded rows; matches the PyTorch fast path
    # when there is no padding).
    bias = jnp.where(padding_mask, -1e9, 0.0).astype(jnp.float32)[:, None, :]  # (B,1,T)

    cos, sin = rotary_tables(T, Dh)

    M = B * T
    x2 = x.reshape(M, E)          # residual stream
    delta = None                  # pending residual increment (fused into next LN)
    for lp in params["layers"]:
        if delta is None:
            h = layer_norm(x2, lp["ln1_g"], lp["ln1_b"])
        else:
            x2, h = add_layer_norm(x2, delta, lp["ln1_g"], lp["ln1_b"])
        attn = multihead_attention(h.reshape(B, T, E), lp, bias, cos, sin,
                                   num_heads).reshape(M, E)
        x2, h = add_layer_norm(x2, attn, lp["ln2_g"], lp["ln2_b"])
        h = gelu_exact(linear(h, lp["fc1_wt"], lp["fc1_b"], out_dtype=jnp.bfloat16))
        delta = linear(h, lp["fc2_wt"], lp["fc2_b"])
    x2, xn = add_layer_norm(x2, delta, params["ln_after_g"], params["ln_after_b"])

    # RobertaLMHead: dense -> gelu -> layernorm -> tied projection + bias
    h = gelu_exact(linear(xn, params["lm_dense_wt"], params["lm_dense_b"]))
    h = layer_norm(h, params["lm_ln_g"], params["lm_ln_b"])
    logits = linear(h, params["embed_wt"], params["lm_bias"])   # tied to embed_tokens
    x_mid = logits.reshape(B, T, -1)

    # repr_layers defaults to [] -> empty representations dict
    return {"mid": x_mid, "representations": {}}


# ----------------------------- Parameter init --------------------------------

def init_params(key, num_layers, embed_dim, alphabet_size):
    E = embed_dim
    keys = iter(jax.random.split(key, 16 + 8 * num_layers))

    def dense(in_dim, out_dim):
        # weights stored pre-transposed (K, N) in bf16; bias (1, N) f32
        w = 0.02 * jax.random.normal(next(keys), (in_dim, out_dim), jnp.float32)
        b = 0.02 * jax.random.normal(next(keys), (1, out_dim), jnp.float32)
        return w.astype(jnp.bfloat16), b

    def ln(dim):
        return jnp.ones((1, dim), jnp.float32), jnp.zeros((1, dim), jnp.float32)

    params = {}
    embed_w = 0.02 * jax.random.normal(next(keys), (alphabet_size, E), jnp.float32)
    embed_w = embed_w.at[PADDING_IDX].set(0.0)         # nn.Embedding padding_idx row
    params["embed_wt"] = jnp.transpose(embed_w).astype(jnp.bfloat16)   # (E, vocab)
    params["lm_bias"] = jnp.zeros((1, alphabet_size), jnp.float32)

    params["time_wt1"], params["time_b1"] = dense(E, E)
    params["time_wt2"], params["time_b2"] = dense(E, E)
    params["ln_after_g"], params["ln_after_b"] = ln(E)
    params["lm_dense_wt"], params["lm_dense_b"] = dense(E, E)
    params["lm_ln_g"], params["lm_ln_b"] = ln(E)

    layers = []
    for _ in range(num_layers):
        lp = {}
        lp["ln1_g"], lp["ln1_b"] = ln(E)
        lp["qkv_wt"], lp["qkv_b"] = dense(E, 3 * E)     # fused Q/K/V projection
        lp["out_wt"], lp["out_b"] = dense(E, E)
        lp["ln2_g"], lp["ln2_b"] = ln(E)
        lp["fc1_wt"], lp["fc1_b"] = dense(E, 4 * E)
        lp["fc2_wt"], lp["fc2_b"] = dense(4 * E, E)
        layers.append(lp)
    params["layers"] = layers
    return params


# ----------------------------- Main -------------------------------------------

if __name__ == "__main__":
    NUM_LAYERS, EMBED_DIM, HEADS, VOCAB = 2, 32, 4, 33
    B, T = 2, 8

    key = jax.random.PRNGKey(0)
    kp, kx = jax.random.split(key)
    params = init_params(kp, NUM_LAYERS, EMBED_DIM, VOCAB)

    # tokens: cls ... (one <mask>, one <pad> in row 0) ... eos
    tokens = jnp.array([[CLS_IDX, 5, 6, 7, MASK_IDX, 9, EOS_IDX, PADDING_IDX],
                        [CLS_IDX, 10, 11, 12, 13, 14, 15, EOS_IDX]], dtype=jnp.int32)
    x0 = jax.random.normal(kx, (B, T, EMBED_DIM), jnp.float32)
    t = jnp.array([3.0, 17.0], jnp.float32)

    fwd = jax.jit(functools.partial(esm2_forward, num_heads=HEADS))
    out = fwd(params, tokens, x0, t)
    jax.block_until_ready(out["mid"])

    assert out["mid"].shape == (B, T, VOCAB), out["mid"].shape
    assert bool(jnp.all(jnp.isfinite(out["mid"])))
    print("KERNEL_OK")
</pallas_src>

<mosaic_0001>
module attributes {stable_mosaic.version = 11 : i64} {
  func.func @_linear_kernel(%arg0: i32, %arg1: i32, %arg2: i32, %arg3: memref<2x32xf32, #tpu.memory_space<vmem>>, %arg4: memref<32x32xbf16, #tpu.memory_space<vmem>>, %arg5: memref<1x32xf32, #tpu.memory_space<vmem>>, %arg6: memref<2x32xf32, #tpu.memory_space<vmem>>, %arg7: memref<2x32xf32, #tpu.memory_space<vmem>>) attributes {dimension_semantics = [#tpu.dimension_semantics<parallel>, #tpu.dimension_semantics<parallel>, #tpu.dimension_semantics<arbitrary>], iteration_bounds = array<i64: 1, 1, 1>, scalar_prefetch = 0 : i64, scratch_operands = 1 : i64, tpu.core_type = #tpu.core_type<tc>, window_params = [{transform_indices = @transform_0, window_bounds = array<i64: 2, 32>}, {transform_indices = @transform_1, window_bounds = array<i64: 32, 32>}, {transform_indices = @transform_2, window_bounds = array<i64: 1, 32>}, {transform_indices = @transform_3, window_bounds = array<i64: 2, 32>}]} {
    %c0_i32 = arith.constant 0 : i32
    %0 = arith.cmpi eq, %arg2, %c0_i32 : i32
    %1 = arith.extui %0 : i1 to i32
    %c0_i32_0 = arith.constant 0 : i32
    %2 = arith.cmpi ne, %1, %c0_i32_0 : i32
    scf.if %2 {
      %cst_10 = arith.constant 0.000000e+00 : f32
      %13 = vector.broadcast %cst_10 : f32 to vector<2x32xf32>
      %c0_11 = arith.constant 0 : index
      %c0_12 = arith.constant 0 : index
      %14 = vector.load %arg7[%c0_11, %c0_12] : memref<2x32xf32, #tpu.memory_space<vmem>>, vector<2x32xf32>
      tpu.vector_store %arg7[%c0_11, %c0_12], %13 {strides = array<i32>} : memref<2x32xf32, #tpu.memory_space<vmem>>, vector<2x32xf32>,
    } else {
    }
    %c0 = arith.constant 0 : index
    %c0_1 = arith.constant 0 : index
    %3 = vector.load %arg3[%c0, %c0_1] : memref<2x32xf32, #tpu.memory_space<vmem>>, vector<2x32xf32>
    %4 = arith.truncf %3 : vector<2x32xf32> to vector<2x32xbf16>
    %c0_2 = arith.constant 0 : index
    %c0_3 = arith.constant 0 : index
    %5 = vector.load %arg4[%c0_2, %c0_3] : memref<32x32xbf16, #tpu.memory_space<vmem>>, vector<32x32xbf16>
    %c0_4 = arith.constant 0 : index
    %c0_5 = arith.constant 0 : index
    %6 = vector.load %arg7[%c0_4, %c0_5] : memref<2x32xf32, #tpu.memory_space<vmem>>, vector<2x32xf32>
    %cst = arith.constant dense<0.000000e+00> : vector<2x32xf32>
    %7 = tpu.matmul %4, %5, %cst {dimension_numbers = #tpu.dot_dimension_numbers<[1], [0], [0], [1], [0, 0, 1, 1], [], []>} : vector<2x32xbf16>, vector<32x32xbf16>, vector<2x32xf32> -> vector<2x32xf32>
    %8 = arith.addf %6, %7 : vector<2x32xf32>
    %c0_6 = arith.constant 0 : index
    %c0_7 = arith.constant 0 : index
    %9 = vector.load %arg7[%c0_6, %c0_7] : memref<2x32xf32, #tpu.memory_space<vmem>>, vector<2x32xf32>
    tpu.vector_store %arg7[%c0_6, %c0_7], %8 {strides = array<i32>} : memref<2x32xf32, #tpu.memory_space<vmem>>, vector<2x32xf32>,
    %c0_i32_8 = arith.constant 0 : i32
    %10 = arith.cmpi eq, %arg2, %c0_i32_8 : i32
    %11 = arith.extui %10 : i1 to i32
    %c0_i32_9 = arith.constant 0 : i32
    %12 = arith.cmpi ne, %11, %c0_i32_9 : i32
    scf.if %12 {
      %c0_10 = arith.constant 0 : index
      %c0_11 = arith.constant 0 : index
      %13 = vector.load %arg7[%c0_10, %c0_11] : memref<2x32xf32, #tpu.memory_space<vmem>>, vector<2x32xf32>
      %c0_12 = arith.constant 0 : index
      %c0_13 = arith.constant 0 : index
      %14 = vector.load %arg5[%c0_12, %c0_13] : memref<1x32xf32, #tpu.memory_space<vmem>>, vector<1x32xf32>
      %15 = vector.broadcast %14 : vector<1x32xf32> to vector<2x32xf32>
      %16 = arith.addf %13, %15 : vector<2x32xf32>
      %cst_14 = arith.constant 0.000000e+00 : f32
      %17 = vector.broadcast %cst_14 : f32 to vector<2x32xf32>
      %18 = arith.subf %17, %16 : vector<2x32xf32>
      %19 = math.exp %18 : vector<2x32xf32>
      %cst_15 = arith.constant 1.000000e+00 : f32
      %20 = vector.broadcast %cst_15 : f32 to vector<2x32xf32>
      %21 = arith.addf %20, %19 : vector<2x32xf32>
      %cst_16 = arith.constant 1.000000e+00 : f32
      %22 = vector.broadcast %cst_16 : f32 to vector<2x32xf32>
      %23 = arith.divf %22, %21 : vector<2x32xf32>
      %24 = arith.mulf %16, %23 : vector<2x32xf32>
      %c0_17 = arith.constant 0 : index
      %c0_18 = arith.constant 0 : index
      %25 = vector.load %arg6[%c0_17, %c0_18] : memref<2x32xf32, #tpu.memory_space<vmem>>, vector<2x32xf32>
      tpu.vector_store %arg6[%c0_17, %c0_18], %24 {strides = array<i32>} : memref<2x32xf32, #tpu.memory_space<vmem>>, vector<2x32xf32>,
    } else {
    }
    return
  }
  func.func @transform_0(%arg0: i32, %arg1: i32, %arg2: i32) -> (i32, i32) {
    %c0_i32 = arith.constant 0 : i32
    return %arg0, %arg2 : i32, i32
  }
  func.func @transform_1(%arg0: i32, %arg1: i32, %arg2: i32) -> (i32, i32) {
    %c0_i32 = arith.constant 0 : i32
    return %arg2, %arg1 : i32, i32
  }
  func.func @transform_2(%arg0: i32, %arg1: i32, %arg2: i32) -> (i32, i32) {
    %c0_i32 = arith.constant 0 : i32
    %c0_i32_0 = arith.constant 0 : i32
    return %c0_i32, %arg1 : i32, i32
  }
  func.func @transform_3(%arg0: i32, %arg1: i32, %arg2: i32) -> (i32, i32) {
    %c0_i32 = arith.constant 0 : i32
    return %arg0, %arg1 : i32, i32
  }
}

module attributes {stable_mosaic.version = 11 : i64} {
  func.func @_linear_kernel(%arg0: i32, %arg1: i32, %arg2: i32, %arg3: memref<2x32xf32, #tpu.memory_space<vmem>>, %arg4: memref<32x32xbf16, #tpu.memory_space<vmem>>, %arg5: memref<1x32xf32, #tpu.memory_space<vmem>>, %arg6: memref<2x32xf32, #tpu.memory_space<vmem>>, %arg7: memref<2x32xf32, #tpu.memory_space<vmem>>) attributes {dimension_semantics = [#tpu.dimension_semantics<parallel>, #tpu.dimension_semantics<parallel>, #tpu.dimension_semantics<arbitrary>], iteration_bounds = array<i64: 1, 1, 1>, scalar_prefetch = 0 : i64, scratch_operands = 1 : i64, tpu.core_type = #tpu.core_type<tc>, window_params = [{transform_indices = @transform_0, window_bounds = array<i64: 2, 32>}, {transform_indices = @transform_1, window_bounds = array<i64: 32, 32>}, {transform_indices = @transform_2, window_bounds = array<i64: 1, 32>}, {transform_indices = @transform_3, window_bounds = array<i64: 2, 32>}]} {
    %c0_i32 = arith.constant 0 : i32
    %0 = arith.cmpi eq, %arg2, %c0_i32 : i32
    %1 = arith.extui %0 : i1 to i32
    %c0_i32_0 = arith.constant 0 : i32
    %2 = arith.cmpi ne, %1, %c0_i32_0 : i32
    scf.if %2 {
      %cst_10 = arith.constant 0.000000e+00 : f32
      %13 = vector.broadcast %cst_10 : f32 to vector<2x32xf32>
      %c0_11 = arith.constant 0 : index
      %c0_12 = arith.constant 0 : index
      %14 = vector.load %arg7[%c0_11, %c0_12] : memref<2x32xf32, #tpu.memory_space<vmem>>, vector<2x32xf32>
      tpu.vector_store %arg7[%c0_11, %c0_12], %13 {strides = array<i32>} : memref<2x32xf32, #tpu.memory_space<vmem>>, vector<2x32xf32>,
    } else {
    }
    %c0 = arith.constant 0 : index
    %c0_1 = arith.constant 0 : index
    %3 = vector.load %arg3[%c0, %c0_1] : memref<2x32xf32, #tpu.memory_space<vmem>>, vector<2x32xf32>
    %4 = arith.truncf %3 : vector<2x32xf32> to vector<2x32xbf16>
    %c0_2 = arith.constant 0 : index
    %c0_3 = arith.constant 0 : index
    %5 = vector.load %arg4[%c0_2, %c0_3] : memref<32x32xbf16, #tpu.memory_space<vmem>>, vector<32x32xbf16>
    %c0_4 = arith.constant 0 : index
    %c0_5 = arith.constant 0 : index
    %6 = vector.load %arg7[%c0_4, %c0_5] : memref<2x32xf32, #tpu.memory_space<vmem>>, vector<2x32xf32>
    %cst = arith.constant dense<0.000000e+00> : vector<2x32xf32>
    %7 = tpu.matmul %4, %5, %cst {dimension_numbers = #tpu.dot_dimension_numbers<[1], [0], [0], [1], [0, 0, 1, 1], [], []>} : vector<2x32xbf16>, vector<32x32xbf16>, vector<2x32xf32> -> vector<2x32xf32>
    %8 = arith.addf %6, %7 : vector<2x32xf32>
    %c0_6 = arith.constant 0 : index
    %c0_7 = arith.constant 0 : index
    %9 = vector.load %arg7[%c0_6, %c0_7] : memref<2x32xf32, #tpu.memory_space<vmem>>, vector<2x32xf32>
    tpu.vector_store %arg7[%c0_6, %c0_7], %8 {strides = array<i32>} : memref<2x32xf32, #tpu.memory_space<vmem>>, vector<2x32xf32>,
    %c0_i32_8 = arith.constant 0 : i32
    %10 = arith.cmpi eq, %arg2, %c0_i32_8 : i32
    %11 = arith.extui %10 : i1 to i32
    %c0_i32_9 = arith.constant 0 : i32
    %12 = arith.cmpi ne, %11, %c0_i32_9 : i32
    scf.if %12 {
      %c0_10 = arith.constant 0 : index
      %c0_11 = arith.constant 0 : index
      %13 = vector.load %arg7[%c0_10, %c0_11] : memref<2x32xf32, #tpu.memory_space<vmem>>, vector<2x32xf32>
      %c0_12 = arith.constant 0 : index
      %c0_13 = arith.constant 0 : index
      %14 = vector.load %arg5[%c0_12, %c0_13] : memref<1x32xf32, #tpu.memory_space<vmem>>, vector<1x32xf32>
      %15 = vector.broadcast %14 : vector<1x32xf32> to vector<2x32xf32>
      %16 = arith.addf %13, %15 : vector<2x32xf32>
      %c0_14 = arith.constant 0 : index
      %c0_15 = arith.constant 0 : index
      %17 = vector.load %arg6[%c0_14, %c0_15] : memref<2x32xf32, #tpu.memory_space<vmem>>, vector<2x32xf32>
      tpu.vector_store %arg6[%c0_14, %c0_15], %16 {strides = array<i32>} : memref<2x32xf32, #tpu.memory_space<vmem>>, vector<2x32xf32>,
    } else {
    }
    return
  }
  func.func @transform_0(%arg0: i32, %arg1: i32, %arg2: i32) -> (i32, i32) {
    %c0_i32 = arith.constant 0 : i32
    return %arg0, %arg2 : i32, i32
  }
  func.func @transform_1(%arg0: i32, %arg1: i32, %arg2: i32) -> (i32, i32) {
    %c0_i32 = arith.constant 0 : i32
    return %arg2, %arg1 : i32, i32
  }
  func.func @transform_2(%arg0: i32, %arg1: i32, %arg2: i32) -> (i32, i32) {
    %c0_i32 = arith.constant 0 : i32
    %c0_i32_0 = arith.constant 0 : i32
    return %c0_i32, %arg1 : i32, i32
  }
  func.func @transform_3(%arg0: i32, %arg1: i32, %arg2: i32) -> (i32, i32) {
    %c0_i32 = arith.constant 0 : i32
    return %arg0, %arg1 : i32, i32
  }
}

module attributes {stable_mosaic.version = 11 : i64} {
  func.func @_layernorm_kernel(%arg0: i32, %arg1: memref<16x32xf32, #tpu.memory_space<vmem>>, %arg2: memref<1x32xf32, #tpu.memory_space<vmem>>, %arg3: memref<1x32xf32, #tpu.memory_space<vmem>>, %arg4: memref<16x32xf32, #tpu.memory_space<vmem>>) attributes {dimension_semantics = [#tpu.dimension_semantics<parallel>], iteration_bounds = array<i64: 1>, scalar_prefetch = 0 : i64, scratch_operands = 0 : i64, tpu.core_type = #tpu.core_type<tc>, window_params = [{transform_indices = @transform_0, window_bounds = array<i64: 16, 32>}, {pipeline_mode = #tpu.pipeline_mode<synchronous>, transform_indices = @transform_1, window_bounds = array<i64: 1, 32>}, {pipeline_mode = #tpu.pipeline_mode<synchronous>, transform_indices = @transform_2, window_bounds = array<i64: 1, 32>}, {transform_indices = @transform_3, window_bounds = array<i64: 16, 32>}]} {
    %c0 = arith.constant 0 : index
    %c0_0 = arith.constant 0 : index
    %0 = vector.load %arg1[%c0, %c0_0] : memref<16x32xf32, #tpu.memory_space<vmem>>, vector<16x32xf32>
    %c0_1 = arith.constant 0 : index
    %c0_2 = arith.constant 0 : index
    %1 = vector.load %arg2[%c0_1, %c0_2] : memref<1x32xf32, #tpu.memory_space<vmem>>, vector<1x32xf32>
    %c0_3 = arith.constant 0 : index
    %c0_4 = arith.constant 0 : index
    %2 = vector.load %arg3[%c0_3, %c0_4] : memref<1x32xf32, #tpu.memory_space<vmem>>, vector<1x32xf32>
    %cst = arith.constant dense<0.000000e+00> : vector<16xf32>
    %3 = vector.multi_reduction <add>, %0, %cst [1] : vector<16x32xf32> to vector<16xf32>
    %4 = vector.shape_cast %3 : vector<16xf32> to vector<16x1xf32>
    %cst_5 = arith.constant 3.200000e+01 : f32
    %5 = vector.broadcast %cst_5 : f32 to vector<16x1xf32>
    %6 = arith.divf %4, %5 : vector<16x1xf32>
    %7 = vector.broadcast %6 : vector<16x1xf32> to vector<16x32xf32>
    %8 = arith.subf %0, %7 : vector<16x32xf32>
    %9 = arith.mulf %8, %8 : vector<16x32xf32>
    %cst_6 = arith.constant dense<0.000000e+00> : vector<16xf32>
    %10 = vector.multi_reduction <add>, %9, %cst_6 [1] : vector<16x32xf32> to vector<16xf32>
    %11 = vector.shape_cast %10 : vector<16xf32> to vector<16x1xf32>
    %cst_7 = arith.constant 3.200000e+01 : f32
    %12 = vector.broadcast %cst_7 : f32 to vector<16x1xf32>
    %13 = arith.divf %11, %12 : vector<16x1xf32>
    %cst_8 = arith.constant 9.99999974E-6 : f32
    %14 = vector.broadcast %cst_8 : f32 to vector<16x1xf32>
    %15 = arith.addf %13, %14 : vector<16x1xf32>
    %16 = math.rsqrt %15 : vector<16x1xf32>
    %17 = vector.broadcast %16 : vector<16x1xf32> to vector<16x32xf32>
    %18 = arith.mulf %8, %17 : vector<16x32xf32>
    %19 = vector.broadcast %1 : vector<1x32xf32> to vector<16x32xf32>
    %20 = arith.mulf %18, %19 : vector<16x32xf32>
    %21 = vector.broadcast %2 : vector<1x32xf32> to vector<16x32xf32>
    %22 = arith.addf %20, %21 : vector<16x32xf32>
    %c0_9 = arith.constant 0 : index
    %c0_10 = arith.constant 0 : index
    %23 = vector.load %arg4[%c0_9, %c0_10] : memref<16x32xf32, #tpu.memory_space<vmem>>, vector<16x32xf32>
    tpu.vector_store %arg4[%c0_9, %c0_10], %22 {strides = array<i32>} : memref<16x32xf32, #tpu.memory_space<vmem>>, vector<16x32xf32>,
    return
  }
  func.func @transform_0(%arg0: i32) -> (i32, i32) {
    %c0_i32 = arith.constant 0 : i32
    %c0_i32_0 = arith.constant 0 : i32
    return %arg0, %c0_i32 : i32, i32
  }
  func.func @transform_1(%arg0: i32) -> (i32, i32) {
    %c0_i32 = arith.constant 0 : i32
    %c0_i32_0 = arith.constant 0 : i32
    %c0_i32_1 = arith.constant 0 : i32
    return %c0_i32, %c0_i32_0 : i32, i32
  }
  func.func @transform_2(%arg0: i32) -> (i32, i32) {
    %c0_i32 = arith.constant 0 : i32
    %c0_i32_0 = arith.constant 0 : i32
    %c0_i32_1 = arith.constant 0 : i32
    return %c0_i32, %c0_i32_0 : i32, i32
  }
  func.func @transform_3(%arg0: i32) -> (i32, i32) {
    %c0_i32 = arith.constant 0 : i32
    %c0_i32_0 = arith.constant 0 : i32
    return %arg0, %c0_i32 : i32, i32
  }
}

module attributes {stable_mosaic.version = 11 : i64} {
  func.func @_linear_kernel(%arg0: i32, %arg1: i32, %arg2: i32, %arg3: memref<16x32xf32, #tpu.memory_space<vmem>>, %arg4: memref<32x96xbf16, #tpu.memory_space<vmem>>, %arg5: memref<1x96xf32, #tpu.memory_space<vmem>>, %arg6: memref<16x96xf32, #tpu.memory_space<vmem>>, %arg7: memref<16x96xf32, #tpu.memory_space<vmem>>) attributes {dimension_semantics = [#tpu.dimension_semantics<parallel>, #tpu.dimension_semantics<parallel>, #tpu.dimension_semantics<arbitrary>], iteration_bounds = array<i64: 1, 1, 1>, scalar_prefetch = 0 : i64, scratch_operands = 1 : i64, tpu.core_type = #tpu.core_type<tc>, window_params = [{transform_indices = @transform_0, window_bounds = array<i64: 16, 32>}, {transform_indices = @transform_1, window_bounds = array<i64: 32, 96>}, {transform_indices = @transform_2, window_bounds = array<i64: 1, 96>}, {transform_indices = @transform_3, window_bounds = array<i64: 16, 96>}]} {
    %c0_i32 = arith.constant 0 : i32
    %0 = arith.cmpi eq, %arg2, %c0_i32 : i32
    %1 = arith.extui %0 : i1 to i32
    %c0_i32_0 = arith.constant 0 : i32
    %2 = arith.cmpi ne, %1, %c0_i32_0 : i32
    scf.if %2 {
      %cst_10 = arith.constant 0.000000e+00 : f32
      %13 = vector.broadcast %cst_10 : f32 to vector<16x96xf32>
      %c0_11 = arith.constant 0 : index
      %c0_12 = arith.constant 0 : index
      %14 = vector.load %arg7[%c0_11, %c0_12] : memref<16x96xf32, #tpu.memory_space<vmem>>, vector<16x96xf32>
      tpu.vector_store %arg7[%c0_11, %c0_12], %13 {strides = array<i32>} : memref<16x96xf32, #tpu.memory_space<vmem>>, vector<16x96xf32>,
    } else {
    }
    %c0 = arith.constant 0 : index
    %c0_1 = arith.constant 0 : index
    %3 = vector.load %arg3[%c0, %c0_1] : memref<16x32xf32, #tpu.memory_space<vmem>>, vector<16x32xf32>
    %4 = arith.truncf %3 : vector<16x32xf32> to vector<16x32xbf16>
    %c0_2 = arith.constant 0 : index
    %c0_3 = arith.constant 0 : index
    %5 = vector.load %arg4[%c0_2, %c0_3] : memref<32x96xbf16, #tpu.memory_space<vmem>>, vector<32x96xbf16>
    %c0_4 = arith.constant 0 : index
    %c0_5 = arith.constant 0 : index
    %6 = vector.load %arg7[%c0_4, %c0_5] : memref<16x96xf32, #tpu.memory_space<vmem>>, vector<16x96xf32>
    %cst = arith.constant dense<0.000000e+00> : vector<16x96xf32>
    %7 = tpu.matmul %4, %5, %cst {dimension_numbers = #tpu.dot_dimension_numbers<[1], [0], [0], [1], [0, 0, 1, 1], [], []>} : vector<16x32xbf16>, vector<32x96xbf16>, vector<16x96xf32> -> vector<16x96xf32>
    %8 = arith.addf %6, %7 : vector<16x96xf32>
    %c0_6 = arith.constant 0 : index
    %c0_7 = arith.constant 0 : index
    %9 = vector.load %arg7[%c0_6, %c0_7] : memref<16x96xf32, #tpu.memory_space<vmem>>, vector<16x96xf32>
    tpu.vector_store %arg7[%c0_6, %c0_7], %8 {strides = array<i32>} : memref<16x96xf32, #tpu.memory_space<vmem>>, vector<16x96xf32>,
    %c0_i32_8 = arith.constant 0 : i32
    %10 = arith.cmpi eq, %arg2, %c0_i32_8 : i32
    %11 = arith.extui %10 : i1 to i32
    %c0_i32_9 = arith.constant 0 : i32
    %12 = arith.cmpi ne, %11, %c0_i32_9 : i32
    scf.if %12 {
      %c0_10 = arith.constant 0 : index
      %c0_11 = arith.constant 0 : index
      %13 = vector.load %arg7[%c0_10, %c0_11] : memref<16x96xf32, #tpu.memory_space<vmem>>, vector<16x96xf32>
      %c0_12 = arith.constant 0 : index
      %c0_13 = arith.constant 0 : index
      %14 = vector.load %arg5[%c0_12, %c0_13] : memref<1x96xf32, #tpu.memory_space<vmem>>, vector<1x96xf32>
      %15 = vector.broadcast %14 : vector<1x96xf32> to vector<16x96xf32>
      %16 = arith.addf %13, %15 : vector<16x96xf32>
      %c0_14 = arith.constant 0 : index
      %c0_15 = arith.constant 0 : index
      %17 = vector.load %arg6[%c0_14, %c0_15] : memref<16x96xf32, #tpu.memory_space<vmem>>, vector<16x96xf32>
      tpu.vector_store %arg6[%c0_14, %c0_15], %16 {strides = array<i32>} : memref<16x96xf32, #tpu.memory_space<vmem>>, vector<16x96xf32>,
    } else {
    }
    return
  }
  func.func @transform_0(%arg0: i32, %arg1: i32, %arg2: i32) -> (i32, i32) {
    %c0_i32 = arith.constant 0 : i32
    return %arg0, %arg2 : i32, i32
  }
  func.func @transform_1(%arg0: i32, %arg1: i32, %arg2: i32) -> (i32, i32) {
    %c0_i32 = arith.constant 0 : i32
    return %arg2, %arg1 : i32, i32
  }
  func.func @transform_2(%arg0: i32, %arg1: i32, %arg2: i32) -> (i32, i32) {
    %c0_i32 = arith.constant 0 : i32
    %c0_i32_0 = arith.constant 0 : i32
    return %c0_i32, %arg1 : i32, i32
  }
  func.func @transform_3(%arg0: i32, %arg1: i32, %arg2: i32) -> (i32, i32) {
    %c0_i32 = arith.constant 0 : i32
    return %arg0, %arg1 : i32, i32
  }
}

module attributes {stable_mosaic.version = 11 : i64} {
  func.func @_add_layernorm_kernel(%arg0: i32, %arg1: memref<16x32xf32, #tpu.memory_space<vmem>>, %arg2: memref<16x32xf32, #tpu.memory_space<vmem>>, %arg3: memref<1x32xf32, #tpu.memory_space<vmem>>, %arg4: memref<1x32xf32, #tpu.memory_space<vmem>>, %arg5: memref<16x32xf32, #tpu.memory_space<vmem>>, %arg6: memref<16x32xf32, #tpu.memory_space<vmem>>) attributes {dimension_semantics = [#tpu.dimension_semantics<parallel>], iteration_bounds = array<i64: 1>, scalar_prefetch = 0 : i64, scratch_operands = 0 : i64, tpu.core_type = #tpu.core_type<tc>, window_params = [{transform_indices = @transform_0, window_bounds = array<i64: 16, 32>}, {transform_indices = @transform_1, window_bounds = array<i64: 16, 32>}, {pipeline_mode = #tpu.pipeline_mode<synchronous>, transform_indices = @transform_2, window_bounds = array<i64: 1, 32>}, {pipeline_mode = #tpu.pipeline_mode<synchronous>, transform_indices = @transform_3, window_bounds = array<i64: 1, 32>}, {transform_indices = @transform_4, window_bounds = array<i64: 16, 32>}, {transform_indices = @transform_5, window_bounds = array<i64: 16, 32>}]} {
    %c0 = arith.constant 0 : index
    %c0_0 = arith.constant 0 : index
    %0 = vector.load %arg1[%c0, %c0_0] : memref<16x32xf32, #tpu.memory_space<vmem>>, vector<16x32xf32>
    %c0_1 = arith.constant 0 : index
    %c0_2 = arith.constant 0 : index
    %1 = vector.load %arg2[%c0_1, %c0_2] : memref<16x32xf32, #tpu.memory_space<vmem>>, vector<16x32xf32>
    %2 = arith.addf %0, %1 : vector<16x32xf32>
    %c0_3 = arith.constant 0 : index
    %c0_4 = arith.constant 0 : index
    %3 = vector.load %arg5[%c0_3, %c0_4] : memref<16x32xf32, #tpu.memory_space<vmem>>, vector<16x32xf32>
    tpu.vector_store %arg5[%c0_3, %c0_4], %2 {strides = array<i32>} : memref<16x32xf32, #tpu.memory_space<vmem>>, vector<16x32xf32>,
    %c0_5 = arith.constant 0 : index
    %c0_6 = arith.constant 0 : index
    %4 = vector.load %arg3[%c0_5, %c0_6] : memref<1x32xf32, #tpu.memory_space<vmem>>, vector<1x32xf32>
    %c0_7 = arith.constant 0 : index
    %c0_8 = arith.constant 0 : index
    %5 = vector.load %arg4[%c0_7, %c0_8] : memref<1x32xf32, #tpu.memory_space<vmem>>, vector<1x32xf32>
    %cst = arith.constant dense<0.000000e+00> : vector<16xf32>
    %6 = vector.multi_reduction <add>, %2, %cst [1] : vector<16x32xf32> to vector<16xf32>
    %7 = vector.shape_cast %6 : vector<16xf32> to vector<16x1xf32>
    %cst_9 = arith.constant 3.200000e+01 : f32
    %8 = vector.broadcast %cst_9 : f32 to vector<16x1xf32>
    %9 = arith.divf %7, %8 : vector<16x1xf32>
    %10 = vector.broadcast %9 : vector<16x1xf32> to vector<16x32xf32>
    %11 = arith.subf %2, %10 : vector<16x32xf32>
    %12 = arith.mulf %11, %11 : vector<16x32xf32>
    %cst_10 = arith.constant dense<0.000000e+00> : vector<16xf32>
    %13 = vector.multi_reduction <add>, %12, %cst_10 [1] : vector<16x32xf32> to vector<16xf32>
    %14 = vector.shape_cast %13 : vector<16xf32> to vector<16x1xf32>
    %cst_11 = arith.constant 3.200000e+01 : f32
    %15 = vector.broadcast %cst_11 : f32 to vector<16x1xf32>
    %16 = arith.divf %14, %15 : vector<16x1xf32>
    %cst_12 = arith.constant 9.99999974E-6 : f32
    %17 = vector.broadcast %cst_12 : f32 to vector<16x1xf32>
    %18 = arith.addf %16, %17 : vector<16x1xf32>
    %19 = math.rsqrt %18 : vector<16x1xf32>
    %20 = vector.broadcast %19 : vector<16x1xf32> to vector<16x32xf32>
    %21 = arith.mulf %11, %20 : vector<16x32xf32>
    %22 = vector.broadcast %4 : vector<1x32xf32> to vector<16x32xf32>
    %23 = arith.mulf %21, %22 : vector<16x32xf32>
    %24 = vector.broadcast %5 : vector<1x32xf32> to vector<16x32xf32>
    %25 = arith.addf %23, %24 : vector<16x32xf32>
    %c0_13 = arith.constant 0 : index
    %c0_14 = arith.constant 0 : index
    %26 = vector.load %arg6[%c0_13, %c0_14] : memref<16x32xf32, #tpu.memory_space<vmem>>, vector<16x32xf32>
    tpu.vector_store %arg6[%c0_13, %c0_14], %25 {strides = array<i32>} : memref<16x32xf32, #tpu.memory_space<vmem>>, vector<16x32xf32>,
    return
  }
  func.func @transform_0(%arg0: i32) -> (i32, i32) {
    %c0_i32 = arith.constant 0 : i32
    %c0_i32_0 = arith.constant 0 : i32
    return %arg0, %c0_i32 : i32, i32
  }
  func.func @transform_1(%arg0: i32) -> (i32, i32) {
    %c0_i32 = arith.constant 0 : i32
    %c0_i32_0 = arith.constant 0 : i32
    return %arg0, %c0_i32 : i32, i32
  }
  func.func @transform_2(%arg0: i32) -> (i32, i32) {
    %c0_i32 = arith.constant 0 : i32
    %c0_i32_0 = arith.constant 0 : i32
    %c0_i32_1 = arith.constant 0 : i32
    return %c0_i32, %c0_i32_0 : i32, i32
  }
  func.func @transform_3(%arg0: i32) -> (i32, i32) {
    %c0_i32 = arith.constant 0 : i32
    %c0_i32_0 = arith.constant 0 : i32
    %c0_i32_1 = arith.constant 0 : i32
    return %c0_i32, %c0_i32_0 : i32, i32
  }
  func.func @transform_4(%arg0: i32) -> (i32, i32) {
    %c0_i32 = arith.constant 0 : i32
    %c0_i32_0 = arith.constant 0 : i32
    return %arg0, %c0_i32 : i32, i32
  }
  func.func @transform_5(%arg0: i32) -> (i32, i32) {
    %c0_i32 = arith.constant 0 : i32
    %c0_i32_0 = arith.constant 0 : i32
    return %arg0, %c0_i32 : i32, i32
  }
}

module attributes {stable_mosaic.version = 11 : i64} {
  func.func @_linear_kernel(%arg0: i32, %arg1: i32, %arg2: i32, %arg3: memref<16x32xf32, #tpu.memory_space<vmem>>, %arg4: memref<32x32xbf16, #tpu.memory_space<vmem>>, %arg5: memref<1x32xf32, #tpu.memory_space<vmem>>, %arg6: memref<16x32xf32, #tpu.memory_space<vmem>>, %arg7: memref<16x32xf32, #tpu.memory_space<vmem>>) attributes {dimension_semantics = [#tpu.dimension_semantics<parallel>, #tpu.dimension_semantics<parallel>, #tpu.dimension_semantics<arbitrary>], iteration_bounds = array<i64: 1, 1, 1>, scalar_prefetch = 0 : i64, scratch_operands = 1 : i64, tpu.core_type = #tpu.core_type<tc>, window_params = [{transform_indices = @transform_0, window_bounds = array<i64: 16, 32>}, {transform_indices = @transform_1, window_bounds = array<i64: 32, 32>}, {transform_indices = @transform_2, window_bounds = array<i64: 1, 32>}, {transform_indices = @transform_3, window_bounds = array<i64: 16, 32>}]} {
    %c0_i32 = arith.constant 0 : i32
    %0 = arith.cmpi eq, %arg2, %c0_i32 : i32
    %1 = arith.extui %0 : i1 to i32
    %c0_i32_0 = arith.constant 0 : i32
    %2 = arith.cmpi ne, %1, %c0_i32_0 : i32
    scf.if %2 {
      %cst_10 = arith.constant 0.000000e+00 : f32
      %13 = vector.broadcast %cst_10 : f32 to vector<16x32xf32>
      %c0_11 = arith.constant 0 : index
      %c0_12 = arith.constant 0 : index
      %14 = vector.load %arg7[%c0_11, %c0_12] : memref<16x32xf32, #tpu.memory_space<vmem>>, vector<16x32xf32>
      tpu.vector_store %arg7[%c0_11, %c0_12], %13 {strides = array<i32>} : memref<16x32xf32, #tpu.memory_space<vmem>>, vector<16x32xf32>,
    } else {
    }
    %c0 = arith.constant 0 : index
    %c0_1 = arith.constant 0 : index
    %3 = vector.load %arg3[%c0, %c0_1] : memref<16x32xf32, #tpu.memory_space<vmem>>, vector<16x32xf32>
    %4 = arith.truncf %3 : vector<16x32xf32> to vector<16x32xbf16>
    %c0_2 = arith.constant 0 : index
    %c0_3 = arith.constant 0 : index
    %5 = vector.load %arg4[%c0_2, %c0_3] : memref<32x32xbf16, #tpu.memory_space<vmem>>, vector<32x32xbf16>
    %c0_4 = arith.constant 0 : index
    %c0_5 = arith.constant 0 : index
    %6 = vector.load %arg7[%c0_4, %c0_5] : memref<16x32xf32, #tpu.memory_space<vmem>>, vector<16x32xf32>
    %cst = arith.constant dense<0.000000e+00> : vector<16x32xf32>
    %7 = tpu.matmul %4, %5, %cst {dimension_numbers = #tpu.dot_dimension_numbers<[1], [0], [0], [1], [0, 0, 1, 1], [], []>} : vector<16x32xbf16>, vector<32x32xbf16>, vector<16x32xf32> -> vector<16x32xf32>
    %8 = arith.addf %6, %7 : vector<16x32xf32>
    %c0_6 = arith.constant 0 : index
    %c0_7 = arith.constant 0 : index
    %9 = vector.load %arg7[%c0_6, %c0_7] : memref<16x32xf32, #tpu.memory_space<vmem>>, vector<16x32xf32>
    tpu.vector_store %arg7[%c0_6, %c0_7], %8 {strides = array<i32>} : memref<16x32xf32, #tpu.memory_space<vmem>>, vector<16x32xf32>,
    %c0_i32_8 = arith.constant 0 : i32
    %10 = arith.cmpi eq, %arg2, %c0_i32_8 : i32
    %11 = arith.extui %10 : i1 to i32
    %c0_i32_9 = arith.constant 0 : i32
    %12 = arith.cmpi ne, %11, %c0_i32_9 : i32
    scf.if %12 {
      %c0_10 = arith.constant 0 : index
      %c0_11 = arith.constant 0 : index
      %13 = vector.load %arg7[%c0_10, %c0_11] : memref<16x32xf32, #tpu.memory_space<vmem>>, vector<16x32xf32>
      %c0_12 = arith.constant 0 : index
      %c0_13 = arith.constant 0 : index
      %14 = vector.load %arg5[%c0_12, %c0_13] : memref<1x32xf32, #tpu.memory_space<vmem>>, vector<1x32xf32>
      %15 = vector.broadcast %14 : vector<1x32xf32> to vector<16x32xf32>
      %16 = arith.addf %13, %15 : vector<16x32xf32>
      %c0_14 = arith.constant 0 : index
      %c0_15 = arith.constant 0 : index
      %17 = vector.load %arg6[%c0_14, %c0_15] : memref<16x32xf32, #tpu.memory_space<vmem>>, vector<16x32xf32>
      tpu.vector_store %arg6[%c0_14, %c0_15], %16 {strides = array<i32>} : memref<16x32xf32, #tpu.memory_space<vmem>>, vector<16x32xf32>,
    } else {
    }
    return
  }
  func.func @transform_0(%arg0: i32, %arg1: i32, %arg2: i32) -> (i32, i32) {
    %c0_i32 = arith.constant 0 : i32
    return %arg0, %arg2 : i32, i32
  }
  func.func @transform_1(%arg0: i32, %arg1: i32, %arg2: i32) -> (i32, i32) {
    %c0_i32 = arith.constant 0 : i32
    return %arg2, %arg1 : i32, i32
  }
  func.func @transform_2(%arg0: i32, %arg1: i32, %arg2: i32) -> (i32, i32) {
    %c0_i32 = arith.constant 0 : i32
    %c0_i32_0 = arith.constant 0 : i32
    return %c0_i32, %arg1 : i32, i32
  }
  func.func @transform_3(%arg0: i32, %arg1: i32, %arg2: i32) -> (i32, i32) {
    %c0_i32 = arith.constant 0 : i32
    return %arg0, %arg1 : i32, i32
  }
}

module attributes {stable_mosaic.version = 11 : i64} {
  func.func @_linear_kernel(%arg0: i32, %arg1: i32, %arg2: i32, %arg3: memref<16x32xf32, #tpu.memory_space<vmem>>, %arg4: memref<32x128xbf16, #tpu.memory_space<vmem>>, %arg5: memref<1x128xf32, #tpu.memory_space<vmem>>, %arg6: memref<16x128xbf16, #tpu.memory_space<vmem>>, %arg7: memref<16x128xf32, #tpu.memory_space<vmem>>) attributes {dimension_semantics = [#tpu.dimension_semantics<parallel>, #tpu.dimension_semantics<parallel>, #tpu.dimension_semantics<arbitrary>], iteration_bounds = array<i64: 1, 1, 1>, scalar_prefetch = 0 : i64, scratch_operands = 1 : i64, tpu.core_type = #tpu.core_type<tc>, window_params = [{transform_indices = @transform_0, window_bounds = array<i64: 16, 32>}, {transform_indices = @transform_1, window_bounds = array<i64: 32, 128>}, {transform_indices = @transform_2, window_bounds = array<i64: 1, 128>}, {transform_indices = @transform_3, window_bounds = array<i64: 16, 128>}]} {
    %c0_i32 = arith.constant 0 : i32
    %0 = arith.cmpi eq, %arg2, %c0_i32 : i32
    %1 = arith.extui %0 : i1 to i32
    %c0_i32_0 = arith.constant 0 : i32
    %2 = arith.cmpi ne, %1, %c0_i32_0 : i32
    scf.if %2 {
      %cst_10 = arith.constant 0.000000e+00 : f32
      %13 = vector.broadcast %cst_10 : f32 to vector<16x128xf32>
      %c0_11 = arith.constant 0 : index
      %c0_12 = arith.constant 0 : index
      %14 = vector.load %arg7[%c0_11, %c0_12] : memref<16x128xf32, #tpu.memory_space<vmem>>, vector<16x128xf32>
      tpu.vector_store %arg7[%c0_11, %c0_12], %13 {strides = array<i32>} : memref<16x128xf32, #tpu.memory_space<vmem>>, vector<16x128xf32>,
    } else {
    }
    %c0 = arith.constant 0 : index
    %c0_1 = arith.constant 0 : index
    %3 = vector.load %arg3[%c0, %c0_1] : memref<16x32xf32, #tpu.memory_space<vmem>>, vector<16x32xf32>
    %4 = arith.truncf %3 : vector<16x32xf32> to vector<16x32xbf16>
    %c0_2 = arith.constant 0 : index
    %c0_3 = arith.constant 0 : index
    %5 = vector.load %arg4[%c0_2, %c0_3] : memref<32x128xbf16, #tpu.memory_space<vmem>>, vector<32x128xbf16>
    %c0_4 = arith.constant 0 : index
    %c0_5 = arith.constant 0 : index
    %6 = vector.load %arg7[%c0_4, %c0_5] : memref<16x128xf32, #tpu.memory_space<vmem>>, vector<16x128xf32>
    %cst = arith.constant dense<0.000000e+00> : vector<16x128xf32>
    %7 = tpu.matmul %4, %5, %cst {dimension_numbers = #tpu.dot_dimension_numbers<[1], [0], [0], [1], [0, 0, 1, 1], [], []>} : vector<16x32xbf16>, vector<32x128xbf16>, vector<16x128xf32> -> vector<16x128xf32>
    %8 = arith.addf %6, %7 : vector<16x128xf32>
    %c0_6 = arith.constant 0 : index
    %c0_7 = arith.constant 0 : index
    %9 = vector.load %arg7[%c0_6, %c0_7] : memref<16x128xf32, #tpu.memory_space<vmem>>, vector<16x128xf32>
    tpu.vector_store %arg7[%c0_6, %c0_7], %8 {strides = array<i32>} : memref<16x128xf32, #tpu.memory_space<vmem>>, vector<16x128xf32>,
    %c0_i32_8 = arith.constant 0 : i32
    %10 = arith.cmpi eq, %arg2, %c0_i32_8 : i32
    %11 = arith.extui %10 : i1 to i32
    %c0_i32_9 = arith.constant 0 : i32
    %12 = arith.cmpi ne, %11, %c0_i32_9 : i32
    scf.if %12 {
      %c0_10 = arith.constant 0 : index
      %c0_11 = arith.constant 0 : index
      %13 = vector.load %arg7[%c0_10, %c0_11] : memref<16x128xf32, #tpu.memory_space<vmem>>, vector<16x128xf32>
      %c0_12 = arith.constant 0 : index
      %c0_13 = arith.constant 0 : index
      %14 = vector.load %arg5[%c0_12, %c0_13] : memref<1x128xf32, #tpu.memory_space<vmem>>, vector<1x128xf32>
      %15 = vector.broadcast %14 : vector<1x128xf32> to vector<16x128xf32>
      %16 = arith.addf %13, %15 : vector<16x128xf32>
      %17 = arith.truncf %16 : vector<16x128xf32> to vector<16x128xbf16>
      %c0_14 = arith.constant 0 : index
      %c0_15 = arith.constant 0 : index
      %18 = vector.load %arg6[%c0_14, %c0_15] : memref<16x128xbf16, #tpu.memory_space<vmem>>, vector<16x128xbf16>
      tpu.vector_store %arg6[%c0_14, %c0_15], %17 {strides = array<i32>} : memref<16x128xbf16, #tpu.memory_space<vmem>>, vector<16x128xbf16>,
    } else {
    }
    return
  }
  func.func @transform_0(%arg0: i32, %arg1: i32, %arg2: i32) -> (i32, i32) {
    %c0_i32 = arith.constant 0 : i32
    return %arg0, %arg2 : i32, i32
  }
  func.func @transform_1(%arg0: i32, %arg1: i32, %arg2: i32) -> (i32, i32) {
    %c0_i32 = arith.constant 0 : i32
    return %arg2, %arg1 : i32, i32
  }
  func.func @transform_2(%arg0: i32, %arg1: i32, %arg2: i32) -> (i32, i32) {
    %c0_i32 = arith.constant 0 : i32
    %c0_i32_0 = arith.constant 0 : i32
    return %c0_i32, %arg1 : i32, i32
  }
  func.func @transform_3(%arg0: i32, %arg1: i32, %arg2: i32) -> (i32, i32) {
    %c0_i32 = arith.constant 0 : i32
    return %arg0, %arg1 : i32, i32
  }
}

module attributes {stable_mosaic.version = 11 : i64} {
  func.func @_attention_kernel(%arg0: i32, %arg1: memref<1x8x96xf32, #tpu.memory_space<vmem>>, %arg2: memref<1x1x8xf32, #tpu.memory_space<vmem>>, %arg3: memref<8x8xf32, #tpu.memory_space<vmem>>, %arg4: memref<8x8xf32, #tpu.memory_space<vmem>>, %arg5: memref<1x8x32xf32, #tpu.memory_space<vmem>>) attributes {dimension_semantics = [#tpu.dimension_semantics<parallel>], iteration_bounds = array<i64: 2>, scalar_prefetch = 0 : i64, scratch_operands = 0 : i64, tpu.core_type = #tpu.core_type<tc>, window_params = [{transform_indices = @transform_0, window_bounds = array<i64: 1, 8, 96>}, {transform_indices = @transform_1, window_bounds = array<i64: 1, 1, 8>}, {pipeline_mode = #tpu.pipeline_mode<synchronous>, transform_indices = @transform_2, window_bounds = array<i64: 8, 8>}, {pipeline_mode = #tpu.pipeline_mode<synchronous>, transform_indices = @transform_3, window_bounds = array<i64: 8, 8>}, {transform_indices = @transform_4, window_bounds = array<i64: 1, 8, 32>}]} {
    %c0 = arith.constant 0 : index
    %c0_0 = arith.constant 0 : index
    %c0_1 = arith.constant 0 : index
    %0 = vector.load %arg1[%c0, %c0_0, %c0_1] : memref<1x8x96xf32, #tpu.memory_space<vmem>>, vector<1x8x96xf32>
    %1 = vector.shape_cast %0 : vector<1x8x96xf32> to vector<8x96xf32>
    %c0_2 = arith.constant 0 : index
    %c0_3 = arith.constant 0 : index
    %c0_4 = arith.constant 0 : index
    %2 = vector.load %arg2[%c0_2, %c0_3, %c0_4] : memref<1x1x8xf32, #tpu.memory_space<vmem>>, vector<1x1x8xf32>
    %3 = vector.shape_cast %2 : vector<1x1x8xf32> to vector<1x8xf32>
    %c0_5 = arith.constant 0 : index
    %c0_6 = arith.constant 0 : index
    %4 = vector.load %arg3[%c0_5, %c0_6] : memref<8x8xf32, #tpu.memory_space<vmem>>, vector<8x8xf32>
    %c0_7 = arith.constant 0 : index
    %c0_8 = arith.constant 0 : index
    %5 = vector.load %arg4[%c0_7, %c0_8] : memref<8x8xf32, #tpu.memory_space<vmem>>, vector<8x8xf32>
    %6 = vector.extract_strided_slice %1 {offsets = [0, 0], sizes = [8, 8], strides = [1, 1]} : vector<8x96xf32> to vector<8x8xf32>
    %cst = arith.constant 0.353553385 : f32
    %7 = vector.broadcast %cst : f32 to vector<8x8xf32>
    %8 = arith.mulf %6, %7 : vector<8x8xf32>
    %9 = vector.extract_strided_slice %1 {offsets = [0, 32], sizes = [8, 8], strides = [1, 1]} : vector<8x96xf32> to vector<8x8xf32>
    %10 = vector.extract_strided_slice %1 {offsets = [0, 64], sizes = [8, 8], strides = [1, 1]} : vector<8x96xf32> to vector<8x8xf32>
    %11 = vector.extract_strided_slice %8 {offsets = [0, 4], sizes = [8, 4], strides = [1, 1]} : vector<8x8xf32> to vector<8x4xf32>
    %cst_9 = arith.constant 0.000000e+00 : f32
    %12 = vector.broadcast %cst_9 : f32 to vector<8x4xf32>
    %13 = arith.subf %12, %11 : vector<8x4xf32>
    %14 = vector.extract_strided_slice %8 {offsets = [0, 0], sizes = [8, 4], strides = [1, 1]} : vector<8x8xf32> to vector<8x4xf32>
    %15 = tpu.concatenate %13, %14 in 1 : vector<8x4xf32>, vector<8x4xf32> -> vector<8x8xf32>
    %16 = arith.mulf %8, %4 : vector<8x8xf32>
    %17 = arith.mulf %15, %5 : vector<8x8xf32>
    %18 = arith.addf %16, %17 : vector<8x8xf32>
    %19 = arith.truncf %18 : vector<8x8xf32> to vector<8x8xbf16>
    %20 = vector.extract_strided_slice %9 {offsets = [0, 4], sizes = [8, 4], strides = [1, 1]} : vector<8x8xf32> to vector<8x4xf32>
    %cst_10 = arith.constant 0.000000e+00 : f32
    %21 = vector.broadcast %cst_10 : f32 to vector<8x4xf32>
    %22 = arith.subf %21, %20 : vector<8x4xf32>
    %23 = vector.extract_strided_slice %9 {offsets = [0, 0], sizes = [8, 4], strides = [1, 1]} : vector<8x8xf32> to vector<8x4xf32>
    %24 = tpu.concatenate %22, %23 in 1 : vector<8x4xf32>, vector<8x4xf32> -> vector<8x8xf32>
    %25 = arith.mulf %9, %4 : vector<8x8xf32>
    %26 = arith.mulf %24, %5 : vector<8x8xf32>
    %27 = arith.addf %25, %26 : vector<8x8xf32>
    %28 = arith.truncf %27 : vector<8x8xf32> to vector<8x8xbf16>
    %cst_11 = arith.constant dense<0.000000e+00> : vector<8x8xf32>
    %29 = tpu.matmul %19, %28, %cst_11 {dimension_numbers = #tpu.dot_dimension_numbers<[1], [1], [0], [0], [0, 0, 1, 0], [], []>} : vector<8x8xbf16>, vector<8x8xbf16>, vector<8x8xf32> -> vector<8x8xf32>
    %30 = vector.broadcast %3 : vector<1x8xf32> to vector<8x8xf32>
    %31 = arith.addf %29, %30 : vector<8x8xf32>
    %cst_12 = arith.constant dense<0xFF800000> : vector<8xf32>
    %32 = vector.multi_reduction <maximumf>, %31, %cst_12 [1] : vector<8x8xf32> to vector<8xf32>
    %33 = vector.shape_cast %32 : vector<8xf32> to vector<8x1xf32>
    %34 = vector.broadcast %33 : vector<8x1xf32> to vector<8x8xf32>
    %35 = arith.subf %31, %34 : vector<8x8xf32>
    %36 = math.exp %35 : vector<8x8xf32>
    %cst_13 = arith.constant dense<0.000000e+00> : vector<8xf32>
    %37 = vector.multi_reduction <add>, %36, %cst_13 [1] : vector<8x8xf32> to vector<8xf32>
    %38 = vector.shape_cast %37 : vector<8xf32> to vector<8x1xf32>
    %39 = tpu.reciprocal %38 {approx = true} : vector<8x1xf32> -> vector<8x1xf32>
    %40 = vector.broadcast %39 : vector<8x1xf32> to vector<8x8xf32>
    %41 = arith.mulf %36, %40 : vector<8x8xf32>
    %42 = arith.truncf %41 : vector<8x8xf32> to vector<8x8xbf16>
    %43 = arith.truncf %10 : vector<8x8xf32> to vector<8x8xbf16>
    %cst_14 = arith.constant dense<0.000000e+00> : vector<8x8xf32>
    %44 = tpu.matmul %42, %43, %cst_14 {dimension_numbers = #tpu.dot_dimension_numbers<[1], [0], [0], [1], [0, 0, 1, 1], [], []>} : vector<8x8xbf16>, vector<8x8xbf16>, vector<8x8xf32> -> vector<8x8xf32>
    %45 = vector.extract_strided_slice %1 {offsets = [0, 8], sizes = [8, 8], strides = [1, 1]} : vector<8x96xf32> to vector<8x8xf32>
    %cst_15 = arith.constant 0.353553385 : f32
    %46 = vector.broadcast %cst_15 : f32 to vector<8x8xf32>
    %47 = arith.mulf %45, %46 : vector<8x8xf32>
    %48 = vector.extract_strided_slice %1 {offsets = [0, 40], sizes = [8, 8], strides = [1, 1]} : vector<8x96xf32> to vector<8x8xf32>
    %49 = vector.extract_strided_slice %1 {offsets = [0, 72], sizes = [8, 8], strides = [1, 1]} : vector<8x96xf32> to vector<8x8xf32>
    %50 = vector.extract_strided_slice %47 {offsets = [0, 4], sizes = [8, 4], strides = [1, 1]} : vector<8x8xf32> to vector<8x4xf32>
    %cst_16 = arith.constant 0.000000e+00 : f32
    %51 = vector.broadcast %cst_16 : f32 to vector<8x4xf32>
    %52 = arith.subf %51, %50 : vector<8x4xf32>
    %53 = vector.extract_strided_slice %47 {offsets = [0, 0], sizes = [8, 4], strides = [1, 1]} : vector<8x8xf32> to vector<8x4xf32>
    %54 = tpu.concatenate %52, %53 in 1 : vector<8x4xf32>, vector<8x4xf32> -> vector<8x8xf32>
    %55 = arith.mulf %47, %4 : vector<8x8xf32>
    %56 = arith.mulf %54, %5 : vector<8x8xf32>
    %57 = arith.addf %55, %56 : vector<8x8xf32>
    %58 = arith.truncf %57 : vector<8x8xf32> to vector<8x8xbf16>
    %59 = vector.extract_strided_slice %48 {offsets = [0, 4], sizes = [8, 4], strides = [1, 1]} : vector<8x8xf32> to vector<8x4xf32>
    %cst_17 = arith.constant 0.000000e+00 : f32
    %60 = vector.broadcast %cst_17 : f32 to vector<8x4xf32>
    %61 = arith.subf %60, %59 : vector<8x4xf32>
    %62 = vector.extract_strided_slice %48 {offsets = [0, 0], sizes = [8, 4], strides = [1, 1]} : vector<8x8xf32> to vector<8x4xf32>
    %63 = tpu.concatenate %61, %62 in 1 : vector<8x4xf32>, vector<8x4xf32> -> vector<8x8xf32>
    %64 = arith.mulf %48, %4 : vector<8x8xf32>
    %65 = arith.mulf %63, %5 : vector<8x8xf32>
    %66 = arith.addf %64, %65 : vector<8x8xf32>
    %67 = arith.truncf %66 : vector<8x8xf32> to vector<8x8xbf16>
    %cst_18 = arith.constant dense<0.000000e+00> : vector<8x8xf32>
    %68 = tpu.matmul %58, %67, %cst_18 {dimension_numbers = #tpu.dot_dimension_numbers<[1], [1], [0], [0], [0, 0, 1, 0], [], []>} : vector<8x8xbf16>, vector<8x8xbf16>, vector<8x8xf32> -> vector<8x8xf32>
    %69 = vector.broadcast %3 : vector<1x8xf32> to vector<8x8xf32>
    %70 = arith.addf %68, %69 : vector<8x8xf32>
    %cst_19 = arith.constant dense<0xFF800000> : vector<8xf32>
    %71 = vector.multi_reduction <maximumf>, %70, %cst_19 [1] : vector<8x8xf32> to vector<8xf32>
    %72 = vector.shape_cast %71 : vector<8xf32> to vector<8x1xf32>
    %73 = vector.broadcast %72 : vector<8x1xf32> to vector<8x8xf32>
    %74 = arith.subf %70, %73 : vector<8x8xf32>
    %75 = math.exp %74 : vector<8x8xf32>
    %cst_20 = arith.constant dense<0.000000e+00> : vector<8xf32>
    %76 = vector.multi_reduction <add>, %75, %cst_20 [1] : vector<8x8xf32> to vector<8xf32>
    %77 = vector.shape_cast %76 : vector<8xf32> to vector<8x1xf32>
    %78 = tpu.reciprocal %77 {approx = true} : vector<8x1xf32> -> vector<8x1xf32>
    %79 = vector.broadcast %78 : vector<8x1xf32> to vector<8x8xf32>
    %80 = arith.mulf %75, %79 : vector<8x8xf32>
    %81 = arith.truncf %80 : vector<8x8xf32> to vector<8x8xbf16>
    %82 = arith.truncf %49 : vector<8x8xf32> to vector<8x8xbf16>
    %cst_21 = arith.constant dense<0.000000e+00> : vector<8x8xf32>
    %83 = tpu.matmul %81, %82, %cst_21 {dimension_numbers = #tpu.dot_dimension_numbers<[1], [0], [0], [1], [0, 0, 1, 1], [], []>} : vector<8x8xbf16>, vector<8x8xbf16>, vector<8x8xf32> -> vector<8x8xf32>
    %84 = vector.extract_strided_slice %1 {offsets = [0, 16], sizes = [8, 8], strides = [1, 1]} : vector<8x96xf32> to vector<8x8xf32>
    %cst_22 = arith.constant 0.353553385 : f32
    %85 = vector.broadcast %cst_22 : f32 to vector<8x8xf32>
    %86 = arith.mulf %84, %85 : vector<8x8xf32>
    %87 = vector.extract_strided_slice %1 {offsets = [0, 48], sizes = [8, 8], strides = [1, 1]} : vector<8x96xf32> to vector<8x8xf32>
    %88 = vector.extract_strided_slice %1 {offsets = [0, 80], sizes = [8, 8], strides = [1, 1]} : vector<8x96xf32> to vector<8x8xf32>
    %89 = vector.extract_strided_slice %86 {offsets = [0, 4], sizes = [8, 4], strides = [1, 1]} : vector<8x8xf32> to vector<8x4xf32>
    %cst_23 = arith.constant 0.000000e+00 : f32
    %90 = vector.broadcast %cst_23 : f32 to vector<8x4xf32>
    %91 = arith.subf %90, %89 : vector<8x4xf32>
    %92 = vector.extract_strided_slice %86 {offsets = [0, 0], sizes = [8, 4], strides = [1, 1]} : vector<8x8xf32> to vector<8x4xf32>
    %93 = tpu.concatenate %91, %92 in 1 : vector<8x4xf32>, vector<8x4xf32> -> vector<8x8xf32>
    %94 = arith.mulf %86, %4 : vector<8x8xf32>
    %95 = arith.mulf %93, %5 : vector<8x8xf32>
    %96 = arith.addf %94, %95 : vector<8x8xf32>
    %97 = arith.truncf %96 : vector<8x8xf32> to vector<8x8xbf16>
    %98 = vector.extract_strided_slice %87 {offsets = [0, 4], sizes = [8, 4], strides = [1, 1]} : vector<8x8xf32> to vector<8x4xf32>
    %cst_24 = arith.constant 0.000000e+00 : f32
    %99 = vector.broadcast %cst_24 : f32 to vector<8x4xf32>
    %100 = arith.subf %99, %98 : vector<8x4xf32>
    %101 = vector.extract_strided_slice %87 {offsets = [0, 0], sizes = [8, 4], strides = [1, 1]} : vector<8x8xf32> to vector<8x4xf32>
    %102 = tpu.concatenate %100, %101 in 1 : vector<8x4xf32>, vector<8x4xf32> -> vector<8x8xf32>
    %103 = arith.mulf %87, %4 : vector<8x8xf32>
    %104 = arith.mulf %102, %5 : vector<8x8xf32>
    %105 = arith.addf %103, %104 : vector<8x8xf32>
    %106 = arith.truncf %105 : vector<8x8xf32> to vector<8x8xbf16>
    %cst_25 = arith.constant dense<0.000000e+00> : vector<8x8xf32>
    %107 = tpu.matmul %97, %106, %cst_25 {dimension_numbers = #tpu.dot_dimension_numbers<[1], [1], [0], [0], [0, 0, 1, 0], [], []>} : vector<8x8xbf16>, vector<8x8xbf16>, vector<8x8xf32> -> vector<8x8xf32>
    %108 = vector.broadcast %3 : vector<1x8xf32> to vector<8x8xf32>
    %109 = arith.addf %107, %108 : vector<8x8xf32>
    %cst_26 = arith.constant dense<0xFF800000> : vector<8xf32>
    %110 = vector.multi_reduction <maximumf>, %109, %cst_26 [1] : vector<8x8xf32> to vector<8xf32>
    %111 = vector.shape_cast %110 : vector<8xf32> to vector<8x1xf32>
    %112 = vector.broadcast %111 : vector<8x1xf32> to vector<8x8xf32>
    %113 = arith.subf %109, %112 : vector<8x8xf32>
    %114 = math.exp %113 : vector<8x8xf32>
    %cst_27 = arith.constant dense<0.000000e+00> : vector<8xf32>
    %115 = vector.multi_reduction <add>, %114, %cst_27 [1] : vector<8x8xf32> to vector<8xf32>
    %116 = vector.shape_cast %115 : vector<8xf32> to vector<8x1xf32>
    %117 = tpu.reciprocal %116 {approx = true} : vector<8x1xf32> -> vector<8x1xf32>
    %118 = vector.broadcast %117 : vector<8x1xf32> to vector<8x8xf32>
    %119 = arith.mulf %114, %118 : vector<8x8xf32>
    %120 = arith.truncf %119 : vector<8x8xf32> to vector<8x8xbf16>
    %121 = arith.truncf %88 : vector<8x8xf32> to vector<8x8xbf16>
    %cst_28 = arith.constant dense<0.000000e+00> : vector<8x8xf32>
    %122 = tpu.matmul %120, %121, %cst_28 {dimension_numbers = #tpu.dot_dimension_numbers<[1], [0], [0], [1], [0, 0, 1, 1], [], []>} : vector<8x8xbf16>, vector<8x8xbf16>, vector<8x8xf32> -> vector<8x8xf32>
    %123 = vector.extract_strided_slice %1 {offsets = [0, 24], sizes = [8, 8], strides = [1, 1]} : vector<8x96xf32> to vector<8x8xf32>
    %cst_29 = arith.constant 0.353553385 : f32
    %124 = vector.broadcast %cst_29 : f32 to vector<8x8xf32>
    %125 = arith.mulf %123, %124 : vector<8x8xf32>
    %126 = vector.extract_strided_slice %1 {offsets = [0, 56], sizes = [8, 8], strides = [1, 1]} : vector<8x96xf32> to vector<8x8xf32>
    %127 = vector.extract_strided_slice %1 {offsets = [0, 88], sizes = [8, 8], strides = [1, 1]} : vector<8x96xf32> to vector<8x8xf32>
    %128 = vector.extract_strided_slice %125 {offsets = [0, 4], sizes = [8, 4], strides = [1, 1]} : vector<8x8xf32> to vector<8x4xf32>
    %cst_30 = arith.constant 0.000000e+00 : f32
    %129 = vector.broadcast %cst_30 : f32 to vector<8x4xf32>
    %130 = arith.subf %129, %128 : vector<8x4xf32>
    %131 = vector.extract_strided_slice %125 {offsets = [0, 0], sizes = [8, 4], strides = [1, 1]} : vector<8x8xf32> to vector<8x4xf32>
    %132 = tpu.concatenate %130, %131 in 1 : vector<8x4xf32>, vector<8x4xf32> -> vector<8x8xf32>
    %133 = arith.mulf %125, %4 : vector<8x8xf32>
    %134 = arith.mulf %132, %5 : vector<8x8xf32>
    %135 = arith.addf %133, %134 : vector<8x8xf32>
    %136 = arith.truncf %135 : vector<8x8xf32> to vector<8x8xbf16>
    %137 = vector.extract_strided_slice %126 {offsets = [0, 4], sizes = [8, 4], strides = [1, 1]} : vector<8x8xf32> to vector<8x4xf32>
    %cst_31 = arith.constant 0.000000e+00 : f32
    %138 = vector.broadcast %cst_31 : f32 to vector<8x4xf32>
    %139 = arith.subf %138, %137 : vector<8x4xf32>
    %140 = vector.extract_strided_slice %126 {offsets = [0, 0], sizes = [8, 4], strides = [1, 1]} : vector<8x8xf32> to vector<8x4xf32>
    %141 = tpu.concatenate %139, %140 in 1 : vector<8x4xf32>, vector<8x4xf32> -> vector<8x8xf32>
    %142 = arith.mulf %126, %4 : vector<8x8xf32>
    %143 = arith.mulf %141, %5 : vector<8x8xf32>
    %144 = arith.addf %142, %143 : vector<8x8xf32>
    %145 = arith.truncf %144 : vector<8x8xf32> to vector<8x8xbf16>
    %cst_32 = arith.constant dense<0.000000e+00> : vector<8x8xf32>
    %146 = tpu.matmul %136, %145, %cst_32 {dimension_numbers = #tpu.dot_dimension_numbers<[1], [1], [0], [0], [0, 0, 1, 0], [], []>} : vector<8x8xbf16>, vector<8x8xbf16>, vector<8x8xf32> -> vector<8x8xf32>
    %147 = vector.broadcast %3 : vector<1x8xf32> to vector<8x8xf32>
    %148 = arith.addf %146, %147 : vector<8x8xf32>
    %cst_33 = arith.constant dense<0xFF800000> : vector<8xf32>
    %149 = vector.multi_reduction <maximumf>, %148, %cst_33 [1] : vector<8x8xf32> to vector<8xf32>
    %150 = vector.shape_cast %149 : vector<8xf32> to vector<8x1xf32>
    %151 = vector.broadcast %150 : vector<8x1xf32> to vector<8x8xf32>
    %152 = arith.subf %148, %151 : vector<8x8xf32>
    %153 = math.exp %152 : vector<8x8xf32>
    %cst_34 = arith.constant dense<0.000000e+00> : vector<8xf32>
    %154 = vector.multi_reduction <add>, %153, %cst_34 [1] : vector<8x8xf32> to vector<8xf32>
    %155 = vector.shape_cast %154 : vector<8xf32> to vector<8x1xf32>
    %156 = tpu.reciprocal %155 {approx = true} : vector<8x1xf32> -> vector<8x1xf32>
    %157 = vector.broadcast %156 : vector<8x1xf32> to vector<8x8xf32>
    %158 = arith.mulf %153, %157 : vector<8x8xf32>
    %159 = arith.truncf %158 : vector<8x8xf32> to vector<8x8xbf16>
    %160 = arith.truncf %127 : vector<8x8xf32> to vector<8x8xbf16>
    %cst_35 = arith.constant dense<0.000000e+00> : vector<8x8xf32>
    %161 = tpu.matmul %159, %160, %cst_35 {dimension_numbers = #tpu.dot_dimension_numbers<[1], [0], [0], [1], [0, 0, 1, 1], [], []>} : vector<8x8xbf16>, vector<8x8xbf16>, vector<8x8xf32> -> vector<8x8xf32>
    %162 = tpu.concatenate %44, %83, %122, %161 in 1 : vector<8x8xf32>, vector<8x8xf32>, vector<8x8xf32>, vector<8x8xf32> -> vector<8x32xf32>
    %c0_36 = arith.constant 0 : index
    %c0_37 = arith.constant 0 : index
    %c0_38 = arith.constant 0 : index
    %163 = vector.load %arg5[%c0_36, %c0_37, %c0_38] : memref<1x8x32xf32, #tpu.memory_space<vmem>>, vector<1x8x32xf32>
    %164 = vector.shape_cast %163 : vector<1x8x32xf32> to vector<8x32xf32>
    %165 = vector.shape_cast %162 : vector<8x32xf32> to vector<1x8x32xf32>
    tpu.vector_store %arg5[%c0_36, %c0_37, %c0_38], %165 {strides = array<i32>} : memref<1x8x32xf32, #tpu.memory_space<vmem>>, vector<1x8x32xf32>,
    return
  }
  func.func @transform_0(%arg0: i32) -> (i32, i32, i32) {
    %c0_i32 = arith.constant 0 : i32
    %c0_i32_0 = arith.constant 0 : i32
    %c0_i32_1 = arith.constant 0 : i32
    return %arg0, %c0_i32, %c0_i32_0 : i32, i32, i32
  }
  func.func @transform_1(%arg0: i32) -> (i32, i32, i32) {
    %c0_i32 = arith.constant 0 : i32
    %c0_i32_0 = arith.constant 0 : i32
    %c0_i32_1 = arith.constant 0 : i32
    return %arg0, %c0_i32, %c0_i32_0 : i32, i32, i32
  }
  func.func @transform_2(%arg0: i32) -> (i32, i32) {
    %c0_i32 = arith.constant 0 : i32
    %c0_i32_0 = arith.constant 0 : i32
    %c0_i32_1 = arith.constant 0 : i32
    return %c0_i32, %c0_i32_0 : i32, i32
  }
  func.func @transform_3(%arg0: i32) -> (i32, i32) {
    %c0_i32 = arith.constant 0 : i32
    %c0_i32_0 = arith.constant 0 : i32
    %c0_i32_1 = arith.constant 0 : i32
    return %c0_i32, %c0_i32_0 : i32, i32
  }
  func.func @transform_4(%arg0: i32) -> (i32, i32, i32) {
    %c0_i32 = arith.constant 0 : i32
    %c0_i32_0 = arith.constant 0 : i32
    %c0_i32_1 = arith.constant 0 : i32
    return %arg0, %c0_i32, %c0_i32_0 : i32, i32, i32
  }
}

module attributes {stable_mosaic.version = 11 : i64} {
  func.func @_linear_kernel(%arg0: i32, %arg1: i32, %arg2: i32, %arg3: memref<16x128xbf16, #tpu.memory_space<vmem>>, %arg4: memref<128x32xbf16, #tpu.memory_space<vmem>>, %arg5: memref<1x32xf32, #tpu.memory_space<vmem>>, %arg6: memref<16x32xf32, #tpu.memory_space<vmem>>, %arg7: memref<16x32xf32, #tpu.memory_space<vmem>>) attributes {dimension_semantics = [#tpu.dimension_semantics<parallel>, #tpu.dimension_semantics<parallel>, #tpu.dimension_semantics<arbitrary>], iteration_bounds = array<i64: 1, 1, 1>, scalar_prefetch = 0 : i64, scratch_operands = 1 : i64, tpu.core_type = #tpu.core_type<tc>, window_params = [{transform_indices = @transform_0, window_bounds = array<i64: 16, 128>}, {transform_indices = @transform_1, window_bounds = array<i64: 128, 32>}, {transform_indices = @transform_2, window_bounds = array<i64: 1, 32>}, {transform_indices = @transform_3, window_bounds = array<i64: 16, 32>}]} {
    %c0_i32 = arith.constant 0 : i32
    %0 = arith.cmpi eq, %arg2, %c0_i32 : i32
    %1 = arith.extui %0 : i1 to i32
    %c0_i32_0 = arith.constant 0 : i32
    %2 = arith.cmpi ne, %1, %c0_i32_0 : i32
    scf.if %2 {
      %cst_10 = arith.constant 0.000000e+00 : f32
      %12 = vector.broadcast %cst_10 : f32 to vector<16x32xf32>
      %c0_11 = arith.constant 0 : index
      %c0_12 = arith.constant 0 : index
      %13 = vector.load %arg7[%c0_11, %c0_12] : memref<16x32xf32, #tpu.memory_space<vmem>>, vector<16x32xf32>
      tpu.vector_store %arg7[%c0_11, %c0_12], %12 {strides = array<i32>} : memref<16x32xf32, #tpu.memory_space<vmem>>, vector<16x32xf32>,
    } else {
    }
    %c0 = arith.constant 0 : index
    %c0_1 = arith.constant 0 : index
    %3 = vector.load %arg3[%c0, %c0_1] : memref<16x128xbf16, #tpu.memory_space<vmem>>, vector<16x128xbf16>
    %c0_2 = arith.constant 0 : index
    %c0_3 = arith.constant 0 : index
    %4 = vector.load %arg4[%c0_2, %c0_3] : memref<128x32xbf16, #tpu.memory_space<vmem>>, vector<128x32xbf16>
    %c0_4 = arith.constant 0 : index
    %c0_5 = arith.constant 0 : index
    %5 = vector.load %arg7[%c0_4, %c0_5] : memref<16x32xf32, #tpu.memory_space<vmem>>, vector<16x32xf32>
    %cst = arith.constant dense<0.000000e+00> : vector<16x32xf32>
    %6 = tpu.matmul %3, %4, %cst {dimension_numbers = #tpu.dot_dimension_numbers<[1], [0], [0], [1], [0, 0, 1, 1], [], []>} : vector<16x128xbf16>, vector<128x32xbf16>, vector<16x32xf32> -> vector<16x32xf32>
    %7 = arith.addf %5, %6 : vector<16x32xf32>
    %c0_6 = arith.constant 0 : index
    %c0_7 = arith.constant 0 : index
    %8 = vector.load %arg7[%c0_6, %c0_7] : memref<16x32xf32, #tpu.memory_space<vmem>>, vector<16x32xf32>
    tpu.vector_store %arg7[%c0_6, %c0_7], %7 {strides = array<i32>} : memref<16x32xf32, #tpu.memory_space<vmem>>, vector<16x32xf32>,
    %c0_i32_8 = arith.constant 0 : i32
    %9 = arith.cmpi eq, %arg2, %c0_i32_8 : i32
    %10 = arith.extui %9 : i1 to i32
    %c0_i32_9 = arith.constant 0 : i32
    %11 = arith.cmpi ne, %10, %c0_i32_9 : i32
    scf.if %11 {
      %c0_10 = arith.constant 0 : index
      %c0_11 = arith.constant 0 : index
      %12 = vector.load %arg7[%c0_10, %c0_11] : memref<16x32xf32, #tpu.memory_space<vmem>>, vector<16x32xf32>
      %c0_12 = arith.constant 0 : index
      %c0_13 = arith.constant 0 : index
      %13 = vector.load %arg5[%c0_12, %c0_13] : memref<1x32xf32, #tpu.memory_space<vmem>>, vector<1x32xf32>
      %14 = vector.broadcast %13 : vector<1x32xf32> to vector<16x32xf32>
      %15 = arith.addf %12, %14 : vector<16x32xf32>
      %c0_14 = arith.constant 0 : index
      %c0_15 = arith.constant 0 : index
      %16 = vector.load %arg6[%c0_14, %c0_15] : memref<16x32xf32, #tpu.memory_space<vmem>>, vector<16x32xf32>
      tpu.vector_store %arg6[%c0_14, %c0_15], %15 {strides = array<i32>} : memref<16x32xf32, #tpu.memory_space<vmem>>, vector<16x32xf32>,
    } else {
    }
    return
  }
  func.func @transform_0(%arg0: i32, %arg1: i32, %arg2: i32) -> (i32, i32) {
    %c0_i32 = arith.constant 0 : i32
    return %arg0, %arg2 : i32, i32
  }
  func.func @transform_1(%arg0: i32, %arg1: i32, %arg2: i32) -> (i32, i32) {
    %c0_i32 = arith.constant 0 : i32
    return %arg2, %arg1 : i32, i32
  }
  func.func @transform_2(%arg0: i32, %arg1: i32, %arg2: i32) -> (i32, i32) {
    %c0_i32 = arith.constant 0 : i32
    %c0_i32_0 = arith.constant 0 : i32
    return %c0_i32, %arg1 : i32, i32
  }
  func.func @transform_3(%arg0: i32, %arg1: i32, %arg2: i32) -> (i32, i32) {
    %c0_i32 = arith.constant 0 : i32
    return %arg0, %arg1 : i32, i32
  }
}

module attributes {stable_mosaic.version = 11 : i64} {
  func.func @_add_layernorm_kernel(%arg0: i32, %arg1: memref<16x32xf32, #tpu.memory_space<vmem>>, %arg2: memref<16x32xf32, #tpu.memory_space<vmem>>, %arg3: memref<1x32xf32, #tpu.memory_space<vmem>>, %arg4: memref<1x32xf32, #tpu.memory_space<vmem>>, %arg5: memref<16x32xf32, #tpu.memory_space<vmem>>, %arg6: memref<16x32xf32, #tpu.memory_space<vmem>>) attributes {dimension_semantics = [#tpu.dimension_semantics<parallel>], iteration_bounds = array<i64: 1>, scalar_prefetch = 0 : i64, scratch_operands = 0 : i64, tpu.core_type = #tpu.core_type<tc>, window_params = [{transform_indices = @transform_0, window_bounds = array<i64: 16, 32>}, {transform_indices = @transform_1, window_bounds = array<i64: 16, 32>}, {pipeline_mode = #tpu.pipeline_mode<synchronous>, transform_indices = @transform_2, window_bounds = array<i64: 1, 32>}, {pipeline_mode = #tpu.pipeline_mode<synchronous>, transform_indices = @transform_3, window_bounds = array<i64: 1, 32>}, {transform_indices = @transform_4, window_bounds = array<i64: 16, 32>}, {transform_indices = @transform_5, window_bounds = array<i64: 16, 32>}]} {
    %c0 = arith.constant 0 : index
    %c0_0 = arith.constant 0 : index
    %0 = vector.load %arg1[%c0, %c0_0] : memref<16x32xf32, #tpu.memory_space<vmem>>, vector<16x32xf32>
    %c0_1 = arith.constant 0 : index
    %c0_2 = arith.constant 0 : index
    %1 = vector.load %arg2[%c0_1, %c0_2] : memref<16x32xf32, #tpu.memory_space<vmem>>, vector<16x32xf32>
    %2 = arith.addf %0, %1 : vector<16x32xf32>
    %c0_3 = arith.constant 0 : index
    %c0_4 = arith.constant 0 : index
    %3 = vector.load %arg5[%c0_3, %c0_4] : memref<16x32xf32, #tpu.memory_space<vmem>>, vector<16x32xf32>
    tpu.vector_store %arg5[%c0_3, %c0_4], %2 {strides = array<i32>} : memref<16x32xf32, #tpu.memory_space<vmem>>, vector<16x32xf32>,
    %c0_5 = arith.constant 0 : index
    %c0_6 = arith.constant 0 : index
    %4 = vector.load %arg3[%c0_5, %c0_6] : memref<1x32xf32, #tpu.memory_space<vmem>>, vector<1x32xf32>
    %c0_7 = arith.constant 0 : index
    %c0_8 = arith.constant 0 : index
    %5 = vector.load %arg4[%c0_7, %c0_8] : memref<1x32xf32, #tpu.memory_space<vmem>>, vector<1x32xf32>
    %cst = arith.constant dense<0.000000e+00> : vector<16xf32>
    %6 = vector.multi_reduction <add>, %2, %cst [1] : vector<16x32xf32> to vector<16xf32>
    %7 = vector.shape_cast %6 : vector<16xf32> to vector<16x1xf32>
    %cst_9 = arith.constant 3.200000e+01 : f32
    %8 = vector.broadcast %cst_9 : f32 to vector<16x1xf32>
    %9 = arith.divf %7, %8 : vector<16x1xf32>
    %10 = vector.broadcast %9 : vector<16x1xf32> to vector<16x32xf32>
    %11 = arith.subf %2, %10 : vector<16x32xf32>
    %12 = arith.mulf %11, %11 : vector<16x32xf32>
    %cst_10 = arith.constant dense<0.000000e+00> : vector<16xf32>
    %13 = vector.multi_reduction <add>, %12, %cst_10 [1] : vector<16x32xf32> to vector<16xf32>
    %14 = vector.shape_cast %13 : vector<16xf32> to vector<16x1xf32>
    %cst_11 = arith.constant 3.200000e+01 : f32
    %15 = vector.broadcast %cst_11 : f32 to vector<16x1xf32>
    %16 = arith.divf %14, %15 : vector<16x1xf32>
    %cst_12 = arith.constant 9.99999974E-6 : f32
    %17 = vector.broadcast %cst_12 : f32 to vector<16x1xf32>
    %18 = arith.addf %16, %17 : vector<16x1xf32>
    %19 = math.rsqrt %18 : vector<16x1xf32>
    %20 = vector.broadcast %19 : vector<16x1xf32> to vector<16x32xf32>
    %21 = arith.mulf %11, %20 : vector<16x32xf32>
    %22 = vector.broadcast %4 : vector<1x32xf32> to vector<16x32xf32>
    %23 = arith.mulf %21, %22 : vector<16x32xf32>
    %24 = vector.broadcast %5 : vector<1x32xf32> to vector<16x32xf32>
    %25 = arith.addf %23, %24 : vector<16x32xf32>
    %c0_13 = arith.constant 0 : index
    %c0_14 = arith.constant 0 : index
    %26 = vector.load %arg6[%c0_13, %c0_14] : memref<16x32xf32, #tpu.memory_space<vmem>>, vector<16x32xf32>
    tpu.vector_store %arg6[%c0_13, %c0_14], %25 {strides = array<i32>} : memref<16x32xf32, #tpu.memory_space<vmem>>, vector<16x32xf32>,
    return
  }
  func.func @transform_0(%arg0: i32) -> (i32, i32) {
    %c0_i32 = arith.constant 0 : i32
    %c0_i32_0 = arith.constant 0 : i32
    return %arg0, %c0_i32 : i32, i32
  }
  func.func @transform_1(%arg0: i32) -> (i32, i32) {
    %c0_i32 = arith.constant 0 : i32
    %c0_i32_0 = arith.constant 0 : i32
    return %arg0, %c0_i32 : i32, i32
  }
  func.func @transform_2(%arg0: i32) -> (i32, i32) {
    %c0_i32 = arith.constant 0 : i32
    %c0_i32_0 = arith.constant 0 : i32
    %c0_i32_1 = arith.constant 0 : i32
    return %c0_i32, %c0_i32_0 : i32, i32
  }
  func.func @transform_3(%arg0: i32) -> (i32, i32) {
    %c0_i32 = arith.constant 0 : i32
    %c0_i32_0 = arith.constant 0 : i32
    %c0_i32_1 = arith.constant 0 : i32
    return %c0_i32, %c0_i32_0 : i32, i32
  }
  func.func @transform_4(%arg0: i32) -> (i32, i32) {
    %c0_i32 = arith.constant 0 : i32
    %c0_i32_0 = arith.constant 0 : i32
    return %arg0, %c0_i32 : i32, i32
  }
  func.func @transform_5(%arg0: i32) -> (i32, i32) {
    %c0_i32 = arith.constant 0 : i32
    %c0_i32_0 = arith.constant 0 : i32
    return %arg0, %c0_i32 : i32, i32
  }
}

module attributes {stable_mosaic.version = 11 : i64} {
  func.func @_linear_kernel(%arg0: i32, %arg1: i32, %arg2: i32, %arg3: memref<16x32xf32, #tpu.memory_space<vmem>>, %arg4: memref<32x33xbf16, #tpu.memory_space<vmem>>, %arg5: memref<1x33xf32, #tpu.memory_space<vmem>>, %arg6: memref<16x33xf32, #tpu.memory_space<vmem>>, %arg7: memref<16x33xf32, #tpu.memory_space<vmem>>) attributes {dimension_semantics = [#tpu.dimension_semantics<parallel>, #tpu.dimension_semantics<parallel>, #tpu.dimension_semantics<arbitrary>], iteration_bounds = array<i64: 1, 1, 1>, scalar_prefetch = 0 : i64, scratch_operands = 1 : i64, tpu.core_type = #tpu.core_type<tc>, window_params = [{transform_indices = @transform_0, window_bounds = array<i64: 16, 32>}, {transform_indices = @transform_1, window_bounds = array<i64: 32, 33>}, {transform_indices = @transform_2, window_bounds = array<i64: 1, 33>}, {transform_indices = @transform_3, window_bounds = array<i64: 16, 33>}]} {
    %c0_i32 = arith.constant 0 : i32
    %0 = arith.cmpi eq, %arg2, %c0_i32 : i32
    %1 = arith.extui %0 : i1 to i32
    %c0_i32_0 = arith.constant 0 : i32
    %2 = arith.cmpi ne, %1, %c0_i32_0 : i32
    scf.if %2 {
      %cst_10 = arith.constant 0.000000e+00 : f32
      %13 = vector.broadcast %cst_10 : f32 to vector<16x33xf32>
      %c0_11 = arith.constant 0 : index
      %c0_12 = arith.constant 0 : index
      %14 = vector.load %arg7[%c0_11, %c0_12] : memref<16x33xf32, #tpu.memory_space<vmem>>, vector<16x33xf32>
      tpu.vector_store %arg7[%c0_11, %c0_12], %13 {strides = array<i32>} : memref<16x33xf32, #tpu.memory_space<vmem>>, vector<16x33xf32>,
    } else {
    }
    %c0 = arith.constant 0 : index
    %c0_1 = arith.constant 0 : index
    %3 = vector.load %arg3[%c0, %c0_1] : memref<16x32xf32, #tpu.memory_space<vmem>>, vector<16x32xf32>
    %4 = arith.truncf %3 : vector<16x32xf32> to vector<16x32xbf16>
    %c0_2 = arith.constant 0 : index
    %c0_3 = arith.constant 0 : index
    %5 = vector.load %arg4[%c0_2, %c0_3] : memref<32x33xbf16, #tpu.memory_space<vmem>>, vector<32x33xbf16>
    %c0_4 = arith.constant 0 : index
    %c0_5 = arith.constant 0 : index
    %6 = vector.load %arg7[%c0_4, %c0_5] : memref<16x33xf32, #tpu.memory_space<vmem>>, vector<16x33xf32>
    %cst = arith.constant dense<0.000000e+00> : vector<16x33xf32>
    %7 = tpu.matmul %4, %5, %cst {dimension_numbers = #tpu.dot_dimension_numbers<[1], [0], [0], [1], [0, 0, 1, 1], [], []>} : vector<16x32xbf16>, vector<32x33xbf16>, vector<16x33xf32> -> vector<16x33xf32>
    %8 = arith.addf %6, %7 : vector<16x33xf32>
    %c0_6 = arith.constant 0 : index
    %c0_7 = arith.constant 0 : index
    %9 = vector.load %arg7[%c0_6, %c0_7] : memref<16x33xf32, #tpu.memory_space<vmem>>, vector<16x33xf32>
    tpu.vector_store %arg7[%c0_6, %c0_7], %8 {strides = array<i32>} : memref<16x33xf32, #tpu.memory_space<vmem>>, vector<16x33xf32>,
    %c0_i32_8 = arith.constant 0 : i32
    %10 = arith.cmpi eq, %arg2, %c0_i32_8 : i32
    %11 = arith.extui %10 : i1 to i32
    %c0_i32_9 = arith.constant 0 : i32
    %12 = arith.cmpi ne, %11, %c0_i32_9 : i32
    scf.if %12 {
      %c0_10 = arith.constant 0 : index
      %c0_11 = arith.constant 0 : index
      %13 = vector.load %arg7[%c0_10, %c0_11] : memref<16x33xf32, #tpu.memory_space<vmem>>, vector<16x33xf32>
      %c0_12 = arith.constant 0 : index
      %c0_13 = arith.constant 0 : index
      %14 = vector.load %arg5[%c0_12, %c0_13] : memref<1x33xf32, #tpu.memory_space<vmem>>, vector<1x33xf32>
      %15 = vector.broadcast %14 : vector<1x33xf32> to vector<16x33xf32>
      %16 = arith.addf %13, %15 : vector<16x33xf32>
      %c0_14 = arith.constant 0 : index
      %c0_15 = arith.constant 0 : index
      %17 = vector.load %arg6[%c0_14, %c0_15] : memref<16x33xf32, #tpu.memory_space<vmem>>, vector<16x33xf32>
      tpu.vector_store %arg6[%c0_14, %c0_15], %16 {strides = array<i32>} : memref<16x33xf32, #tpu.memory_space<vmem>>, vector<16x33xf32>,
    } else {
    }
    return
  }
  func.func @transform_0(%arg0: i32, %arg1: i32, %arg2: i32) -> (i32, i32) {
    %c0_i32 = arith.constant 0 : i32
    return %arg0, %arg2 : i32, i32
  }
  func.func @transform_1(%arg0: i32, %arg1: i32, %arg2: i32) -> (i32, i32) {
    %c0_i32 = arith.constant 0 : i32
    return %arg2, %arg1 : i32, i32
  }
  func.func @transform_2(%arg0: i32, %arg1: i32, %arg2: i32) -> (i32, i32) {
    %c0_i32 = arith.constant 0 : i32
    %c0_i32_0 = arith.constant 0 : i32
    return %c0_i32, %arg1 : i32, i32
  }
  func.func @transform_3(%arg0: i32, %arg1: i32, %arg2: i32) -> (i32, i32) {
    %c0_i32 = arith.constant 0 : i32
    return %arg0, %arg1 : i32, i32
  }
}

</mosaic_0001>

<llo_original>
// kernel: esm2_forward.21
$region0: #{esm2_forward.21}
  #allocation0 [shape = 'u32[]', space=smem, size = 0x4, offset = 0x4, fixed_abs, tag = 'smem constant byte address 0x4 - core index']
  #allocation1 [shape = 'u32[144,128]{1,0:T(1,128)}', space=vmem, size = 0x12000, scoped, tag = 'internal scratch']
  #allocation2 [shape = 'f32[2,32]{1,0:T(2,128)}', space=vmem, size = 0x400, scoped, tag = 'scratch operand']
  %s0 = inlined_call_operand.vmem [shape: f32[2,32], index: 0, kind: input, shape index: {}]
  %s1 = inlined_call_operand.vmem [shape: bf16[32,32], index: 1, kind: input, shape index: {}]
  %s2 = inlined_call_operand.vmem [shape: f32[1,32], index: 2, kind: input, shape index: {}]
  %s3 = inlined_call_operand.vmem [shape: f32[2,32], index: 3, kind: output, shape index: {}]
  %s4 = sld [smem:[#allocation0]]
  $region30: #{esm2_forward.21} parent=0
    _
  %s6 = ssub.s32 1, %s4
  %s7 = scalar_select 0, %s6, %s4
  // Predicated region
  $region2: #{esm2_forward.21} parent=0 // pred_check
    _
  $region3: #{esm2_forward.21} parent=0 // pred_check_branch
    %9 = sbr.rel (0) target = $region5
  $region4: #{esm2_forward.21} parent=0 // pred_region
    _
  $region5: #{esm2_forward.21} parent=0 // pred_fallthru
    _
  // Predicated region
  $region6: #{esm2_forward.21} parent=0 // pred_check
    _
  $region7: #{esm2_forward.21} parent=0 // pred_check_branch
    %11 = sbr.rel (0) target = $region9
  $region8: #{esm2_forward.21} parent=0 // pred_region
    _
  $region9: #{esm2_forward.21} parent=0 // pred_fallthru
    _
  // Predicated region
  $region10: #{esm2_forward.21} parent=0 // pred_check
    _
  $region11: #{esm2_forward.21} parent=0 // pred_check_branch
    %13 = sbr.rel (0) target = $region13
  $region12: #{esm2_forward.21} parent=0 // pred_region
    _
  $region13: #{esm2_forward.21} parent=0 // pred_fallthru
    _
  %p15 = scmp.eq.s32.totalorder 0, 0
  // Predicated region
  $region14: #{esm2_forward.21} parent=0 // pred_check
    %p16 = pneg %p15
  $region15: #{esm2_forward.21} parent=0 // pred_check_branch
    %18 = sbr.rel (%p16) target = $region17
  $region16: #{esm2_forward.21} parent=0 // pred_region
    %vm19 = vcmask 254976
    %20 = vst.msk [vmem:[#allocation2] sm:$0x3] %vm19, 0.0
  $region17: #{esm2_forward.21} parent=0 // pred_fallthru
    _
  %v21 = vld [vmem:[%s0] sm:$0x3]
  %v22 = vpack.c.bf16 %v21, %v21
  %v23 = vld [vmem:[%s1] sm:$0xf]
  %v24 = vld [vmem:[%s1 + $0x4] sm:$0xf]
  %v25 = vld [vmem:[%s1 + $0x8] sm:$0xf]
  %v26 = vld [vmem:[%s1 + $0xc] sm:$0xf]
  %v27 = vld [vmem:[#allocation2] sm:$0x3]
  %v32 = vunpack.c.l.b16 %v23
  %v33 = vunpack.c.l.b16 %v24
  %v34 = vunpack.c.l.b16 %v25
  %v35 = vunpack.c.l.b16 %v26
  %v36 = vpack.c.b16 %v33, %v32
  %v37 = vpack.c.b16 %v35, %v34
  %vm40 = vcmask 261120
  %v42 = vsel %vm40, %v22, 0
  %44 = vmatprep.subr.bf16.mxu0 0
  %45 = vmatpush1.bf16.msra.mxu0 %v36
  %46 = vmatprep.subr.bf16.mxu0 0
  %47 = vmatpush1.bf16.msra.mxu0 %v37
  %48 = vmatprep.subr.bf16.mxu0 0
  %49 = vmatpush1.bf16.msra.mxu0 0
  %50 = vmatprep.subr.bf16.mxu0 0
  %51 = vmatpush1.bf16.msra.mxu0 0
  %52 = vmatprep.subr.bf16.mxu0 0
  %53 = vmatpush1.bf16.msra.mxu0 0
  %54 = vmatprep.subr.bf16.mxu0 0
  %55 = vmatpush1.bf16.msra.mxu0 0
  %56 = vmatprep.subr.bf16.mxu0 0
  %57 = vmatpush1.bf16.msra.mxu0 0
  %58 = vmatprep.subr.bf16.mxu0 0
  %59 = vmatpush1.bf16.msra.mxu0 0
  %60 = vmatprep.subr.bf16.mxu0 0
  %61 = vmatpush1.bf16.msra.mxu0 0
  %62 = vmatprep.subr.bf16.mxu0 0
  %63 = vmatpush1.bf16.msra.mxu0 0
  %64 = vmatprep.subr.bf16.mxu0 0
  %65 = vmatpush1.bf16.msra.mxu0 0
  %66 = vmatprep.subr.bf16.mxu0 0
  %67 = vmatpush1.bf16.msra.mxu0 0
  %68 = vmatprep.subr.bf16.mxu0 0
  %69 = vmatpush1.bf16.msra.mxu0 0
  %70 = vmatprep.subr.bf16.mxu0 0
  %71 = vmatpush1.bf16.msra.mxu0 0
  %72 = vmatprep.subr.bf16.mxu0 0
  %73 = vmatpush1.bf16.msra.mxu0 0
  %74 = vmatprep.subr.bf16.mxu0 0
  %75 = vmatpush1.bf16.msra.mxu0 0
  %76 = vmatprep.mubr.bf16.mxu0 0
  %77 = vmatmul.mubr.bf16.gmra.mrb[0].mxu0 %v42
  %v78 = vpop.f32.mrb[0].mxu0
  %v79 = vadd.f32 0.0, %v78
  %v80 = vpop.f32.mrb[0].mxu0
  %v81 = vpop.f32.mrb[0].mxu0
  %v82 = vpop.f32.mrb[0].mxu0
  %83 = vdwg.mxu0
  %v84 = vadd.f32 %v27, %v79
  %vm85 = vcmask 254976
  %86 = vst.msk [vmem:[#allocation2] sm:$0x3] %vm85, %v84
  // Predicated region
  $region18: #{esm2_forward.21} parent=0 // pred_check
    %p87 = pneg %p15
  $region19: #{esm2_forward.21} parent=0 // pred_check_branch
    %89 = sbr.rel (%p87) target = $region21
  $region20: #{esm2_forward.21} parent=0 // pred_region
    %v90 = vld [vmem:[#allocation2] sm:$0x3]
    %v91 = vld [vmem:[%s2] sm:$0x1]
    %v93 = vlaneseq
    %v94 = vshrl.u32 %v93, 7
    %v95 = vsub.s32 0, %v94
    %v96 = vrot.slane %v91, %v95
    %v98 = vadd.f32 %v90, %v96
    %99 = vst.msk [vmem:[%s3] sm:$0x3] %vm85, %v98
  $region21: #{esm2_forward.21} parent=0 // pred_fallthru
    _
  // Predicated region
  $region22: #{esm2_forward.21} parent=0 // pred_check
    _
  $region23: #{esm2_forward.21} parent=0 // pred_check_branch
    %101 = sbr.rel (0) target = $region25
  $region24: #{esm2_forward.21} parent=0 // pred_region
    _
  $region25: #{esm2_forward.21} parent=0 // pred_fallthru
    _
  // Predicated region
  $region26: #{esm2_forward.21} parent=0 // pred_check
    _
  $region27: #{esm2_forward.21} parent=0 // pred_check_branch
    %103 = sbr.rel (0) target = $region29
  $region28: #{esm2_forward.21} parent=0 // pred_region
    _
  $region29: #{esm2_forward.21} parent=0 // pred_fallthru
    _

// kernel: esm2_forward.20
$region0: #{esm2_forward.20}
  #allocation0 [shape = 'u32[]', space=smem, size = 0x4, offset = 0x4, fixed_abs, tag = 'smem constant byte address 0x4 - core index']
  #allocation1 [shape = 'u32[144,128]{1,0:T(1,128)}', space=vmem, size = 0x12000, scoped, tag = 'internal scratch']
  #allocation2 [shape = 'f32[2,32]{1,0:T(2,128)}', space=vmem, size = 0x400, scoped, tag = 'scratch operand']
  %s0 = inlined_call_operand.vmem [shape: f32[2,32], index: 0, kind: input, shape index: {}]
  %s1 = inlined_call_operand.vmem [shape: bf16[32,32], index: 1, kind: input, shape index: {}]
  %s2 = inlined_call_operand.vmem [shape: f32[1,32], index: 2, kind: input, shape index: {}]
  %s3 = inlined_call_operand.vmem [shape: f32[2,32], index: 3, kind: output, shape index: {}]
  %s4 = sld [smem:[#allocation0]]
  $region30: #{esm2_forward.20} parent=0
    _
  %s6 = ssub.s32 1, %s4
  %s7 = scalar_select 0, %s6, %s4
  // Predicated region
  $region2: #{esm2_forward.20} parent=0 // pred_check
    _
  $region3: #{esm2_forward.20} parent=0 // pred_check_branch
    %9 = sbr.rel (0) target = $region5
  $region4: #{esm2_forward.20} parent=0 // pred_region
    _
  $region5: #{esm2_forward.20} parent=0 // pred_fallthru
    _
  // Predicated region
  $region6: #{esm2_forward.20} parent=0 // pred_check
    _
  $region7: #{esm2_forward.20} parent=0 // pred_check_branch
    %11 = sbr.rel (0) target = $region9
  $region8: #{esm2_forward.20} parent=0 // pred_region
    _
  $region9: #{esm2_forward.20} parent=0 // pred_fallthru
    _
  // Predicated region
  $region10: #{esm2_forward.20} parent=0 // pred_check
    _
  $region11: #{esm2_forward.20} parent=0 // pred_check_branch
    %13 = sbr.rel (0) target = $region13
  $region12: #{esm2_forward.20} parent=0 // pred_region
    _
  $region13: #{esm2_forward.20} parent=0 // pred_fallthru
    _
  %p15 = scmp.eq.s32.totalorder 0, 0
  // Predicated region
  $region14: #{esm2_forward.20} parent=0 // pred_check
    %p16 = pneg %p15
  $region15: #{esm2_forward.20} parent=0 // pred_check_branch
    %18 = sbr.rel (%p16) target = $region17
  $region16: #{esm2_forward.20} parent=0 // pred_region
    %vm19 = vcmask 254976
    %20 = vst.msk [vmem:[#allocation2] sm:$0x3] %vm19, 0.0
  $region17: #{esm2_forward.20} parent=0 // pred_fallthru
    _
  %v21 = vld [vmem:[%s0] sm:$0x3]
  %v22 = vpack.c.bf16 %v21, %v21
  %v23 = vld [vmem:[%s1] sm:$0xf]
  %v24 = vld [vmem:[%s1 + $0x4] sm:$0xf]
  %v25 = vld [vmem:[%s1 + $0x8] sm:$0xf]
  %v26 = vld [vmem:[%s1 + $0xc] sm:$0xf]
  %v27 = vld [vmem:[#allocation2] sm:$0x3]
  %v32 = vunpack.c.l.b16 %v23
  %v33 = vunpack.c.l.b16 %v24
  %v34 = vunpack.c.l.b16 %v25
  %v35 = vunpack.c.l.b16 %v26
  %v36 = vpack.c.b16 %v33, %v32
  %v37 = vpack.c.b16 %v35, %v34
  %vm40 = vcmask 261120
  %v42 = vsel %vm40, %v22, 0
  %44 = vmatprep.subr.bf16.mxu0 0
  %45 = vmatpush1.bf16.msra.mxu0 %v36
  %46 = vmatprep.subr.bf16.mxu0 0
  %47 = vmatpush1.bf16.msra.mxu0 %v37
  %48 = vmatprep.subr.bf16.mxu0 0
  %49 = vmatpush1.bf16.msra.mxu0 0
  %50 = vmatprep.subr.bf16.mxu0 0
  %51 = vmatpush1.bf16.msra.mxu0 0
  %52 = vmatprep.subr.bf16.mxu0 0
  %53 = vmatpush1.bf16.msra.mxu0 0
  %54 = vmatprep.subr.bf16.mxu0 0
  %55 = vmatpush1.bf16.msra.mxu0 0
  %56 = vmatprep.subr.bf16.mxu0 0
  %57 = vmatpush1.bf16.msra.mxu0 0
  %58 = vmatprep.subr.bf16.mxu0 0
  %59 = vmatpush1.bf16.msra.mxu0 0
  %60 = vmatprep.subr.bf16.mxu0 0
  %61 = vmatpush1.bf16.msra.mxu0 0
  %62 = vmatprep.subr.bf16.mxu0 0
  %63 = vmatpush1.bf16.msra.mxu0 0
  %64 = vmatprep.subr.bf16.mxu0 0
  %65 = vmatpush1.bf16.msra.mxu0 0
  %66 = vmatprep.subr.bf16.mxu0 0
  %67 = vmatpush1.bf16.msra.mxu0 0
  %68 = vmatprep.subr.bf16.mxu0 0
  %69 = vmatpush1.bf16.msra.mxu0 0
  %70 = vmatprep.subr.bf16.mxu0 0
  %71 = vmatpush1.bf16.msra.mxu0 0
  %72 = vmatprep.subr.bf16.mxu0 0
  %73 = vmatpush1.bf16.msra.mxu0 0
  %74 = vmatprep.subr.bf16.mxu0 0
  %75 = vmatpush1.bf16.msra.mxu0 0
  %76 = vmatprep.mubr.bf16.mxu0 0
  %77 = vmatmul.mubr.bf16.gmra.mrb[0].mxu0 %v42
  %v78 = vpop.f32.mrb[0].mxu0
  %v79 = vadd.f32 0.0, %v78
  %v80 = vpop.f32.mrb[0].mxu0
  %v81 = vpop.f32.mrb[0].mxu0
  %v82 = vpop.f32.mrb[0].mxu0
  %83 = vdwg.mxu0
  %v84 = vadd.f32 %v27, %v79
  %vm85 = vcmask 254976
  %86 = vst.msk [vmem:[#allocation2] sm:$0x3] %vm85, %v84
  // Predicated region
  $region18: #{esm2_forward.20} parent=0 // pred_check
    %p87 = pneg %p15
  $region19: #{esm2_forward.20} parent=0 // pred_check_branch
    %89 = sbr.rel (%p87) target = $region21
  $region20: #{esm2_forward.20} parent=0 // pred_region
    %v90 = vld [vmem:[#allocation2] sm:$0x3]
    %v91 = vld [vmem:[%s2] sm:$0x1]
    %v93 = vlaneseq
    %v94 = vshrl.u32 %v93, 7
    %v95 = vsub.s32 0, %v94
    %v96 = vrot.slane %v91, %v95
    %v98 = vadd.f32 %v90, %v96
    %v99 = vsub.f32 0.0, %v98
    %v100 = vmul.f32 %v99, 1.442695
    %v101 = vpow.pop %v100
    %v102 = vadd.f32 %v101, 1.0
    %v103 = vrcp.pop %v102
    %v104 = vmul.f32 1.0, %v103
    %v105 = vmul.f32 %v98, %v104
    %106 = vst.msk [vmem:[%s3] sm:$0x3] %vm85, %v105
  $region21: #{esm2_forward.20} parent=0 // pred_fallthru
    _
  // Predicated region
  $region22: #{esm2_forward.20} parent=0 // pred_check
    _
  $region23: #{esm2_forward.20} parent=0 // pred_check_branch
    %108 = sbr.rel (0) target = $region25
  $region24: #{esm2_forward.20} parent=0 // pred_region
    _
  $region25: #{esm2_forward.20} parent=0 // pred_fallthru
    _
  // Predicated region
  $region26: #{esm2_forward.20} parent=0 // pred_check
    _
  $region27: #{esm2_forward.20} parent=0 // pred_check_branch
    %110 = sbr.rel (0) target = $region29
  $region28: #{esm2_forward.20} parent=0 // pred_region
    _
  $region29: #{esm2_forward.20} parent=0 // pred_fallthru
    _

// kernel: esm2_forward.22
$region0: #{esm2_forward.22}
  #allocation0 [shape = 'u32[]', space=smem, size = 0x4, offset = 0x4, fixed_abs, tag = 'smem constant byte address 0x4 - core index']
  #allocation1 [shape = 'u32[144,128]{1,0:T(1,128)}', space=vmem, size = 0x12000, scoped, tag = 'internal scratch']
  %s0 = inlined_call_operand.vmem [shape: f32[16,32], index: 0, kind: input, shape index: {}]
  %s1 = inlined_call_operand.vmem [shape: f32[1,32], index: 1, kind: input, shape index: {}]
  %s2 = inlined_call_operand.vmem [shape: f32[1,32], index: 2, kind: input, shape index: {}]
  %s3 = inlined_call_operand.vmem [shape: f32[16,32], index: 3, kind: output, shape index: {}]
  %s4 = sld [smem:[#allocation0]]
  $region22: #{esm2_forward.22} parent=0
    _
  %s6 = ssub.s32 1, %s4
  %s7 = scalar_select 0, %s6, %s4
  // Predicated region
  $region2: #{esm2_forward.22} parent=0 // pred_check
    _
  $region3: #{esm2_forward.22} parent=0 // pred_check_branch
    %9 = sbr.rel (0) target = $region5
  $region4: #{esm2_forward.22} parent=0 // pred_region
    _
  $region5: #{esm2_forward.22} parent=0 // pred_fallthru
    _
  // Predicated region
  $region6: #{esm2_forward.22} parent=0 // pred_check
    _
  $region7: #{esm2_forward.22} parent=0 // pred_check_branch
    %11 = sbr.rel (0) target = $region9
  $region8: #{esm2_forward.22} parent=0 // pred_region
    _
  $region9: #{esm2_forward.22} parent=0 // pred_fallthru
    _
  // Predicated region
  $region10: #{esm2_forward.22} parent=0 // pred_check
    _
  $region11: #{esm2_forward.22} parent=0 // pred_check_branch
    %13 = sbr.rel (0) target = $region13
  $region12: #{esm2_forward.22} parent=0 // pred_region
    _
  $region13: #{esm2_forward.22} parent=0 // pred_fallthru
    _
  %v14 = vld [vmem:[%s0] sm:$0xff]
  %v15 = vld [vmem:[%s0 + $0x8] sm:$0xff]
  %v16 = vld [vmem:[%s1] sm:$0x1]
  %v17 = vld [vmem:[%s2] sm:$0x1]
  %vm18 = vcmask 261120
  %v19 = vsel %vm18, %v14, 0.0
  %20 = vadd.xlane.f32.xlu0 %v19
  %v21 = vpop.xlane.xlu0 %20
  %v22 = vsel %vm18, %v15, 0.0
  %23 = vadd.xlane.f32.xlu0 %v22
  %v24 = vpop.xlane.xlu0 %23
  %v25 = vrcp.pop 32.0
  %v26 = vmul.f32 %v21, %v25
  %v27 = vmul.f32 %v24, %v25
  %v28 = vsub.f32 %v14, %v26
  %v29 = vsub.f32 %v15, %v27
  %v30 = vmul.f32 %v28, %v28
  %v31 = vmul.f32 %v29, %v29
  %v32 = vsel %vm18, %v30, 0.0
  %33 = vadd.xlane.f32.xlu0 %v32
  %v34 = vpop.xlane.xlu0 %33
  %v35 = vsel %vm18, %v31, 0.0
  %36 = vadd.xlane.f32.xlu0 %v35
  %v37 = vpop.xlane.xlu0 %36
  %v38 = vmul.f32 %v34, %v25
  %v39 = vmul.f32 %v37, %v25
  %v40 = vadd.f32 %v38, 1e-05
  %v41 = vadd.f32 %v39, 1e-05
  %v42 = vrsqrt.pop %v40
  %v43 = vrsqrt.pop %v41
  %v44 = vmul.f32 %v28, %v42
  %v45 = vmul.f32 %v29, %v43
  %v47 = vlaneseq
  %v48 = vshrl.u32 %v47, 7
  %v49 = vsub.s32 0, %v48
  %v50 = vrot.slane %v16, %v49
  %v52 = vmul.f32 %v44, %v50
  %v53 = vmul.f32 %v45, %v50
  %v55 = vlaneseq
  %v56 = vshrl.u32 %v55, 7
  %v57 = vsub.s32 0, %v56
  %v58 = vrot.slane %v17, %v57
  %v60 = vadd.f32 %v52, %v58
  %v61 = vadd.f32 %v53, %v58
  %62 = vst.msk [vmem:[%s3] sm:$0xff] %vm18, %v60
  %63 = vst.msk [vmem:[%s3 + $0x8] sm:$0xff] %vm18, %v61
  // Predicated region
  $region14: #{esm2_forward.22} parent=0 // pred_check
    _
  $region15: #{esm2_forward.22} parent=0 // pred_check_branch
    %65 = sbr.rel (0) target = $region17
  $region16: #{esm2_forward.22} parent=0 // pred_region
    _
  $region17: #{esm2_forward.22} parent=0 // pred_fallthru
    _
  // Predicated region
  $region18: #{esm2_forward.22} parent=0 // pred_check
    _
  $region19: #{esm2_forward.22} parent=0 // pred_check_branch
    %67 = sbr.rel (0) target = $region21
  $region20: #{esm2_forward.22} parent=0 // pred_region
    _
  $region21: #{esm2_forward.22} parent=0 // pred_fallthru
    _

// kernel: esm2_forward.23
$region0: #{esm2_forward.23}
  #allocation0 [shape = 'u32[]', space=smem, size = 0x4, offset = 0x4, fixed_abs, tag = 'smem constant byte address 0x4 - core index']
  #allocation1 [shape = 'u32[144,128]{1,0:T(1,128)}', space=vmem, size = 0x12000, scoped, tag = 'internal scratch']
  #allocation2 [shape = 'f32[16,96]{1,0:T(8,128)}', space=vmem, size = 0x2000, scoped, tag = 'scratch operand']
  %s0 = inlined_call_operand.vmem [shape: f32[16,32], index: 0, kind: input, shape index: {}]
  %s1 = inlined_call_operand.vmem [shape: bf16[32,96], index: 1, kind: input, shape index: {}]
  %s2 = inlined_call_operand.vmem [shape: f32[1,96], index: 2, kind: input, shape index: {}]
  %s3 = inlined_call_operand.vmem [shape: f32[16,96], index: 3, kind: output, shape index: {}]
  %s4 = sld [smem:[#allocation0]]
  $region30: #{esm2_forward.23} parent=0
    _
  %s6 = ssub.s32 1, %s4
  %s7 = scalar_select 0, %s6, %s4
  // Predicated region
  $region2: #{esm2_forward.23} parent=0 // pred_check
    _
  $region3: #{esm2_forward.23} parent=0 // pred_check_branch
    %9 = sbr.rel (0) target = $region5
  $region4: #{esm2_forward.23} parent=0 // pred_region
    _
  $region5: #{esm2_forward.23} parent=0 // pred_fallthru
    _
  // Predicated region
  $region6: #{esm2_forward.23} parent=0 // pred_check
    _
  $region7: #{esm2_forward.23} parent=0 // pred_check_branch
    %11 = sbr.rel (0) target = $region9
  $region8: #{esm2_forward.23} parent=0 // pred_region
    _
  $region9: #{esm2_forward.23} parent=0 // pred_fallthru
    _
  // Predicated region
  $region10: #{esm2_forward.23} parent=0 // pred_check
    _
  $region11: #{esm2_forward.23} parent=0 // pred_check_branch
    %13 = sbr.rel (0) target = $region13
  $region12: #{esm2_forward.23} parent=0 // pred_region
    _
  $region13: #{esm2_forward.23} parent=0 // pred_fallthru
    _
  %p15 = scmp.eq.s32.totalorder 0, 0
  // Predicated region
  $region14: #{esm2_forward.23} parent=0 // pred_check
    %p16 = pneg %p15
  $region15: #{esm2_forward.23} parent=0 // pred_check_branch
    %18 = sbr.rel (%p16) target = $region17
  $region16: #{esm2_forward.23} parent=0 // pred_region
    %vm19 = vcmask 785408
    %20 = vst.msk [vmem:[#allocation2] sm:$0xff] %vm19, 0.0
    %21 = vst.msk [vmem:[#allocation2 + $0x8] sm:$0xff] %vm19, 0.0
  $region17: #{esm2_forward.23} parent=0 // pred_fallthru
    _
  %v22 = vld [vmem:[%s0] sm:$0xff]
  %v23 = vld [vmem:[%s0 + $0x8] sm:$0xff]
  %v24 = vpack.c.bf16 %v23, %v22
  %v25 = vld [vmem:[%s1] sm:$0xf]
  %v26 = vld [vmem:[%s1 + $0x4] sm:$0xf]
  %v27 = vld [vmem:[%s1 + $0x8] sm:$0xf]
  %v28 = vld [vmem:[%s1 + $0xc] sm:$0xf]
  %v29 = vld [vmem:[#allocation2] sm:$0xff]
  %v30 = vld [vmem:[#allocation2 + $0x8] sm:$0xff]
  %v35 = vunpack.c.l.b16 %v25
  %v36 = vunpack.c.l.b16 %v26
  %v37 = vunpack.c.l.b16 %v27
  %v38 = vunpack.c.l.b16 %v28
  %v39 = vpack.c.b16 %v36, %v35
  %v40 = vpack.c.b16 %v38, %v37
  %vm43 = vcmask 261120
  %v45 = vsel %vm43, %v24, 0
  %47 = vmatprep.subr.bf16.mxu0 0
  %48 = vmatpush1.bf16.msra.mxu0 %v39
  %49 = vmatprep.subr.bf16.mxu0 0
  %50 = vmatpush1.bf16.msra.mxu0 %v40
  %51 = vmatprep.subr.bf16.mxu0 0
  %52 = vmatpush1.bf16.msra.mxu0 0
  %53 = vmatprep.subr.bf16.mxu0 0
  %54 = vmatpush1.bf16.msra.mxu0 0
  %55 = vmatprep.subr.bf16.mxu0 0
  %56 = vmatpush1.bf16.msra.mxu0 0
  %57 = vmatprep.subr.bf16.mxu0 0
  %58 = vmatpush1.bf16.msra.mxu0 0
  %59 = vmatprep.subr.bf16.mxu0 0
  %60 = vmatpush1.bf16.msra.mxu0 0
  %61 = vmatprep.subr.bf16.mxu0 0
  %62 = vmatpush1.bf16.msra.mxu0 0
  %63 = vmatprep.subr.bf16.mxu0 0
  %64 = vmatpush1.bf16.msra.mxu0 0
  %65 = vmatprep.subr.bf16.mxu0 0
  %66 = vmatpush1.bf16.msra.mxu0 0
  %67 = vmatprep.subr.bf16.mxu0 0
  %68 = vmatpush1.bf16.msra.mxu0 0
  %69 = vmatprep.subr.bf16.mxu0 0
  %70 = vmatpush1.bf16.msra.mxu0 0
  %71 = vmatprep.subr.bf16.mxu0 0
  %72 = vmatpush1.bf16.msra.mxu0 0
  %73 = vmatprep.subr.bf16.mxu0 0
  %74 = vmatpush1.bf16.msra.mxu0 0
  %75 = vmatprep.subr.bf16.mxu0 0
  %76 = vmatpush1.bf16.msra.mxu0 0
  %77 = vmatprep.subr.bf16.mxu0 0
  %78 = vmatpush1.bf16.msra.mxu0 0
  %79 = vmatprep.mubr.bf16.mxu0 0
  %80 = vmatmul.mubr.bf16.gmra.mrb[0].mxu0 %v45
  %v81 = vpop.f32.mrb[0].mxu0
  %v82 = vadd.f32 0.0, %v81
  %v83 = vpop.f32.mrb[0].mxu0
  %v84 = vpop.f32.mrb[0].mxu0
  %v85 = vadd.f32 0.0, %v84
  %v86 = vpop.f32.mrb[0].mxu0
  %87 = vdwg.mxu0
  %v88 = vadd.f32 %v29, %v82
  %v89 = vadd.f32 %v30, %v85
  %vm90 = vcmask 785408
  %91 = vst.msk [vmem:[#allocation2] sm:$0xff] %vm90, %v88
  %92 = vst.msk [vmem:[#allocation2 + $0x8] sm:$0xff] %vm90, %v89
  // Predicated region
  $region18: #{esm2_forward.23} parent=0 // pred_check
    %p93 = pneg %p15
  $region19: #{esm2_forward.23} parent=0 // pred_check_branch
    %95 = sbr.rel (%p93) target = $region21
  $region20: #{esm2_forward.23} parent=0 // pred_region
    %v96 = vld [vmem:[#allocation2] sm:$0xff]
    %v97 = vld [vmem:[#allocation2 + $0x8] sm:$0xff]
    %v98 = vld [vmem:[%s2] sm:$0x1]
    %v100 = vlaneseq
    %v101 = vshrl.u32 %v100, 7
    %v102 = vsub.s32 0, %v101
    %v103 = vrot.slane %v98, %v102
    %v105 = vadd.f32 %v96, %v103
    %v106 = vadd.f32 %v97, %v103
    %107 = vst.msk [vmem:[%s3] sm:$0xff] %vm90, %v105
    %108 = vst.msk [vmem:[%s3 + $0x8] sm:$0xff] %vm90, %v106
  $region21: #{esm2_forward.23} parent=0 // pred_fallthru
    _
  // Predicated region
  $region22: #{esm2_forward.23} parent=0 // pred_check
    _
  $region23: #{esm2_forward.23} parent=0 // pred_check_branch
    %110 = sbr.rel (0) target = $region25
  $region24: #{esm2_forward.23} parent=0 // pred_region
    _
  $region25: #{esm2_forward.23} parent=0 // pred_fallthru
    _
  // Predicated region
  $region26: #{esm2_forward.23} parent=0 // pred_check
    _
  $region27: #{esm2_forward.23} parent=0 // pred_check_branch
    %112 = sbr.rel (0) target = $region29
  $region28: #{esm2_forward.23} parent=0 // pred_region
    _
  $region29: #{esm2_forward.23} parent=0 // pred_fallthru
    _

// kernel: esm2_forward.26
$region0: #{esm2_forward.26}
  #allocation0 [shape = 'u32[]', space=smem, size = 0x4, offset = 0x4, fixed_abs, tag = 'smem constant byte address 0x4 - core index']
  #allocation1 [shape = 'u32[144,128]{1,0:T(1,128)}', space=vmem, size = 0x12000, scoped, tag = 'internal scratch']
  %s0 = inlined_call_operand.vmem [shape: f32[16,32], index: 0, kind: input, shape index: {}]
  %s1 = inlined_call_operand.vmem [shape: f32[16,32], index: 1, kind: input, shape index: {}]
  %s2 = inlined_call_operand.vmem [shape: f32[1,32], index: 2, kind: input, shape index: {}]
  %s3 = inlined_call_operand.vmem [shape: f32[1,32], index: 3, kind: input, shape index: {}]
  %s4 = inlined_call_operand.vmem [shape: f32[16,32], index: 4, kind: output, shape index: {0}]
  %s5 = inlined_call_operand.vmem [shape: f32[16,32], index: 5, kind: output, shape index: {1}]
  %6 = xla_tuple %s4, %s5
  %s7 = sld [smem:[#allocation0]]
  $region34: #{esm2_forward.26} parent=0
    _
  %s9 = ssub.s32 1, %s7
  %s10 = scalar_select 0, %s9, %s7
  // Predicated region
  $region2: #{esm2_forward.26} parent=0 // pred_check
    _
  $region3: #{esm2_forward.26} parent=0 // pred_check_branch
    %12 = sbr.rel (0) target = $region5
  $region4: #{esm2_forward.26} parent=0 // pred_region
    _
  $region5: #{esm2_forward.26} parent=0 // pred_fallthru
    _
  // Predicated region
  $region6: #{esm2_forward.26} parent=0 // pred_check
    _
  $region7: #{esm2_forward.26} parent=0 // pred_check_branch
    %14 = sbr.rel (0) target = $region9
  $region8: #{esm2_forward.26} parent=0 // pred_region
    _
  $region9: #{esm2_forward.26} parent=0 // pred_fallthru
    _
  // Predicated region
  $region10: #{esm2_forward.26} parent=0 // pred_check
    _
  $region11: #{esm2_forward.26} parent=0 // pred_check_branch
    %16 = sbr.rel (0) target = $region13
  $region12: #{esm2_forward.26} parent=0 // pred_region
    _
  $region13: #{esm2_forward.26} parent=0 // pred_fallthru
    _
  // Predicated region
  $region14: #{esm2_forward.26} parent=0 // pred_check
    _
  $region15: #{esm2_forward.26} parent=0 // pred_check_branch
    %18 = sbr.rel (0) target = $region17
  $region16: #{esm2_forward.26} parent=0 // pred_region
    _
  $region17: #{esm2_forward.26} parent=0 // pred_fallthru
    _
  %v19 = vld [vmem:[%s0] sm:$0xff]
  %v20 = vld [vmem:[%s0 + $0x8] sm:$0xff]
  %v21 = vld [vmem:[%s1] sm:$0xff]
  %v22 = vld [vmem:[%s1 + $0x8] sm:$0xff]
  %v23 = vadd.f32 %v19, %v21
  %v24 = vadd.f32 %v20, %v22
  %vm25 = vcmask 261120
  %26 = vst.msk [vmem:[%s4] sm:$0xff] %vm25, %v23
  %27 = vst.msk [vmem:[%s4 + $0x8] sm:$0xff] %vm25, %v24
  %v28 = vld [vmem:[%s2] sm:$0x1]
  %v29 = vld [vmem:[%s3] sm:$0x1]
  %v30 = vsel %vm25, %v23, 0.0
  %31 = vadd.xlane.f32.xlu0 %v30
  %v32 = vpop.xlane.xlu0 %31
  %v33 = vsel %vm25, %v24, 0.0
  %34 = vadd.xlane.f32.xlu0 %v33
  %v35 = vpop.xlane.xlu0 %34
  %v36 = vrcp.pop 32.0
  %v37 = vmul.f32 %v32, %v36
  %v38 = vmul.f32 %v35, %v36
  %v39 = vsub.f32 %v23, %v37
  %v40 = vsub.f32 %v24, %v38
  %v41 = vmul.f32 %v39, %v39
  %v42 = vmul.f32 %v40, %v40
  %v43 = vsel %vm25, %v41, 0.0
  %44 = vadd.xlane.f32.xlu0 %v43
  %v45 = vpop.xlane.xlu0 %44
  %v46 = vsel %vm25, %v42, 0.0
  %47 = vadd.xlane.f32.xlu0 %v46
  %v48 = vpop.xlane.xlu0 %47
  %v49 = vmul.f32 %v45, %v36
  %v50 = vmul.f32 %v48, %v36
  %v51 = vadd.f32 %v49, 1e-05
  %v52 = vadd.f32 %v50, 1e-05
  %v53 = vrsqrt.pop %v51
  %v54 = vrsqrt.pop %v52
  %v55 = vmul.f32 %v39, %v53
  %v56 = vmul.f32 %v40, %v54
  %v58 = vlaneseq
  %v59 = vshrl.u32 %v58, 7
  %v60 = vsub.s32 0, %v59
  %v61 = vrot.slane %v28, %v60
  %v63 = vmul.f32 %v55, %v61
  %v64 = vmul.f32 %v56, %v61
  %v66 = vlaneseq
  %v67 = vshrl.u32 %v66, 7
  %v68 = vsub.s32 0, %v67
  %v69 = vrot.slane %v29, %v68
  %v71 = vadd.f32 %v63, %v69
  %v72 = vadd.f32 %v64, %v69
  %73 = vst.msk [vmem:[%s5] sm:$0xff] %vm25, %v71
  %74 = vst.msk [vmem:[%s5 + $0x8] sm:$0xff] %vm25, %v72
  // Predicated region
  $region18: #{esm2_forward.26} parent=0 // pred_check
    _
  $region19: #{esm2_forward.26} parent=0 // pred_check_branch
    %76 = sbr.rel (0) target = $region21
  $region20: #{esm2_forward.26} parent=0 // pred_region
    _
  $region21: #{esm2_forward.26} parent=0 // pred_fallthru
    _
  // Predicated region
  $region22: #{esm2_forward.26} parent=0 // pred_check
    _
  $region23: #{esm2_forward.26} parent=0 // pred_check_branch
    %78 = sbr.rel (0) target = $region25
  $region24: #{esm2_forward.26} parent=0 // pred_region
    _
  $region25: #{esm2_forward.26} parent=0 // pred_fallthru
    _
  // Predicated region
  $region26: #{esm2_forward.26} parent=0 // pred_check
    _
  $region27: #{esm2_forward.26} parent=0 // pred_check_branch
    %80 = sbr.rel (0) target = $region29
  $region28: #{esm2_forward.26} parent=0 // pred_region
    _
  $region29: #{esm2_forward.26} parent=0 // pred_fallthru
    _
  // Predicated region
  $region30: #{esm2_forward.26} parent=0 // pred_check
    _
  $region31: #{esm2_forward.26} parent=0 // pred_check_branch
    %82 = sbr.rel (0) target = $region33
  $region32: #{esm2_forward.26} parent=0 // pred_region
    _
  $region33: #{esm2_forward.26} parent=0 // pred_fallthru
    _

// kernel: esm2_forward.25
$region0: #{esm2_forward.25}
  #allocation0 [shape = 'u32[]', space=smem, size = 0x4, offset = 0x4, fixed_abs, tag = 'smem constant byte address 0x4 - core index']
  #allocation1 [shape = 'u32[144,128]{1,0:T(1,128)}', space=vmem, size = 0x12000, scoped, tag = 'internal scratch']
  #allocation2 [shape = 'f32[16,32]{1,0:T(8,128)}', space=vmem, size = 0x2000, scoped, tag = 'scratch operand']
  %s0 = inlined_call_operand.vmem [shape: f32[16,32], index: 0, kind: input, shape index: {}]
  %s1 = inlined_call_operand.vmem [shape: bf16[32,32], index: 1, kind: input, shape index: {}]
  %s2 = inlined_call_operand.vmem [shape: f32[1,32], index: 2, kind: input, shape index: {}]
  %s3 = inlined_call_operand.vmem [shape: f32[16,32], index: 3, kind: output, shape index: {}]
  %s4 = sld [smem:[#allocation0]]
  $region30: #{esm2_forward.25} parent=0
    _
  %s6 = ssub.s32 1, %s4
  %s7 = scalar_select 0, %s6, %s4
  // Predicated region
  $region2: #{esm2_forward.25} parent=0 // pred_check
    _
  $region3: #{esm2_forward.25} parent=0 // pred_check_branch
    %9 = sbr.rel (0) target = $region5
  $region4: #{esm2_forward.25} parent=0 // pred_region
    _
  $region5: #{esm2_forward.25} parent=0 // pred_fallthru
    _
  // Predicated region
  $region6: #{esm2_forward.25} parent=0 // pred_check
    _
  $region7: #{esm2_forward.25} parent=0 // pred_check_branch
    %11 = sbr.rel (0) target = $region9
  $region8: #{esm2_forward.25} parent=0 // pred_region
    _
  $region9: #{esm2_forward.25} parent=0 // pred_fallthru
    _
  // Predicated region
  $region10: #{esm2_forward.25} parent=0 // pred_check
    _
  $region11: #{esm2_forward.25} parent=0 // pred_check_branch
    %13 = sbr.rel (0) target = $region13
  $region12: #{esm2_forward.25} parent=0 // pred_region
    _
  $region13: #{esm2_forward.25} parent=0 // pred_fallthru
    _
  %p15 = scmp.eq.s32.totalorder 0, 0
  // Predicated region
  $region14: #{esm2_forward.25} parent=0 // pred_check
    %p16 = pneg %p15
  $region15: #{esm2_forward.25} parent=0 // pred_check_branch
    %18 = sbr.rel (%p16) target = $region17
  $region16: #{esm2_forward.25} parent=0 // pred_region
    %vm19 = vcmask 261120
    %20 = vst.msk [vmem:[#allocation2] sm:$0xff] %vm19, 0.0
    %21 = vst.msk [vmem:[#allocation2 + $0x8] sm:$0xff] %vm19, 0.0
  $region17: #{esm2_forward.25} parent=0 // pred_fallthru
    _
  %v22 = vld [vmem:[%s0] sm:$0xff]
  %v23 = vld [vmem:[%s0 + $0x8] sm:$0xff]
  %v24 = vpack.c.bf16 %v23, %v22
  %v25 = vld [vmem:[%s1] sm:$0xf]
  %v26 = vld [vmem:[%s1 + $0x4] sm:$0xf]
  %v27 = vld [vmem:[%s1 + $0x8] sm:$0xf]
  %v28 = vld [vmem:[%s1 + $0xc] sm:$0xf]
  %v29 = vld [vmem:[#allocation2] sm:$0xff]
  %v30 = vld [vmem:[#allocation2 + $0x8] sm:$0xff]
  %v35 = vunpack.c.l.b16 %v25
  %v36 = vunpack.c.l.b16 %v26
  %v37 = vunpack.c.l.b16 %v27
  %v38 = vunpack.c.l.b16 %v28
  %v39 = vpack.c.b16 %v36, %v35
  %v40 = vpack.c.b16 %v38, %v37
  %vm43 = vcmask 261120
  %v45 = vsel %vm43, %v24, 0
  %47 = vmatprep.subr.bf16.mxu0 0
  %48 = vmatpush1.bf16.msra.mxu0 %v39
  %49 = vmatprep.subr.bf16.mxu0 0
  %50 = vmatpush1.bf16.msra.mxu0 %v40
  %51 = vmatprep.subr.bf16.mxu0 0
  %52 = vmatpush1.bf16.msra.mxu0 0
  %53 = vmatprep.subr.bf16.mxu0 0
  %54 = vmatpush1.bf16.msra.mxu0 0
  %55 = vmatprep.subr.bf16.mxu0 0
  %56 = vmatpush1.bf16.msra.mxu0 0
  %57 = vmatprep.subr.bf16.mxu0 0
  %58 = vmatpush1.bf16.msra.mxu0 0
  %59 = vmatprep.subr.bf16.mxu0 0
  %60 = vmatpush1.bf16.msra.mxu0 0
  %61 = vmatprep.subr.bf16.mxu0 0
  %62 = vmatpush1.bf16.msra.mxu0 0
  %63 = vmatprep.subr.bf16.mxu0 0
  %64 = vmatpush1.bf16.msra.mxu0 0
  %65 = vmatprep.subr.bf16.mxu0 0
  %66 = vmatpush1.bf16.msra.mxu0 0
  %67 = vmatprep.subr.bf16.mxu0 0
  %68 = vmatpush1.bf16.msra.mxu0 0
  %69 = vmatprep.subr.bf16.mxu0 0
  %70 = vmatpush1.bf16.msra.mxu0 0
  %71 = vmatprep.subr.bf16.mxu0 0
  %72 = vmatpush1.bf16.msra.mxu0 0
  %73 = vmatprep.subr.bf16.mxu0 0
  %74 = vmatpush1.bf16.msra.mxu0 0
  %75 = vmatprep.subr.bf16.mxu0 0
  %76 = vmatpush1.bf16.msra.mxu0 0
  %77 = vmatprep.subr.bf16.mxu0 0
  %78 = vmatpush1.bf16.msra.mxu0 0
  %79 = vmatprep.mubr.bf16.mxu0 0
  %80 = vmatmul.mubr.bf16.gmra.mrb[0].mxu0 %v45
  %v81 = vpop.f32.mrb[0].mxu0
  %v82 = vadd.f32 0.0, %v81
  %v83 = vpop.f32.mrb[0].mxu0
  %v84 = vpop.f32.mrb[0].mxu0
  %v85 = vadd.f32 0.0, %v84
  %v86 = vpop.f32.mrb[0].mxu0
  %87 = vdwg.mxu0
  %v88 = vadd.f32 %v29, %v82
  %v89 = vadd.f32 %v30, %v85
  %90 = vst.msk [vmem:[#allocation2] sm:$0xff] %vm43, %v88
  %91 = vst.msk [vmem:[#allocation2 + $0x8] sm:$0xff] %vm43, %v89
  // Predicated region
  $region18: #{esm2_forward.25} parent=0 // pred_check
    %p92 = pneg %p15
  $region19: #{esm2_forward.25} parent=0 // pred_check_branch
    %94 = sbr.rel (%p92) target = $region21
  $region20: #{esm2_forward.25} parent=0 // pred_region
    %v95 = vld [vmem:[#allocation2] sm:$0xff]
    %v96 = vld [vmem:[#allocation2 + $0x8] sm:$0xff]
    %v97 = vld [vmem:[%s2] sm:$0x1]
    %v99 = vlaneseq
    %v100 = vshrl.u32 %v99, 7
    %v101 = vsub.s32 0, %v100
    %v102 = vrot.slane %v97, %v101
    %v104 = vadd.f32 %v95, %v102
    %v105 = vadd.f32 %v96, %v102
    %106 = vst.msk [vmem:[%s3] sm:$0xff] %vm43, %v104
    %107 = vst.msk [vmem:[%s3 + $0x8] sm:$0xff] %vm43, %v105
  $region21: #{esm2_forward.25} parent=0 // pred_fallthru
    _
  // Predicated region
  $region22: #{esm2_forward.25} parent=0 // pred_check
    _
  $region23: #{esm2_forward.25} parent=0 // pred_check_branch
    %109 = sbr.rel (0) target = $region25
  $region24: #{esm2_forward.25} parent=0 // pred_region
    _
  $region25: #{esm2_forward.25} parent=0 // pred_fallthru
    _
  // Predicated region
  $region26: #{esm2_forward.25} parent=0 // pred_check
    _
  $region27: #{esm2_forward.25} parent=0 // pred_check_branch
    %111 = sbr.rel (0) target = $region29
  $region28: #{esm2_forward.25} parent=0 // pred_region
    _
  $region29: #{esm2_forward.25} parent=0 // pred_fallthru
    _

// kernel: esm2_forward.27
$region0: #{esm2_forward.27}
  #allocation0 [shape = 'u32[]', space=smem, size = 0x4, offset = 0x4, fixed_abs, tag = 'smem constant byte address 0x4 - core index']
  #allocation1 [shape = 'u32[144,128]{1,0:T(1,128)}', space=vmem, size = 0x12000, scoped, tag = 'internal scratch']
  #allocation2 [shape = 'f32[16,128]{1,0:T(8,128)}', space=vmem, size = 0x2000, scoped, tag = 'scratch operand']
  %s0 = inlined_call_operand.vmem [shape: f32[16,32], index: 0, kind: input, shape index: {}]
  %s1 = inlined_call_operand.vmem [shape: bf16[32,128], index: 1, kind: input, shape index: {}]
  %s2 = inlined_call_operand.vmem [shape: f32[1,128], index: 2, kind: input, shape index: {}]
  %s3 = inlined_call_operand.vmem [shape: bf16[16,128], index: 3, kind: output, shape index: {}]
  %s4 = sld [smem:[#allocation0]]
  $region30: #{esm2_forward.27} parent=0
    _
  %s6 = ssub.s32 1, %s4
  %s7 = scalar_select 0, %s6, %s4
  // Predicated region
  $region2: #{esm2_forward.27} parent=0 // pred_check
    _
  $region3: #{esm2_forward.27} parent=0 // pred_check_branch
    %9 = sbr.rel (0) target = $region5
  $region4: #{esm2_forward.27} parent=0 // pred_region
    _
  $region5: #{esm2_forward.27} parent=0 // pred_fallthru
    _
  // Predicated region
  $region6: #{esm2_forward.27} parent=0 // pred_check
    _
  $region7: #{esm2_forward.27} parent=0 // pred_check_branch
    %11 = sbr.rel (0) target = $region9
  $region8: #{esm2_forward.27} parent=0 // pred_region
    _
  $region9: #{esm2_forward.27} parent=0 // pred_fallthru
    _
  // Predicated region
  $region10: #{esm2_forward.27} parent=0 // pred_check
    _
  $region11: #{esm2_forward.27} parent=0 // pred_check_branch
    %13 = sbr.rel (0) target = $region13
  $region12: #{esm2_forward.27} parent=0 // pred_region
    _
  $region13: #{esm2_forward.27} parent=0 // pred_fallthru
    _
  %p15 = scmp.eq.s32.totalorder 0, 0
  // Predicated region
  $region14: #{esm2_forward.27} parent=0 // pred_check
    %p16 = pneg %p15
  $region15: #{esm2_forward.27} parent=0 // pred_check_branch
    %18 = sbr.rel (%p16) target = $region17
  $region16: #{esm2_forward.27} parent=0 // pred_region
    %19 = vst [vmem:[#allocation2] sm:$0xff] 0.0
    %20 = vst [vmem:[#allocation2 + $0x8] sm:$0xff] 0.0
  $region17: #{esm2_forward.27} parent=0 // pred_fallthru
    _
  %v21 = vld [vmem:[%s0] sm:$0xff]
  %v22 = vld [vmem:[%s0 + $0x8] sm:$0xff]
  %v23 = vpack.c.bf16 %v22, %v21
  %v24 = vld [vmem:[%s1] sm:$0xf]
  %v25 = vld [vmem:[%s1 + $0x4] sm:$0xf]
  %v26 = vld [vmem:[%s1 + $0x8] sm:$0xf]
  %v27 = vld [vmem:[%s1 + $0xc] sm:$0xf]
  %v28 = vld [vmem:[#allocation2] sm:$0xff]
  %v29 = vld [vmem:[#allocation2 + $0x8] sm:$0xff]
  %v34 = vunpack.c.l.b16 %v24
  %v35 = vunpack.c.l.b16 %v25
  %v36 = vunpack.c.l.b16 %v26
  %v37 = vunpack.c.l.b16 %v27
  %v38 = vpack.c.b16 %v35, %v34
  %v39 = vpack.c.b16 %v37, %v36
  %vm42 = vcmask 261120
  %v44 = vsel %vm42, %v23, 0
  %46 = vmatprep.subr.bf16.mxu0 0
  %47 = vmatpush1.bf16.msra.mxu0 %v38
  %48 = vmatprep.subr.bf16.mxu0 0
  %49 = vmatpush1.bf16.msra.mxu0 %v39
  %50 = vmatprep.subr.bf16.mxu0 0
  %51 = vmatpush1.bf16.msra.mxu0 0
  %52 = vmatprep.subr.bf16.mxu0 0
  %53 = vmatpush1.bf16.msra.mxu0 0
  %54 = vmatprep.subr.bf16.mxu0 0
  %55 = vmatpush1.bf16.msra.mxu0 0
  %56 = vmatprep.subr.bf16.mxu0 0
  %57 = vmatpush1.bf16.msra.mxu0 0
  %58 = vmatprep.subr.bf16.mxu0 0
  %59 = vmatpush1.bf16.msra.mxu0 0
  %60 = vmatprep.subr.bf16.mxu0 0
  %61 = vmatpush1.bf16.msra.mxu0 0
  %62 = vmatprep.subr.bf16.mxu0 0
  %63 = vmatpush1.bf16.msra.mxu0 0
  %64 = vmatprep.subr.bf16.mxu0 0
  %65 = vmatpush1.bf16.msra.mxu0 0
  %66 = vmatprep.subr.bf16.mxu0 0
  %67 = vmatpush1.bf16.msra.mxu0 0
  %68 = vmatprep.subr.bf16.mxu0 0
  %69 = vmatpush1.bf16.msra.mxu0 0
  %70 = vmatprep.subr.bf16.mxu0 0
  %71 = vmatpush1.bf16.msra.mxu0 0
  %72 = vmatprep.subr.bf16.mxu0 0
  %73 = vmatpush1.bf16.msra.mxu0 0
  %74 = vmatprep.subr.bf16.mxu0 0
  %75 = vmatpush1.bf16.msra.mxu0 0
  %76 = vmatprep.subr.bf16.mxu0 0
  %77 = vmatpush1.bf16.msra.mxu0 0
  %78 = vmatprep.mubr.bf16.mxu0 0
  %79 = vmatmul.mubr.bf16.gmra.mrb[0].mxu0 %v44
  %v80 = vpop.f32.mrb[0].mxu0
  %v81 = vadd.f32 0.0, %v80
  %v82 = vpop.f32.mrb[0].mxu0
  %v83 = vpop.f32.mrb[0].mxu0
  %v84 = vadd.f32 0.0, %v83
  %v85 = vpop.f32.mrb[0].mxu0
  %86 = vdwg.mxu0
  %v87 = vadd.f32 %v28, %v81
  %v88 = vadd.f32 %v29, %v84
  %89 = vst [vmem:[#allocation2] sm:$0xff] %v87
  %90 = vst [vmem:[#allocation2 + $0x8] sm:$0xff] %v88
  // Predicated region
  $region18: #{esm2_forward.27} parent=0 // pred_check
    %p91 = pneg %p15
  $region19: #{esm2_forward.27} parent=0 // pred_check_branch
    %93 = sbr.rel (%p91) target = $region21
  $region20: #{esm2_forward.27} parent=0 // pred_region
    %v94 = vld [vmem:[#allocation2] sm:$0xff]
    %v95 = vld [vmem:[#allocation2 + $0x8] sm:$0xff]
    %v96 = vld [vmem:[%s2] sm:$0x1]
    %v98 = vlaneseq
    %v99 = vshrl.u32 %v98, 7
    %v100 = vsub.s32 0, %v99
    %v101 = vrot.slane %v96, %v100
    %v103 = vadd.f32 %v94, %v101
    %v104 = vadd.f32 %v95, %v101
    %v105 = vpack.c.bf16 %v104, %v103
    %v107 = vunpack.c.l.b16 %v105
    %v108 = vunpack.c.h.b16 %v105
    %v109 = vpack.c.b16 %v107, %v107
    %v110 = vpack.c.b16 %v108, %v108
    %113 = vst [vmem:[%s3] sm:$0xf] %v109
    %114 = vst [vmem:[%s3 + $0x4] sm:$0xf] %v110
  $region21: #{esm2_forward.27} parent=0 // pred_fallthru
    _
  // Predicated region
  $region22: #{esm2_forward.27} parent=0 // pred_check
    _
  $region23: #{esm2_forward.27} parent=0 // pred_check_branch
    %116 = sbr.rel (0) target = $region25
  $region24: #{esm2_forward.27} parent=0 // pred_region
    _
  $region25: #{esm2_forward.27} parent=0 // pred_fallthru
    _
  // Predicated region
  $region26: #{esm2_forward.27} parent=0 // pred_check
    _
  $region27: #{esm2_forward.27} parent=0 // pred_check_branch
    %118 = sbr.rel (0) target = $region29
  $region28: #{esm2_forward.27} parent=0 // pred_region
    _
  $region29: #{esm2_forward.27} parent=0 // pred_fallthru
    _

// kernel: esm2_forward.24
$region0: #{esm2_forward.24}
  #allocation0 [shape = 'u32[]', space=smem, size = 0x4, offset = 0x4, fixed_abs, tag = 'smem constant byte address 0x4 - core index']
  #allocation1 [shape = 'u32[144,128]{1,0:T(1,128)}', space=vmem, size = 0x12000, scoped, tag = 'internal scratch']
  %s0 = inlined_call_operand.vmem [shape: f32[2,8,96], index: 0, kind: input, shape index: {}]
  %s1 = inlined_call_operand.vmem [shape: f32[2,1,8], index: 1, kind: input, shape index: {}]
  %s2 = inlined_call_operand.vmem [shape: f32[8,8], index: 2, kind: input, shape index: {}]
  %s3 = inlined_call_operand.vmem [shape: f32[8,8], index: 3, kind: input, shape index: {}]
  %s4 = inlined_call_operand.vmem [shape: f32[2,8,32], index: 4, kind: output, shape index: {}]
  %s5 = sld [smem:[#allocation0]]
  $region49: #{esm2_forward.24} parent=0
    _
  %s7 = ssub.s32 1, %s5
  %s8 = scalar_select 0, %s7, %s5
  loop: start=0, step=1, limit=4
  $region2: #{esm2_forward.24} parent=0 // loop_pre_header
    _
  $region3: #{esm2_forward.24} parent=0 // loop_header
    %s10 = sphi 0, %s14
    %p11 = scmp.ge.s32.totalorder %s10, 4
    %s20 = sphi 0, %s22
    %s23 = sphi 0, %s20
    %s24 = sphi 0, %s23
    %s40 = sphi 0, %s24
    %s46 = sphi 0, %s48
    %s49 = sphi 0, %s46
    %s50 = sphi 0, %s49
    %s66 = sphi 0, %s50
    %s70 = sphi 0, %s70
    %s72 = sphi 0, %s70
    %s73 = sphi 0, %s72
    %s87 = sphi 0, %s73
    %s91 = sphi 0, %s91
    %s93 = sphi 0, %s91
    %s94 = sphi 0, %s93
    %s108 = sphi 0, %s94
    %s114 = sphi 0, %s116
    %s117 = sphi 0, %s114
    %s118 = sphi 0, %s117
    %s134 = sphi 0, %s118
  $region4: #{esm2_forward.24} parent=0 // loop_header_branch
    %13 = sbr.rel (%p11) target = $region8
  $region5: #{esm2_forward.24} parent=0 // loop_body
    %s15 = ssub.s32 %s10, 1
    %s16 = ssub.s32 %s10, 2
    %s17 = sadd.s32 %s10, 1
    %s18 = ssub.s32 %s10, %s17
    %p19 = scmp.eq.s32.totalorder %s18, 0
    %s21 = sadd.s32 %s20, 1
    %s22 = scalar_select %p19, %s20, %s21
    %p25 = pneg %p19
    %p26 = scmp.eq.s32.totalorder %s10, 1
    %p27 = por %p25, %p26
    %p28 = scmp.ne.s32.totalorder %s20, %s23
    %p29 = scmp.eq.s32.totalorder %s10, 0
    %p30 = por %p28, %p29
    %p31 = scmp.ne.s32.totalorder %s20, %s23
    %p32 = scmp.eq.s32.totalorder %s15, 1
    %p33 = por %p31, %p32
    %p34 = scmp.ne.s32.totalorder %s23, %s24
    %p35 = scmp.eq.s32.totalorder %s15, 0
    %p36 = por %p34, %p35
    %p37 = scmp.ne.s32.totalorder %s23, %s24
    %p38 = scmp.eq.s32.totalorder %s16, 1
    %p39 = por %p37, %p38
    %p41 = scmp.ne.s32.totalorder %s24, %s40
    %p42 = scmp.eq.s32.totalorder %s16, 0
    %p43 = por %p41, %p42
    %s44 = ssub.s32 %s10, %s17
    %p45 = scmp.eq.s32.totalorder %s44, 0
    %s47 = sadd.s32 %s46, 1
    %s48 = scalar_select %p45, %s46, %s47
    %p51 = pneg %p45
    %p52 = scmp.eq.s32.totalorder %s10, 1
    %p53 = por %p51, %p52
    %p54 = scmp.ne.s32.totalorder %s46, %s49
    %p55 = scmp.eq.s32.totalorder %s10, 0
    %p56 = por %p54, %p55
    %p57 = scmp.ne.s32.totalorder %s46, %s49
    %p58 = scmp.eq.s32.totalorder %s15, 1
    %p59 = por %p57, %p58
    %p60 = scmp.ne.s32.totalorder %s49, %s50
    %p61 = scmp.eq.s32.totalorder %s15, 0
    %p62 = por %p60, %p61
    %p63 = scmp.ne.s32.totalorder %s49, %s50
    %p64 = scmp.eq.s32.totalorder %s16, 1
    %p65 = por %p63, %p64
    %p67 = scmp.ne.s32.totalorder %s50, %s66
    %p68 = scmp.eq.s32.totalorder %s16, 0
    %p69 = por %p67, %p68
    %s71 = sadd.s32 %s70, 1
    %p74 = scmp.eq.s32.totalorder %s10, 1
    %p75 = scmp.ne.s32.totalorder %s70, %s72
    %p76 = scmp.eq.s32.totalorder %s10, 0
    %p77 = por %p75, %p76
    %p78 = scmp.ne.s32.totalorder %s70, %s72
    %p79 = scmp.eq.s32.totalorder %s15, 1
    %p80 = por %p78, %p79
    %p81 = scmp.ne.s32.totalorder %s72, %s73
    %p82 = scmp.eq.s32.totalorder %s15, 0
    %p83 = por %p81, %p82
    %p84 = scmp.ne.s32.totalorder %s72, %s73
    %p85 = scmp.eq.s32.totalorder %s16, 1
    %p86 = por %p84, %p85
    %p88 = scmp.ne.s32.totalorder %s73, %s87
    %p89 = scmp.eq.s32.totalorder %s16, 0
    %p90 = por %p88, %p89
    %s92 = sadd.s32 %s91, 1
    %p95 = scmp.eq.s32.totalorder %s10, 1
    %p96 = scmp.ne.s32.totalorder %s91, %s93
    %p97 = scmp.eq.s32.totalorder %s10, 0
    %p98 = por %p96, %p97
    %p99 = scmp.ne.s32.totalorder %s91, %s93
    %p100 = scmp.eq.s32.totalorder %s15, 1
    %p101 = por %p99, %p100
    %p102 = scmp.ne.s32.totalorder %s93, %s94
    %p103 = scmp.eq.s32.totalorder %s15, 0
    %p104 = por %p102, %p103
    %p105 = scmp.ne.s32.totalorder %s93, %s94
    %p106 = scmp.eq.s32.totalorder %s16, 1
    %p107 = por %p105, %p106
    %p109 = scmp.ne.s32.totalorder %s94, %s108
    %p110 = scmp.eq.s32.totalorder %s16, 0
    %p111 = por %p109, %p110
    %s112 = ssub.s32 %s10, %s17
    %p113 = scmp.eq.s32.totalorder %s112, 0
    %s115 = sadd.s32 %s114, 1
    %s116 = scalar_select %p113, %s114, %s115
    %p119 = pneg %p113
    %p120 = scmp.eq.s32.totalorder %s10, 1
    %p121 = por %p119, %p120
    %p122 = scmp.ne.s32.totalorder %s114, %s117
    %p123 = scmp.eq.s32.totalorder %s10, 0
    %p124 = por %p122, %p123
    %p125 = scmp.ne.s32.totalorder %s114, %s117
    %p126 = scmp.eq.s32.totalorder %s15, 1
    %p127 = por %p125, %p126
    %p128 = scmp.ne.s32.totalorder %s117, %s118
    %p129 = scmp.eq.s32.totalorder %s15, 0
    %p130 = por %p128, %p129
    %p131 = scmp.ne.s32.totalorder %s117, %s118
    %p132 = scmp.eq.s32.totalorder %s16, 1
    %p133 = por %p131, %p132
    %p135 = scmp.ne.s32.totalorder %s118, %s134
    %p136 = scmp.eq.s32.totalorder %s16, 0
    %p137 = por %p135, %p136
    %p138 = scmp.le.s32.totalorder 1, %s10
    %p139 = scmp.lt.s32.totalorder %s10, 3
    %p140 = pnand %p138, %p139
    %p141 = pneg %p140
    // Predicated region
    $region9: #{esm2_forward.24} parent=5 // pred_check
      _
    $region10: #{esm2_forward.24} parent=5 // pred_check_branch
      %143 = sbr.rel (%p140) target = $region12
    $region11: #{esm2_forward.24} parent=5 // pred_region
      %s144 = ssub.s32 %s10, 1
      // Predicated region
      $region13: #{esm2_forward.24} parent=11 // pred_check
        %p145 = pneg %p83
      $region14: #{esm2_forward.24} parent=11 // pred_check_branch
        %147 = sbr.rel (%p145) target = $region16
      $region15: #{esm2_forward.24} parent=11 // pred_region
        _
      $region16: #{esm2_forward.24} parent=11 // pred_fallthru
        _
      // Predicated region
      $region17: #{esm2_forward.24} parent=11 // pred_check
        %p148 = pneg %p104
      $region18: #{esm2_forward.24} parent=11 // pred_check_branch
        %150 = sbr.rel (%p148) target = $region20
      $region19: #{esm2_forward.24} parent=11 // pred_region
        _
      $region20: #{esm2_forward.24} parent=11 // pred_fallthru
        _
    $region12: #{esm2_forward.24} parent=5 // pred_fallthru
      _
    %p151 = scmp.lt.s32.totalorder %s10, 2
    // Predicated region
    $region21: #{esm2_forward.24} parent=5 // pred_check
      %p152 = pneg %p151
    $region22: #{esm2_forward.24} parent=5 // pred_check_branch
      %154 = sbr.rel (%p152) target = $region24
    $region23: #{esm2_forward.24} parent=5 // pred_region
      // Predicated region
      $region25: #{esm2_forward.24} parent=23 // pred_check
        %p155 = pneg %p30
      $region26: #{esm2_forward.24} parent=23 // pred_check_branch
        %157 = sbr.rel (%p155) target = $region28
      $region27: #{esm2_forward.24} parent=23 // pred_region
        %p158 = scmp.lt.s32.totalorder %s10, 1
        %s159 = scalar_select %p158, %s10, 1
        %s160 = smul.addr %s159, 8
        %s161 = scalar_lea.vmem %s0, %s160
      $region28: #{esm2_forward.24} parent=23 // pred_fallthru
        _
      // Predicated region
      $region29: #{esm2_forward.24} parent=23 // pred_check
        %p162 = pneg %p56
      $region30: #{esm2_forward.24} parent=23 // pred_check_branch
        %164 = sbr.rel (%p162) target = $region32
      $region31: #{esm2_forward.24} parent=23 // pred_region
        %p165 = scmp.lt.s32.totalorder %s10, 1
        %s166 = scalar_select %p165, %s10, 1
        %s167 = scalar_lea.vmem %s1, %s166
      $region32: #{esm2_forward.24} parent=23 // pred_fallthru
        _
    $region24: #{esm2_forward.24} parent=5 // pred_fallthru
      _
    %p168 = scmp.le.s32.totalorder 1, %s10
    %p169 = scmp.lt.s32.totalorder %s10, 3
    %p170 = pnand %p168, %p169
    %p171 = pneg %p170
    // Predicated region
    $region33: #{esm2_forward.24} parent=5 // pred_check
      _
    $region34: #{esm2_forward.24} parent=5 // pred_check_branch
      %173 = sbr.rel (%p170) target = $region36
    $region35: #{esm2_forward.24} parent=5 // pred_region
      %s174 = ssub.s32 %s10, 1
      %p175 = scmp.lt.s32.totalorder %s15, 1
      %s176 = scalar_select %p175, %s15, 1
      %s177 = smul.addr %s176, 8
      %s178 = scalar_lea.vmem %s0, %s177
      %p179 = pneg %p36
      %p180 = pneg %p33
      %p181 = scmp.lt.s32.totalorder %s15, 1
      %s182 = scalar_select %p181, %s15, 1
      %s183 = scalar_lea.vmem %s1, %s182
      %p184 = pneg %p62
      %p185 = pneg %p59
      %p186 = pneg %p83
      %p187 = pneg %p80
      %p188 = pneg %p104
      %p189 = pneg %p101
      %p190 = pneg %p130
      %p191 = pneg %p127
      %p192 = scmp.lt.s32.totalorder %s15, 1
      %s193 = scalar_select %p192, %s15, 1
      %s194 = smul.addr %s193, 8
      %s195 = scalar_lea.vmem %s4, %s194
      %p196 = scmp.lt.s32.totalorder %s15, 1
      %s197 = scalar_select %p196, %s15, 1
      %s198 = smul.addr %s197, 8
      %s199 = scalar_lea.vmem %s0, %s198
      %p200 = scmp.lt.s32.totalorder %s15, 1
      %s201 = scalar_select %p200, %s15, 1
      %s202 = scalar_lea.vmem %s1, %s201
      %p203 = scmp.lt.s32.totalorder %s15, 1
      %s204 = scalar_select %p203, %s15, 1
      %s205 = smul.addr %s204, 8
      %s206 = scalar_lea.vmem %s4, %s205
      %v208 = vld [vmem:[%s199] sm:$0xff]
      %v209 = vld [vmem:[%s202] sm:$0x1]
      %v210 = vld [vmem:[%s2] sm:$0xff]
      %v211 = vld [vmem:[%s3] sm:$0xff]
      %v212 = vmul.f32 %v208, 0.35355338
      %v213 = vsub.f32 0.0, %v212
      %215 = vrot.lane.b32.xlu0 %v213, 124
      %v216 = vpop.permute.xlu0 %215
      %219 = vrot.lane.b32.xlu0 %v212, 4
      %v220 = vpop.permute.xlu0 %219
      %vm222 = vcmask 31744
      %v223 = vsel %vm222, %v216, %v220
      %v224 = vmul.f32 %v212, %v210
      %v225 = vmul.f32 %v223, %v211
      %v226 = vadd.f32 %v224, %v225
      %v227 = vpack.c.bf16 %v226, %v226
      %v228 = vsub.f32 0.0, %v208
      %230 = vrot.lane.b32.xlu0 %v228, 92
      %v231 = vpop.permute.xlu0 %230
      %234 = vrot.lane.b32.xlu0 %v208, 100
      %v235 = vpop.permute.xlu0 %234
      %v237 = vsel %vm222, %v231, %v235
      %239 = vrot.lane.b32.xlu0 %v210, 32
      %v240 = vpop.permute.xlu0 %239
      %v242 = vmul.f32 %v208, %v240
      %v243 = vmul.f32 %v237, %v211
      %245 = vrot.lane.b32.xlu0 %v243, 32
      %v246 = vpop.permute.xlu0 %245
      %v248 = vadd.f32 %v242, %v246
      %v249 = vpack.c.bf16 %v248, %v248
      %v251 = vlaneseq
      %v252 = vshrl.u32 %v251, 7
      %v253 = vsub.s32 0, %v252
      %v254 = vrot.slane %v209, %v253
      %257 = vrot.lane.b32.xlu0 %v249, 96
      %v258 = vpop.permute.xlu0 %257
      %vm259 = vcmask 64512
      %v261 = vsel %vm259, %v227, 0
      %v264 = vsel %vm259, %v258, 0
      %266 = vmatprep.subr.bf16.mxu0 0
      %267 = vmatpush1.bf16.xpose.msra.mxu0 %v264
      %268 = vmatprep.subr.bf16.mxu0 0
      %269 = vmatpush1.bf16.xpose.msra.mxu0 0
      %270 = vmatprep.subr.bf16.mxu0 0
      %271 = vmatpush1.bf16.xpose.msra.mxu0 0
      %272 = vmatprep.subr.bf16.mxu0 0
      %273 = vmatpush1.bf16.xpose.msra.mxu0 0
      %274 = vmatprep.subr.bf16.mxu0 0
      %275 = vmatpush1.bf16.xpose.msra.mxu0 0
      %276 = vmatprep.subr.bf16.mxu0 0
      %277 = vmatpush1.bf16.xpose.msra.mxu0 0
      %278 = vmatprep.subr.bf16.mxu0 0
      %279 = vmatpush1.bf16.xpose.msra.mxu0 0
      %280 = vmatprep.subr.bf16.mxu0 0
      %281 = vmatpush1.bf16.xpose.msra.mxu0 0
      %282 = vmatprep.subr.bf16.mxu0 0
      %283 = vmatpush1.bf16.xpose.msra.mxu0 0
      %284 = vmatprep.subr.bf16.mxu0 0
      %285 = vmatpush1.bf16.xpose.msra.mxu0 0
      %286 = vmatprep.subr.bf16.mxu0 0
      %287 = vmatpush1.bf16.xpose.msra.mxu0 0
      %288 = vmatprep.subr.bf16.mxu0 0
      %289 = vmatpush1.bf16.xpose.msra.mxu0 0
      %290 = vmatprep.subr.bf16.mxu0 0
      %291 = vmatpush1.bf16.xpose.msra.mxu0 0
      %292 = vmatprep.subr.bf16.mxu0 0
      %293 = vmatpush1.bf16.xpose.msra.mxu0 0
      %294 = vmatprep.subr.bf16.mxu0 0
      %295 = vmatpush1.bf16.xpose.msra.mxu0 0
      %296 = vmatprep.subr.bf16.mxu0 0
      %297 = vmatpush1.bf16.xpose.msra.mxu0 0
      %298 = vmatprep.mubr.bf16.mxu0 0
      %299 = vmatmul.mubr.bf16.gmra.mrb[0].mxu0 %v261
      %v300 = vpop.f32.mrb[0].mxu0
      %v301 = vadd.f32 %v254, %v300
      %v302 = vpop.f32.mrb[0].mxu0
      %v303 = vpop.f32.mrb[0].mxu0
      %v304 = vpop.f32.mrb[0].mxu0
      %305 = vdwg.mxu0
      %v306 = vsel %vm259, %v301, -inf
      %307 = vmax.xlane.f32.xlu0 %v306
      %v308 = vpop.xlane.xlu0 %307
      %v309 = vsub.f32 %v301, %v308
      %v310 = vmul.f32 %v309, 1.442695
      %v311 = vpow.pop %v310
      %v312 = vsel %vm259, %v311, 0.0
      %313 = vadd.xlane.f32.xlu0 %v312
      %v314 = vpop.xlane.xlu0 %313
      %v315 = vrcp.pop %v314
      %v316 = vmul.f32 %v311, %v315
      %v317 = vpack.c.bf16 %v316, %v316
      %v318 = vpack.c.bf16 %v208, %v208
      %320 = vrot.lane.b32.xlu0 %v318, 64
      %v321 = vpop.permute.xlu0 %320
      %v323 = vsel %vm259, %v317, 0
      %vm325 = vcmask 1043456
      %v327 = vsel %vm325, %v321, 0
      %329 = vmatprep.subr.bf16.mxu0 0
      %330 = vmatpush1.bf16.msra.mxu0 %v327
      %331 = vmatprep.subr.bf16.mxu0 0
      %332 = vmatpush1.bf16.msra.mxu0 0
      %333 = vmatprep.subr.bf16.mxu0 0
      %334 = vmatpush1.bf16.msra.mxu0 0
      %335 = vmatprep.subr.bf16.mxu0 0
      %336 = vmatpush1.bf16.msra.mxu0 0
      %337 = vmatprep.subr.bf16.mxu0 0
      %338 = vmatpush1.bf16.msra.mxu0 0
      %339 = vmatprep.subr.bf16.mxu0 0
      %340 = vmatpush1.bf16.msra.mxu0 0
      %341 = vmatprep.subr.bf16.mxu0 0
      %342 = vmatpush1.bf16.msra.mxu0 0
      %343 = vmatprep.subr.bf16.mxu0 0
      %344 = vmatpush1.bf16.msra.mxu0 0
      %345 = vmatprep.subr.bf16.mxu0 0
      %346 = vmatpush1.bf16.msra.mxu0 0
      %347 = vmatprep.subr.bf16.mxu0 0
      %348 = vmatpush1.bf16.msra.mxu0 0
      %349 = vmatprep.subr.bf16.mxu0 0
      %350 = vmatpush1.bf16.msra.mxu0 0
      %351 = vmatprep.subr.bf16.mxu0 0
      %352 = vmatpush1.bf16.msra.mxu0 0
      %353 = vmatprep.subr.bf16.mxu0 0
      %354 = vmatpush1.bf16.msra.mxu0 0
      %355 = vmatprep.subr.bf16.mxu0 0
      %356 = vmatpush1.bf16.msra.mxu0 0
      %357 = vmatprep.subr.bf16.mxu0 0
      %358 = vmatpush1.bf16.msra.mxu0 0
      %359 = vmatprep.subr.bf16.mxu0 0
      %360 = vmatpush1.bf16.msra.mxu0 0
      %361 = vmatprep.mubr.bf16.mxu0 0
      %362 = vmatmul.mubr.bf16.gmra.mrb[0].mxu0 %v323
      %v363 = vpop.f32.mrb[0].mxu0
      %v364 = vadd.f32 0.0, %v363
      %v365 = vpop.f32.mrb[0].mxu0
      %v366 = vpop.f32.mrb[0].mxu0
      %v367 = vpop.f32.mrb[0].mxu0
      %368 = vdwg.mxu0
      %369 = vrot.lane.b32.xlu0 %v213, 116
      %v370 = vpop.permute.xlu0 %369
      %372 = vrot.lane.b32.xlu0 %v212, 124
      %v373 = vpop.permute.xlu0 %372
      %v375 = vsel %vm222, %v370, %v373
      %376 = vrot.lane.b32.xlu0 %v210, 8
      %v377 = vpop.permute.xlu0 %376
      %v379 = vmul.f32 %v212, %v377
      %v380 = vmul.f32 %v375, %v211
      %382 = vrot.lane.b32.xlu0 %v380, 8
      %v383 = vpop.permute.xlu0 %382
      %v385 = vadd.f32 %v379, %v383
      %v386 = vpack.c.bf16 %v385, %v385
      %387 = vrot.lane.b32.xlu0 %v228, 84
      %v388 = vpop.permute.xlu0 %387
      %390 = vrot.lane.b32.xlu0 %v208, 92
      %v391 = vpop.permute.xlu0 %390
      %v393 = vsel %vm222, %v388, %v391
      %394 = vrot.lane.b32.xlu0 %v210, 40
      %v395 = vpop.permute.xlu0 %394
      %v397 = vmul.f32 %v208, %v395
      %v398 = vmul.f32 %v393, %v211
      %400 = vrot.lane.b32.xlu0 %v398, 40
      %v401 = vpop.permute.xlu0 %400
      %v403 = vadd.f32 %v397, %v401
      %v404 = vpack.c.bf16 %v403, %v403
      %406 = vrot.lane.b32.xlu0 %v386, 120
      %v407 = vpop.permute.xlu0 %406
      %409 = vrot.lane.b32.xlu0 %v404, 88
      %v410 = vpop.permute.xlu0 %409
      %v412 = vsel %vm259, %v407, 0
      %v415 = vsel %vm259, %v410, 0
      %417 = vmatprep.subr.bf16.mxu0 0
      %418 = vmatpush1.bf16.xpose.msra.mxu0 %v415
      %419 = vmatprep.subr.bf16.mxu0 0
      %420 = vmatpush1.bf16.xpose.msra.mxu0 0
      %421 = vmatprep.subr.bf16.mxu0 0
      %422 = vmatpush1.bf16.xpose.msra.mxu0 0
      %423 = vmatprep.subr.bf16.mxu0 0
      %424 = vmatpush1.bf16.xpose.msra.mxu0 0
      %425 = vmatprep.subr.bf16.mxu0 0
      %426 = vmatpush1.bf16.xpose.msra.mxu0 0
      %427 = vmatprep.subr.bf16.mxu0 0
      %428 = vmatpush1.bf16.xpose.msra.mxu0 0
      %429 = vmatprep.subr.bf16.mxu0 0
      %430 = vmatpush1.bf16.xpose.msra.mxu0 0
      %431 = vmatprep.subr.bf16.mxu0 0
      %432 = vmatpush1.bf16.xpose.msra.mxu0 0
      %433 = vmatprep.subr.bf16.mxu0 0
      %434 = vmatpush1.bf16.xpose.msra.mxu0 0
      %435 = vmatprep.subr.bf16.mxu0 0
      %436 = vmatpush1.bf16.xpose.msra.mxu0 0
      %437 = vmatprep.subr.bf16.mxu0 0
      %438 = vmatpush1.bf16.xpose.msra.mxu0 0
      %439 = vmatprep.subr.bf16.mxu0 0
      %440 = vmatpush1.bf16.xpose.msra.mxu0 0
      %441 = vmatprep.subr.bf16.mxu0 0
      %442 = vmatpush1.bf16.xpose.msra.mxu0 0
      %443 = vmatprep.subr.bf16.mxu0 0
      %444 = vmatpush1.bf16.xpose.msra.mxu0 0
      %445 = vmatprep.subr.bf16.mxu0 0
      %446 = vmatpush1.bf16.xpose.msra.mxu0 0
      %447 = vmatprep.subr.bf16.mxu0 0
      %448 = vmatpush1.bf16.xpose.msra.mxu0 0
      %449 = vmatprep.mubr.bf16.mxu0 0
      %450 = vmatmul.mubr.bf16.gmra.mrb[0].mxu0 %v412
      %v451 = vpop.f32.mrb[0].mxu0
      %v452 = vadd.f32 %v254, %v451
      %v453 = vpop.f32.mrb[0].mxu0
      %v454 = vpop.f32.mrb[0].mxu0
      %v455 = vpop.f32.mrb[0].mxu0
      %456 = vdwg.mxu0
      %v457 = vsel %vm259, %v452, -inf
      %458 = vmax.xlane.f32.xlu0 %v457
      %v459 = vpop.xlane.xlu0 %458
      %v460 = vsub.f32 %v452, %v459
      %v461 = vmul.f32 %v460, 1.442695
      %v462 = vpow.pop %v461
      %v463 = vsel %vm259, %v462, 0.0
      %464 = vadd.xlane.f32.xlu0 %v463
      %v465 = vpop.xlane.xlu0 %464
      %v466 = vrcp.pop %v465
      %v467 = vmul.f32 %v462, %v466
      %v468 = vpack.c.bf16 %v467, %v467
      %469 = vrot.lane.b32.xlu0 %v318, 56
      %v470 = vpop.permute.xlu0 %469
      %v472 = vsel %vm259, %v468, 0
      %v475 = vsel %vm325, %v470, 0
      %477 = vmatprep.subr.bf16.mxu0 0
      %478 = vmatpush1.bf16.msra.mxu0 %v475
      %479 = vmatprep.subr.bf16.mxu0 0
      %480 = vmatpush1.bf16.msra.mxu0 0
      %481 = vmatprep.subr.bf16.mxu0 0
      %482 = vmatpush1.bf16.msra.mxu0 0
      %483 = vmatprep.subr.bf16.mxu0 0
      %484 = vmatpush1.bf16.msra.mxu0 0
      %485 = vmatprep.subr.bf16.mxu0 0
      %486 = vmatpush1.bf16.msra.mxu0 0
      %487 = vmatprep.subr.bf16.mxu0 0
      %488 = vmatpush1.bf16.msra.mxu0 0
      %489 = vmatprep.subr.bf16.mxu0 0
      %490 = vmatpush1.bf16.msra.mxu0 0
      %491 = vmatprep.subr.bf16.mxu0 0
      %492 = vmatpush1.bf16.msra.mxu0 0
      %493 = vmatprep.subr.bf16.mxu0 0
      %494 = vmatpush1.bf16.msra.mxu0 0
      %495 = vmatprep.subr.bf16.mxu0 0
      %496 = vmatpush1.bf16.msra.mxu0 0
      %497 = vmatprep.subr.bf16.mxu0 0
      %498 = vmatpush1.bf16.msra.mxu0 0
      %499 = vmatprep.subr.bf16.mxu0 0
      %500 = vmatpush1.bf16.msra.mxu0 0
      %501 = vmatprep.subr.bf16.mxu0 0
      %502 = vmatpush1.bf16.msra.mxu0 0
      %503 = vmatprep.subr.bf16.mxu0 0
      %504 = vmatpush1.bf16.msra.mxu0 0
      %505 = vmatprep.subr.bf16.mxu0 0
      %506 = vmatpush1.bf16.msra.mxu0 0
      %507 = vmatprep.subr.bf16.mxu0 0
      %508 = vmatpush1.bf16.msra.mxu0 0
      %509 = vmatprep.mubr.bf16.mxu0 0
      %510 = vmatmul.mubr.bf16.gmra.mrb[0].mxu0 %v472
      %v511 = vpop.f32.mrb[0].mxu0
      %v512 = vadd.f32 0.0, %v511
      %v513 = vpop.f32.mrb[0].mxu0
      %v514 = vpop.f32.mrb[0].mxu0
      %v515 = vpop.f32.mrb[0].mxu0
      %516 = vdwg.mxu0
      %517 = vrot.lane.b32.xlu0 %v213, 108
      %v518 = vpop.permute.xlu0 %517
      %520 = vrot.lane.b32.xlu0 %v212, 116
      %v521 = vpop.permute.xlu0 %520
      %v523 = vsel %vm222, %v518, %v521
      %524 = vrot.lane.b32.xlu0 %v210, 16
      %v525 = vpop.permute.xlu0 %524
      %v527 = vmul.f32 %v212, %v525
      %v528 = vmul.f32 %v523, %v211
      %530 = vrot.lane.b32.xlu0 %v528, 16
      %v531 = vpop.permute.xlu0 %530
      %v533 = vadd.f32 %v527, %v531
      %v534 = vpack.c.bf16 %v533, %v533
      %535 = vrot.lane.b32.xlu0 %v228, 76
      %v536 = vpop.permute.xlu0 %535
      %538 = vrot.lane.b32.xlu0 %v208, 84
      %v539 = vpop.permute.xlu0 %538
      %v541 = vsel %vm222, %v536, %v539
      %542 = vrot.lane.b32.xlu0 %v210, 48
      %v543 = vpop.permute.xlu0 %542
      %v545 = vmul.f32 %v208, %v543
      %v546 = vmul.f32 %v541, %v211
      %548 = vrot.lane.b32.xlu0 %v546, 48
      %v549 = vpop.permute.xlu0 %548
      %v551 = vadd.f32 %v545, %v549
      %v552 = vpack.c.bf16 %v551, %v551
      %554 = vrot.lane.b32.xlu0 %v534, 112
      %v555 = vpop.permute.xlu0 %554
      %557 = vrot.lane.b32.xlu0 %v552, 80
      %v558 = vpop.permute.xlu0 %557
      %v560 = vsel %vm259, %v555, 0
      %v563 = vsel %vm259, %v558, 0
      %565 = vmatprep.subr.bf16.mxu0 0
      %566 = vmatpush1.bf16.xpose.msra.mxu0 %v563
      %567 = vmatprep.subr.bf16.mxu0 0
      %568 = vmatpush1.bf16.xpose.msra.mxu0 0
      %569 = vmatprep.subr.bf16.mxu0 0
      %570 = vmatpush1.bf16.xpose.msra.mxu0 0
      %571 = vmatprep.subr.bf16.mxu0 0
      %572 = vmatpush1.bf16.xpose.msra.mxu0 0
      %573 = vmatprep.subr.bf16.mxu0 0
      %574 = vmatpush1.bf16.xpose.msra.mxu0 0
      %575 = vmatprep.subr.bf16.mxu0 0
      %576 = vmatpush1.bf16.xpose.msra.mxu0 0
      %577 = vmatprep.subr.bf16.mxu0 0
      %578 = vmatpush1.bf16.xpose.msra.mxu0 0
      %579 = vmatprep.subr.bf16.mxu0 0
      %580 = vmatpush1.bf16.xpose.msra.mxu0 0
      %581 = vmatprep.subr.bf16.mxu0 0
      %582 = vmatpush1.bf16.xpose.msra.mxu0 0
      %583 = vmatprep.subr.bf16.mxu0 0
      %584 = vmatpush1.bf16.xpose.msra.mxu0 0
      %585 = vmatprep.subr.bf16.mxu0 0
      %586 = vmatpush1.bf16.xpose.msra.mxu0 0
      %587 = vmatprep.subr.bf16.mxu0 0
      %588 = vmatpush1.bf16.xpose.msra.mxu0 0
      %589 = vmatprep.subr.bf16.mxu0 0
      %590 = vmatpush1.bf16.xpose.msra.mxu0 0
      %591 = vmatprep.subr.bf16.mxu0 0
      %592 = vmatpush1.bf16.xpose.msra.mxu0 0
      %593 = vmatprep.subr.bf16.mxu0 0
      %594 = vmatpush1.bf16.xpose.msra.mxu0 0
      %595 = vmatprep.subr.bf16.mxu0 0
      %596 = vmatpush1.bf16.xpose.msra.mxu0 0
      %597 = vmatprep.mubr.bf16.mxu0 0
      %598 = vmatmul.mubr.bf16.gmra.mrb[0].mxu0 %v560
      %v599 = vpop.f32.mrb[0].mxu0
      %v600 = vadd.f32 %v254, %v599
      %v601 = vpop.f32.mrb[0].mxu0
      %v602 = vpop.f32.mrb[0].mxu0
      %v603 = vpop.f32.mrb[0].mxu0
      %604 = vdwg.mxu0
      %v605 = vsel %vm259, %v600, -inf
      %606 = vmax.xlane.f32.xlu0 %v605
      %v607 = vpop.xlane.xlu0 %606
      %v608 = vsub.f32 %v600, %v607
      %v609 = vmul.f32 %v608, 1.442695
      %v610 = vpow.pop %v609
      %v611 = vsel %vm259, %v610, 0.0
      %612 = vadd.xlane.f32.xlu0 %v611
      %v613 = vpop.xlane.xlu0 %612
      %v614 = vrcp.pop %v613
      %v615 = vmul.f32 %v610, %v614
      %v616 = vpack.c.bf16 %v615, %v615
      %617 = vrot.lane.b32.xlu0 %v318, 48
      %v618 = vpop.permute.xlu0 %617
      %v620 = vsel %vm259, %v616, 0
      %v623 = vsel %vm325, %v618, 0
      %625 = vmatprep.subr.bf16.mxu0 0
      %626 = vmatpush1.bf16.msra.mxu0 %v623
      %627 = vmatprep.subr.bf16.mxu0 0
      %628 = vmatpush1.bf16.msra.mxu0 0
      %629 = vmatprep.subr.bf16.mxu0 0
      %630 = vmatpush1.bf16.msra.mxu0 0
      %631 = vmatprep.subr.bf16.mxu0 0
      %632 = vmatpush1.bf16.msra.mxu0 0
      %633 = vmatprep.subr.bf16.mxu0 0
      %634 = vmatpush1.bf16.msra.mxu0 0
      %635 = vmatprep.subr.bf16.mxu0 0
      %636 = vmatpush1.bf16.msra.mxu0 0
      %637 = vmatprep.subr.bf16.mxu0 0
      %638 = vmatpush1.bf16.msra.mxu0 0
      %639 = vmatprep.subr.bf16.mxu0 0
      %640 = vmatpush1.bf16.msra.mxu0 0
      %641 = vmatprep.subr.bf16.mxu0 0
      %642 = vmatpush1.bf16.msra.mxu0 0
      %643 = vmatprep.subr.bf16.mxu0 0
      %644 = vmatpush1.bf16.msra.mxu0 0
      %645 = vmatprep.subr.bf16.mxu0 0
      %646 = vmatpush1.bf16.msra.mxu0 0
      %647 = vmatprep.subr.bf16.mxu0 0
      %648 = vmatpush1.bf16.msra.mxu0 0
      %649 = vmatprep.subr.bf16.mxu0 0
      %650 = vmatpush1.bf16.msra.mxu0 0
      %651 = vmatprep.subr.bf16.mxu0 0
      %652 = vmatpush1.bf16.msra.mxu0 0
      %653 = vmatprep.subr.bf16.mxu0 0
      %654 = vmatpush1.bf16.msra.mxu0 0
      %655 = vmatprep.subr.bf16.mxu0 0
      %656 = vmatpush1.bf16.msra.mxu0 0
      %657 = vmatprep.mubr.bf16.mxu0 0
      %658 = vmatmul.mubr.bf16.gmra.mrb[0].mxu0 %v620
      %v659 = vpop.f32.mrb[0].mxu0
      %v660 = vadd.f32 0.0, %v659
      %v661 = vpop.f32.mrb[0].mxu0
      %v662 = vpop.f32.mrb[0].mxu0
      %v663 = vpop.f32.mrb[0].mxu0
      %664 = vdwg.mxu0
      %665 = vrot.lane.b32.xlu0 %v213, 100
      %v666 = vpop.permute.xlu0 %665
      %668 = vrot.lane.b32.xlu0 %v212, 108
      %v669 = vpop.permute.xlu0 %668
      %v671 = vsel %vm222, %v666, %v669
      %672 = vrot.lane.b32.xlu0 %v210, 24
      %v673 = vpop.permute.xlu0 %672
      %v675 = vmul.f32 %v212, %v673
      %v676 = vmul.f32 %v671, %v211
      %678 = vrot.lane.b32.xlu0 %v676, 24
      %v679 = vpop.permute.xlu0 %678
      %v681 = vadd.f32 %v675, %v679
      %v682 = vpack.c.bf16 %v681, %v681
      %683 = vrot.lane.b32.xlu0 %v228, 68
      %v684 = vpop.permute.xlu0 %683
      %686 = vrot.lane.b32.xlu0 %v208, 76
      %v687 = vpop.permute.xlu0 %686
      %v689 = vsel %vm222, %v684, %v687
      %690 = vrot.lane.b32.xlu0 %v210, 56
      %v691 = vpop.permute.xlu0 %690
      %v693 = vmul.f32 %v208, %v691
      %v694 = vmul.f32 %v689, %v211
      %696 = vrot.lane.b32.xlu0 %v694, 56
      %v697 = vpop.permute.xlu0 %696
      %v699 = vadd.f32 %v693, %v697
      %v700 = vpack.c.bf16 %v699, %v699
      %702 = vrot.lane.b32.xlu0 %v682, 104
      %v703 = vpop.permute.xlu0 %702
      %705 = vrot.lane.b32.xlu0 %v700, 72
      %v706 = vpop.permute.xlu0 %705
      %v708 = vsel %vm259, %v703, 0
      %v711 = vsel %vm259, %v706, 0
      %713 = vmatprep.subr.bf16.mxu0 0
      %714 = vmatpush1.bf16.xpose.msra.mxu0 %v711
      %715 = vmatprep.subr.bf16.mxu0 0
      %716 = vmatpush1.bf16.xpose.msra.mxu0 0
      %717 = vmatprep.subr.bf16.mxu0 0
      %718 = vmatpush1.bf16.xpose.msra.mxu0 0
      %719 = vmatprep.subr.bf16.mxu0 0
      %720 = vmatpush1.bf16.xpose.msra.mxu0 0
      %721 = vmatprep.subr.bf16.mxu0 0
      %722 = vmatpush1.bf16.xpose.msra.mxu0 0
      %723 = vmatprep.subr.bf16.mxu0 0
      %724 = vmatpush1.bf16.xpose.msra.mxu0 0
      %725 = vmatprep.subr.bf16.mxu0 0
      %726 = vmatpush1.bf16.xpose.msra.mxu0 0
      %727 = vmatprep.subr.bf16.mxu0 0
      %728 = vmatpush1.bf16.xpose.msra.mxu0 0
      %729 = vmatprep.subr.bf16.mxu0 0
      %730 = vmatpush1.bf16.xpose.msra.mxu0 0
      %731 = vmatprep.subr.bf16.mxu0 0
      %732 = vmatpush1.bf16.xpose.msra.mxu0 0
      %733 = vmatprep.subr.bf16.mxu0 0
      %734 = vmatpush1.bf16.xpose.msra.mxu0 0
      %735 = vmatprep.subr.bf16.mxu0 0
      %736 = vmatpush1.bf16.xpose.msra.mxu0 0
      %737 = vmatprep.subr.bf16.mxu0 0
      %738 = vmatpush1.bf16.xpose.msra.mxu0 0
      %739 = vmatprep.subr.bf16.mxu0 0
      %740 = vmatpush1.bf16.xpose.msra.mxu0 0
      %741 = vmatprep.subr.bf16.mxu0 0
      %742 = vmatpush1.bf16.xpose.msra.mxu0 0
      %743 = vmatprep.subr.bf16.mxu0 0
      %744 = vmatpush1.bf16.xpose.msra.mxu0 0
      %745 = vmatprep.mubr.bf16.mxu0 0
      %746 = vmatmul.mubr.bf16.gmra.mrb[0].mxu0 %v708
      %v747 = vpop.f32.mrb[0].mxu0
      %v748 = vadd.f32 %v254, %v747
      %v749 = vpop.f32.mrb[0].mxu0
      %v750 = vpop.f32.mrb[0].mxu0
      %v751 = vpop.f32.mrb[0].mxu0
      %752 = vdwg.mxu0
      %v753 = vsel %vm259, %v748, -inf
      %754 = vmax.xlane.f32.xlu0 %v753
      %v755 = vpop.xlane.xlu0 %754
      %v756 = vsub.f32 %v748, %v755
      %v757 = vmul.f32 %v756, 1.442695
      %v758 = vpow.pop %v757
      %v759 = vsel %vm259, %v758, 0.0
      %760 = vadd.xlane.f32.xlu0 %v759
      %v761 = vpop.xlane.xlu0 %760
      %v762 = vrcp.pop %v761
      %v763 = vmul.f32 %v758, %v762
      %v764 = vpack.c.bf16 %v763, %v763
      %765 = vrot.lane.b32.xlu0 %v318, 40
      %v766 = vpop.permute.xlu0 %765
      %v768 = vsel %vm259, %v764, 0
      %v771 = vsel %vm325, %v766, 0
      %773 = vmatprep.subr.bf16.mxu0 0
      %774 = vmatpush1.bf16.msra.mxu0 %v771
      %775 = vmatprep.subr.bf16.mxu0 0
      %776 = vmatpush1.bf16.msra.mxu0 0
      %777 = vmatprep.subr.bf16.mxu0 0
      %778 = vmatpush1.bf16.msra.mxu0 0
      %779 = vmatprep.subr.bf16.mxu0 0
      %780 = vmatpush1.bf16.msra.mxu0 0
      %781 = vmatprep.subr.bf16.mxu0 0
      %782 = vmatpush1.bf16.msra.mxu0 0
      %783 = vmatprep.subr.bf16.mxu0 0
      %784 = vmatpush1.bf16.msra.mxu0 0
      %785 = vmatprep.subr.bf16.mxu0 0
      %786 = vmatpush1.bf16.msra.mxu0 0
      %787 = vmatprep.subr.bf16.mxu0 0
      %788 = vmatpush1.bf16.msra.mxu0 0
      %789 = vmatprep.subr.bf16.mxu0 0
      %790 = vmatpush1.bf16.msra.mxu0 0
      %791 = vmatprep.subr.bf16.mxu0 0
      %792 = vmatpush1.bf16.msra.mxu0 0
      %793 = vmatprep.subr.bf16.mxu0 0
      %794 = vmatpush1.bf16.msra.mxu0 0
      %795 = vmatprep.subr.bf16.mxu0 0
      %796 = vmatpush1.bf16.msra.mxu0 0
      %797 = vmatprep.subr.bf16.mxu0 0
      %798 = vmatpush1.bf16.msra.mxu0 0
      %799 = vmatprep.subr.bf16.mxu0 0
      %800 = vmatpush1.bf16.msra.mxu0 0
      %801 = vmatprep.subr.bf16.mxu0 0
      %802 = vmatpush1.bf16.msra.mxu0 0
      %803 = vmatprep.subr.bf16.mxu0 0
      %804 = vmatpush1.bf16.msra.mxu0 0
      %805 = vmatprep.mubr.bf16.mxu0 0
      %806 = vmatmul.mubr.bf16.gmra.mrb[0].mxu0 %v768
      %v807 = vpop.f32.mrb[0].mxu0
      %v808 = vadd.f32 0.0, %v807
      %v809 = vpop.f32.mrb[0].mxu0
      %v810 = vpop.f32.mrb[0].mxu0
      %v811 = vpop.f32.mrb[0].mxu0
      %812 = vdwg.mxu0
      %814 = vrot.lane.b32.xlu0 %v512, 8
      %v815 = vpop.permute.xlu0 %814
      %818 = vrot.lane.b32.xlu0 %v660, 16
      %v819 = vpop.permute.xlu0 %818
      %822 = vrot.lane.b32.xlu0 %v808, 24
      %v823 = vpop.permute.xlu0 %822
      %v825 = vsel %vm259, %v364, %v815
      %vm826 = vcmask 130048
      %v827 = vsel %vm826, %v825, %v819
      %vm828 = vcmask 195584
      %v829 = vsel %vm828, %v827, %v823
      %vm830 = vcmask 261120
      %831 = vst.msk [vmem:[%s206] sm:$0xff] %vm830, %v829
      %p832 = scmp.lt.s32.totalorder %s15, 1
      %s833 = scalar_select %p832, %s15, 1
      %s834 = smul.addr %s833, 8
      %s835 = scalar_lea.vmem %s4, %s834
      // Predicated region
      $region37: #{esm2_forward.24} parent=35 // pred_check
        %p836 = pneg %p127
      $region38: #{esm2_forward.24} parent=35 // pred_check_branch
        %838 = sbr.rel (%p836) target = $region40
      $region39: #{esm2_forward.24} parent=35 // pred_region
        _
      $region40: #{esm2_forward.24} parent=35 // pred_fallthru
        _
    $region36: #{esm2_forward.24} parent=5 // pred_fallthru
      _
    %p839 = scmp.le.s32.totalorder 2, %s10
    // Predicated region
    $region41: #{esm2_forward.24} parent=5 // pred_check
      %p840 = pneg %p839
    $region42: #{esm2_forward.24} parent=5 // pred_check_branch
      %842 = sbr.rel (%p840) target = $region44
    $region43: #{esm2_forward.24} parent=5 // pred_region
      %s843 = ssub.s32 %s10, 2
      // Predicated region
      $region45: #{esm2_forward.24} parent=43 // pred_check
        %p844 = pneg %p133
      $region46: #{esm2_forward.24} parent=43 // pred_check_branch
        %846 = sbr.rel (%p844) target = $region48
      $region47: #{esm2_forward.24} parent=43 // pred_region
        %p847 = scmp.lt.s32.totalorder %s16, 1
        %s848 = scalar_select %p847, %s16, 1
        %s849 = smul.addr %s848, 8
        %s850 = scalar_lea.vmem %s4, %s849
      $region48: #{esm2_forward.24} parent=43 // pred_fallthru
        _
    $region44: #{esm2_forward.24} parent=5 // pred_fallthru
      _
  $region6: #{esm2_forward.24} parent=0 // loop_footer
    %s14 = sadd.s32 1, %s10
  $region7: #{esm2_forward.24} parent=0 // loop_footer_branch
    %9 = sbr.rel target = $region3
  $region8: #{esm2_forward.24} parent=0 // loop_exit
    _

// kernel: esm2_forward.36
$region0: #{esm2_forward.36}
  #allocation0 [shape = 'u32[]', space=smem, size = 0x4, offset = 0x4, fixed_abs, tag = 'smem constant byte address 0x4 - core index']
  #allocation1 [shape = 'u32[144,128]{1,0:T(1,128)}', space=vmem, size = 0x12000, scoped, tag = 'internal scratch']
  %s0 = inlined_call_operand.vmem [shape: f32[16,32], index: 0, kind: input, shape index: {}]
  %s1 = inlined_call_operand.vmem [shape: f32[16,32], index: 1, kind: input, shape index: {}]
  %s2 = inlined_call_operand.vmem [shape: f32[1,32], index: 2, kind: input, shape index: {}]
  %s3 = inlined_call_operand.vmem [shape: f32[1,32], index: 3, kind: input, shape index: {}]
  %s4 = inlined_call_operand.hbm [shape: f32[16,32], index: 4, kind: output, shape index: {0}]
  %s5 = inlined_call_operand.vmem [shape: f32[16,32], index: 5, kind: output, shape index: {1}]
  %6 = xla_tuple %s4, %s5
  %s7 = sld [smem:[#allocation0]]
  $region34: #{esm2_forward.36} parent=0
    _
  %s9 = ssub.s32 1, %s7
  %s10 = scalar_select 0, %s9, %s7
  $region1: #{esm2_forward.36} parent=0
    #allocation2 [shape = 'u8[8192]{0}', space=vmem, size = 0x2000, scoped, tag = 'output window, operand 0, single buffered']
    #allocation3 [shape = 's32[1]{0}', space=sflag, size = 0x4, scoped, tag = 'scoped memory for esm2_forward.36']
    %11 = vsyncpa [#allocation3], 0
    // Predicated region
    $region2: #{esm2_forward.36} parent=1 // pred_check
      _
    $region3: #{esm2_forward.36} parent=1 // pred_check_branch
      %13 = sbr.rel (0) target = $region5
    $region4: #{esm2_forward.36} parent=1 // pred_region
      _
    $region5: #{esm2_forward.36} parent=1 // pred_fallthru
      _
    // Predicated region
    $region6: #{esm2_forward.36} parent=1 // pred_check
      _
    $region7: #{esm2_forward.36} parent=1 // pred_check_branch
      %15 = sbr.rel (0) target = $region9
    $region8: #{esm2_forward.36} parent=1 // pred_region
      _
    $region9: #{esm2_forward.36} parent=1 // pred_fallthru
      _
    // Predicated region
    $region10: #{esm2_forward.36} parent=1 // pred_check
      _
    $region11: #{esm2_forward.36} parent=1 // pred_check_branch
      %17 = sbr.rel (0) target = $region13
    $region12: #{esm2_forward.36} parent=1 // pred_region
      _
    $region13: #{esm2_forward.36} parent=1 // pred_fallthru
      _
    // Predicated region
    $region14: #{esm2_forward.36} parent=1 // pred_check
      _
    $region15: #{esm2_forward.36} parent=1 // pred_check_branch
      %19 = sbr.rel (0) target = $region17
    $region16: #{esm2_forward.36} parent=1 // pred_region
      _
    $region17: #{esm2_forward.36} parent=1 // pred_fallthru
      _
    %v20 = vld [vmem:[%s0] sm:$0xff]
    %v21 = vld [vmem:[%s0 + $0x8] sm:$0xff]
    %v22 = vld [vmem:[%s1] sm:$0xff]
    %v23 = vld [vmem:[%s1 + $0x8] sm:$0xff]
    %v24 = vadd.f32 %v20, %v22
    %v25 = vadd.f32 %v21, %v23
    %vm26 = vcmask 261120
    %27 = vst.msk [vmem:[#allocation2] sm:$0xff] %vm26, %v24
    %28 = vst.msk [vmem:[#allocation2 + $0x8] sm:$0xff] %vm26, %v25
    %v29 = vld [vmem:[%s2] sm:$0x1]
    %v30 = vld [vmem:[%s3] sm:$0x1]
    %v31 = vsel %vm26, %v24, 0.0
    %32 = vadd.xlane.f32.xlu0 %v31
    %v33 = vpop.xlane.xlu0 %32
    %v34 = vsel %vm26, %v25, 0.0
    %35 = vadd.xlane.f32.xlu0 %v34
    %v36 = vpop.xlane.xlu0 %35
    %v37 = vrcp.pop 32.0
    %v38 = vmul.f32 %v33, %v37
    %v39 = vmul.f32 %v36, %v37
    %v40 = vsub.f32 %v24, %v38
    %v41 = vsub.f32 %v25, %v39
    %v42 = vmul.f32 %v40, %v40
    %v43 = vmul.f32 %v41, %v41
    %v44 = vsel %vm26, %v42, 0.0
    %45 = vadd.xlane.f32.xlu0 %v44
    %v46 = vpop.xlane.xlu0 %45
    %v47 = vsel %vm26, %v43, 0.0
    %48 = vadd.xlane.f32.xlu0 %v47
    %v49 = vpop.xlane.xlu0 %48
    %v50 = vmul.f32 %v46, %v37
    %v51 = vmul.f32 %v49, %v37
    %v52 = vadd.f32 %v50, 1e-05
    %v53 = vadd.f32 %v51, 1e-05
    %v54 = vrsqrt.pop %v52
    %v55 = vrsqrt.pop %v53
    %v56 = vmul.f32 %v40, %v54
    %v57 = vmul.f32 %v41, %v55
    %v59 = vlaneseq
    %v60 = vshrl.u32 %v59, 7
    %v61 = vsub.s32 0, %v60
    %v62 = vrot.slane %v29, %v61
    %v64 = vmul.f32 %v56, %v62
    %v65 = vmul.f32 %v57, %v62
    %v67 = vlaneseq
    %v68 = vshrl.u32 %v67, 7
    %v69 = vsub.s32 0, %v68
    %v70 = vrot.slane %v30, %v69
    %v72 = vadd.f32 %v64, %v70
    %v73 = vadd.f32 %v65, %v70
    %74 = vst.msk [vmem:[%s5] sm:$0xff] %vm26, %v72
    %75 = vst.msk [vmem:[%s5 + $0x8] sm:$0xff] %vm26, %v73
    // Predicated region
    $region18: #{esm2_forward.36} parent=1 // pred_check
      _
    $region19: #{esm2_forward.36} parent=1 // pred_check_branch
      %77 = sbr.rel (0) target = $region21
    $region20: #{esm2_forward.36} parent=1 // pred_region
      %s79 = ssub.s32 256, 256
      %80 = vsyncadd [#allocation3], %s79
      %s81 = sshll.u32 [#allocation2], 4
      %s82 = int_to_ptr.vmem [resolvable:$true] %s81
      %87 = dma.vmem_to_hbm [thread:$0]  %s82, 256, %s4, [#allocation3], 128, 128, 8
    $region21: #{esm2_forward.36} parent=1 // pred_fallthru
      _
    // Predicated region
    $region22: #{esm2_forward.36} parent=1 // pred_check
      _
    $region23: #{esm2_forward.36} parent=1 // pred_check_branch
      %89 = sbr.rel (0) target = $region25
    $region24: #{esm2_forward.36} parent=1 // pred_region
      _
    $region25: #{esm2_forward.36} parent=1 // pred_fallthru
      _
    // Predicated region
    $region26: #{esm2_forward.36} parent=1 // pred_check
      _
    $region27: #{esm2_forward.36} parent=1 // pred_check_branch
      %91 = sbr.rel (0) target = $region29
    $region28: #{esm2_forward.36} parent=1 // pred_region
      %92 = dma.done [#allocation3], 256
    $region29: #{esm2_forward.36} parent=1 // pred_fallthru
      _
    // Predicated region
    $region30: #{esm2_forward.36} parent=1 // pred_check
      _
    $region31: #{esm2_forward.36} parent=1 // pred_check_branch
      %94 = sbr.rel (0) target = $region33
    $region32: #{esm2_forward.36} parent=1 // pred_region
      _
    $region33: #{esm2_forward.36} parent=1 // pred_fallthru
      _
    %95 = vsyncpa [#allocation3], 1

// kernel: esm2_forward.28
$region0: #{esm2_forward.28}
  #allocation0 [shape = 'u32[]', space=smem, size = 0x4, offset = 0x4, fixed_abs, tag = 'smem constant byte address 0x4 - core index']
  #allocation1 [shape = 'u32[144,128]{1,0:T(1,128)}', space=vmem, size = 0x12000, scoped, tag = 'internal scratch']
  #allocation2 [shape = 'f32[16,32]{1,0:T(8,128)}', space=vmem, size = 0x2000, scoped, tag = 'scratch operand']
  %s0 = inlined_call_operand.vmem [shape: bf16[16,128], index: 0, kind: input, shape index: {}]
  %s1 = inlined_call_operand.vmem [shape: bf16[128,32], index: 1, kind: input, shape index: {}]
  %s2 = inlined_call_operand.vmem [shape: f32[1,32], index: 2, kind: input, shape index: {}]
  %s3 = inlined_call_operand.vmem [shape: f32[16,32], index: 3, kind: output, shape index: {}]
  %s4 = sld [smem:[#allocation0]]
  $region30: #{esm2_forward.28} parent=0
    _
  %s6 = ssub.s32 1, %s4
  %s7 = scalar_select 0, %s6, %s4
  // Predicated region
  $region2: #{esm2_forward.28} parent=0 // pred_check
    _
  $region3: #{esm2_forward.28} parent=0 // pred_check_branch
    %9 = sbr.rel (0) target = $region5
  $region4: #{esm2_forward.28} parent=0 // pred_region
    _
  $region5: #{esm2_forward.28} parent=0 // pred_fallthru
    _
  // Predicated region
  $region6: #{esm2_forward.28} parent=0 // pred_check
    _
  $region7: #{esm2_forward.28} parent=0 // pred_check_branch
    %11 = sbr.rel (0) target = $region9
  $region8: #{esm2_forward.28} parent=0 // pred_region
    _
  $region9: #{esm2_forward.28} parent=0 // pred_fallthru
    _
  // Predicated region
  $region10: #{esm2_forward.28} parent=0 // pred_check
    _
  $region11: #{esm2_forward.28} parent=0 // pred_check_branch
    %13 = sbr.rel (0) target = $region13
  $region12: #{esm2_forward.28} parent=0 // pred_region
    _
  $region13: #{esm2_forward.28} parent=0 // pred_fallthru
    _
  %p15 = scmp.eq.s32.totalorder 0, 0
  // Predicated region
  $region14: #{esm2_forward.28} parent=0 // pred_check
    %p16 = pneg %p15
  $region15: #{esm2_forward.28} parent=0 // pred_check_branch
    %18 = sbr.rel (%p16) target = $region17
  $region16: #{esm2_forward.28} parent=0 // pred_region
    %vm19 = vcmask 261120
    %20 = vst.msk [vmem:[#allocation2] sm:$0xff] %vm19, 0.0
    %21 = vst.msk [vmem:[#allocation2 + $0x8] sm:$0xff] %vm19, 0.0
  $region17: #{esm2_forward.28} parent=0 // pred_fallthru
    _
  %v22 = vld [vmem:[%s0] sm:$0xf]
  %v23 = vld [vmem:[%s0 + $0x4] sm:$0xf]
  %v24 = vld [vmem:[%s1] sm:$0xf]
  %v25 = vld [vmem:[%s1 + $0x4] sm:$0xf]
  %v26 = vld [vmem:[%s1 + $0x8] sm:$0xf]
  %v27 = vld [vmem:[%s1 + $0xc] sm:$0xf]
  %v28 = vld [vmem:[%s1 + $0x10] sm:$0xf]
  %v29 = vld [vmem:[%s1 + $0x14] sm:$0xf]
  %v30 = vld [vmem:[%s1 + $0x18] sm:$0xf]
  %v31 = vld [vmem:[%s1 + $0x1c] sm:$0xf]
  %v32 = vld [vmem:[%s1 + $0x20] sm:$0xf]
  %v33 = vld [vmem:[%s1 + $0x24] sm:$0xf]
  %v34 = vld [vmem:[%s1 + $0x28] sm:$0xf]
  %v35 = vld [vmem:[%s1 + $0x2c] sm:$0xf]
  %v36 = vld [vmem:[%s1 + $0x30] sm:$0xf]
  %v37 = vld [vmem:[%s1 + $0x34] sm:$0xf]
  %v38 = vld [vmem:[%s1 + $0x38] sm:$0xf]
  %v39 = vld [vmem:[%s1 + $0x3c] sm:$0xf]
  %v40 = vld [vmem:[#allocation2] sm:$0xff]
  %v41 = vld [vmem:[#allocation2 + $0x8] sm:$0xff]
  %v44 = vunpack.c.l.b16 %v22
  %v45 = vunpack.c.l.b16 %v23
  %v46 = vpack.c.b16 %v45, %v44
  %v64 = vunpack.c.l.b16 %v24
  %v65 = vunpack.c.l.b16 %v25
  %v66 = vunpack.c.l.b16 %v26
  %v67 = vunpack.c.l.b16 %v27
  %v68 = vunpack.c.l.b16 %v28
  %v69 = vunpack.c.l.b16 %v29
  %v70 = vunpack.c.l.b16 %v30
  %v71 = vunpack.c.l.b16 %v31
  %v72 = vunpack.c.l.b16 %v32
  %v73 = vunpack.c.l.b16 %v33
  %v74 = vunpack.c.l.b16 %v34
  %v75 = vunpack.c.l.b16 %v35
  %v76 = vunpack.c.l.b16 %v36
  %v77 = vunpack.c.l.b16 %v37
  %v78 = vunpack.c.l.b16 %v38
  %v79 = vunpack.c.l.b16 %v39
  %v80 = vpack.c.b16 %v65, %v64
  %v81 = vpack.c.b16 %v67, %v66
  %v82 = vpack.c.b16 %v69, %v68
  %v83 = vpack.c.b16 %v71, %v70
  %v84 = vpack.c.b16 %v73, %v72
  %v85 = vpack.c.b16 %v75, %v74
  %v86 = vpack.c.b16 %v77, %v76
  %v87 = vpack.c.b16 %v79, %v78
  %96 = vmatprep.subr.bf16.mxu0 0
  %97 = vmatpush1.bf16.msra.mxu0 %v80
  %98 = vmatprep.subr.bf16.mxu0 0
  %99 = vmatpush1.bf16.msra.mxu0 %v81
  %100 = vmatprep.subr.bf16.mxu0 0
  %101 = vmatpush1.bf16.msra.mxu0 %v82
  %102 = vmatprep.subr.bf16.mxu0 0
  %103 = vmatpush1.bf16.msra.mxu0 %v83
  %104 = vmatprep.subr.bf16.mxu0 0
  %105 = vmatpush1.bf16.msra.mxu0 %v84
  %106 = vmatprep.subr.bf16.mxu0 0
  %107 = vmatpush1.bf16.msra.mxu0 %v85
  %108 = vmatprep.subr.bf16.mxu0 0
  %109 = vmatpush1.bf16.msra.mxu0 %v86
  %110 = vmatprep.subr.bf16.mxu0 0
  %111 = vmatpush1.bf16.msra.mxu0 %v87
  %112 = vmatprep.subr.bf16.mxu0 0
  %113 = vmatpush1.bf16.msra.mxu0 0
  %114 = vmatprep.subr.bf16.mxu0 0
  %115 = vmatpush1.bf16.msra.mxu0 0
  %116 = vmatprep.subr.bf16.mxu0 0
  %117 = vmatpush1.bf16.msra.mxu0 0
  %118 = vmatprep.subr.bf16.mxu0 0
  %119 = vmatpush1.bf16.msra.mxu0 0
  %120 = vmatprep.subr.bf16.mxu0 0
  %121 = vmatpush1.bf16.msra.mxu0 0
  %122 = vmatprep.subr.bf16.mxu0 0
  %123 = vmatpush1.bf16.msra.mxu0 0
  %124 = vmatprep.subr.bf16.mxu0 0
  %125 = vmatpush1.bf16.msra.mxu0 0
  %126 = vmatprep.subr.bf16.mxu0 0
  %127 = vmatpush1.bf16.msra.mxu0 0
  %128 = vmatprep.mubr.bf16.mxu0 0
  %129 = vmatmul.mubr.bf16.gmra.mrb[0].mxu0 %v46
  %v130 = vpop.f32.mrb[0].mxu0
  %v131 = vadd.f32 0.0, %v130
  %v132 = vpop.f32.mrb[0].mxu0
  %v133 = vpop.f32.mrb[0].mxu0
  %v134 = vadd.f32 0.0, %v133
  %v135 = vpop.f32.mrb[0].mxu0
  %136 = vdwg.mxu0
  %v137 = vadd.f32 %v40, %v131
  %v138 = vadd.f32 %v41, %v134
  %vm139 = vcmask 261120
  %140 = vst.msk [vmem:[#allocation2] sm:$0xff] %vm139, %v137
  %141 = vst.msk [vmem:[#allocation2 + $0x8] sm:$0xff] %vm139, %v138
  // Predicated region
  $region18: #{esm2_forward.28} parent=0 // pred_check
    %p142 = pneg %p15
  $region19: #{esm2_forward.28} parent=0 // pred_check_branch
    %144 = sbr.rel (%p142) target = $region21
  $region20: #{esm2_forward.28} parent=0 // pred_region
    %v145 = vld [vmem:[#allocation2] sm:$0xff]
    %v146 = vld [vmem:[#allocation2 + $0x8] sm:$0xff]
    %v147 = vld [vmem:[%s2] sm:$0x1]
    %v149 = vlaneseq
    %v150 = vshrl.u32 %v149, 7
    %v151 = vsub.s32 0, %v150
    %v152 = vrot.slane %v147, %v151
    %v154 = vadd.f32 %v145, %v152
    %v155 = vadd.f32 %v146, %v152
    %156 = vst.msk [vmem:[%s3] sm:$0xff] %vm139, %v154
    %157 = vst.msk [vmem:[%s3 + $0x8] sm:$0xff] %vm139, %v155
  $region21: #{esm2_forward.28} parent=0 // pred_fallthru
    _
  // Predicated region
  $region22: #{esm2_forward.28} parent=0 // pred_check
    _
  $region23: #{esm2_forward.28} parent=0 // pred_check_branch
    %159 = sbr.rel (0) target = $region25
  $region24: #{esm2_forward.28} parent=0 // pred_region
    _
  $region25: #{esm2_forward.28} parent=0 // pred_fallthru
    _
  // Predicated region
  $region26: #{esm2_forward.28} parent=0 // pred_check
    _
  $region27: #{esm2_forward.28} parent=0 // pred_check_branch
    %161 = sbr.rel (0) target = $region29
  $region28: #{esm2_forward.28} parent=0 // pred_region
    _
  $region29: #{esm2_forward.28} parent=0 // pred_fallthru
    _

// kernel: esm2_forward.39
$region0: #{esm2_forward.39}
  #allocation0 [shape = 'u32[]', space=smem, size = 0x4, offset = 0x4, fixed_abs, tag = 'smem constant byte address 0x4 - core index']
  #allocation1 [shape = 'u32[144,128]{1,0:T(1,128)}', space=vmem, size = 0x12000, scoped, tag = 'internal scratch']
  #allocation2 [shape = 'f32[16,33]{1,0:T(8,128)}', space=vmem, size = 0x2000, scoped, tag = 'scratch operand']
  %s0 = inlined_call_operand.vmem [shape: f32[16,32], index: 0, kind: input, shape index: {}]
  %s1 = inlined_call_operand.vmem [shape: bf16[32,33], index: 1, kind: input, shape index: {}]
  %s2 = inlined_call_operand.vmem [shape: f32[1,33], index: 2, kind: input, shape index: {}]
  %s3 = inlined_call_operand.hbm [shape: f32[16,33], index: 3, kind: output, shape index: {}]
  %s4 = sld [smem:[#allocation0]]
  $region30: #{esm2_forward.39} parent=0
    _
  %s6 = ssub.s32 1, %s4
  %s7 = scalar_select 0, %s6, %s4
  $region1: #{esm2_forward.39} parent=0
    #allocation3 [shape = 'u8[8192]{0}', space=vmem, size = 0x2000, scoped, tag = 'output window, operand 0, single buffered']
    #allocation4 [shape = 's32[1]{0}', space=sflag, size = 0x4, scoped, tag = 'scoped memory for esm2_forward.39']
    %8 = vsyncpa [#allocation4], 0
    // Predicated region
    $region2: #{esm2_forward.39} parent=1 // pred_check
      _
    $region3: #{esm2_forward.39} parent=1 // pred_check_branch
      %10 = sbr.rel (0) target = $region5
    $region4: #{esm2_forward.39} parent=1 // pred_region
      _
    $region5: #{esm2_forward.39} parent=1 // pred_fallthru
      _
    // Predicated region
    $region6: #{esm2_forward.39} parent=1 // pred_check
      _
    $region7: #{esm2_forward.39} parent=1 // pred_check_branch
      %12 = sbr.rel (0) target = $region9
    $region8: #{esm2_forward.39} parent=1 // pred_region
      _
    $region9: #{esm2_forward.39} parent=1 // pred_fallthru
      _
    // Predicated region
    $region10: #{esm2_forward.39} parent=1 // pred_check
      _
    $region11: #{esm2_forward.39} parent=1 // pred_check_branch
      %14 = sbr.rel (0) target = $region13
    $region12: #{esm2_forward.39} parent=1 // pred_region
      _
    $region13: #{esm2_forward.39} parent=1 // pred_fallthru
      _
    %p16 = scmp.eq.s32.totalorder 0, 0
    // Predicated region
    $region14: #{esm2_forward.39} parent=1 // pred_check
      %p17 = pneg %p16
    $region15: #{esm2_forward.39} parent=1 // pred_check_branch
      %19 = sbr.rel (%p17) target = $region17
    $region16: #{esm2_forward.39} parent=1 // pred_region
      %vm20 = vcmask 269312
      %21 = vst.msk [vmem:[#allocation2] sm:$0xff] %vm20, 0.0
      %22 = vst.msk [vmem:[#allocation2 + $0x8] sm:$0xff] %vm20, 0.0
    $region17: #{esm2_forward.39} parent=1 // pred_fallthru
      _
    %v23 = vld [vmem:[%s0] sm:$0xff]
    %v24 = vld [vmem:[%s0 + $0x8] sm:$0xff]
    %v25 = vpack.c.bf16 %v24, %v23
    %v26 = vld [vmem:[%s1] sm:$0xf]
    %v27 = vld [vmem:[%s1 + $0x4] sm:$0xf]
    %v28 = vld [vmem:[%s1 + $0x8] sm:$0xf]
    %v29 = vld [vmem:[%s1 + $0xc] sm:$0xf]
    %v30 = vld [vmem:[#allocation2] sm:$0xff]
    %v31 = vld [vmem:[#allocation2 + $0x8] sm:$0xff]
    %v36 = vunpack.c.l.b16 %v26
    %v37 = vunpack.c.l.b16 %v27
    %v38 = vunpack.c.l.b16 %v28
    %v39 = vunpack.c.l.b16 %v29
    %v40 = vpack.c.b16 %v37, %v36
    %v41 = vpack.c.b16 %v39, %v38
    %vm44 = vcmask 261120
    %v46 = vsel %vm44, %v25, 0
    %48 = vmatprep.subr.bf16.mxu0 0
    %49 = vmatpush1.bf16.msra.mxu0 %v40
    %50 = vmatprep.subr.bf16.mxu0 0
    %51 = vmatpush1.bf16.msra.mxu0 %v41
    %52 = vmatprep.subr.bf16.mxu0 0
    %53 = vmatpush1.bf16.msra.mxu0 0
    %54 = vmatprep.subr.bf16.mxu0 0
    %55 = vmatpush1.bf16.msra.mxu0 0
    %56 = vmatprep.subr.bf16.mxu0 0
    %57 = vmatpush1.bf16.msra.mxu0 0
    %58 = vmatprep.subr.bf16.mxu0 0
    %59 = vmatpush1.bf16.msra.mxu0 0
    %60 = vmatprep.subr.bf16.mxu0 0
    %61 = vmatpush1.bf16.msra.mxu0 0
    %62 = vmatprep.subr.bf16.mxu0 0
    %63 = vmatpush1.bf16.msra.mxu0 0
    %64 = vmatprep.subr.bf16.mxu0 0
    %65 = vmatpush1.bf16.msra.mxu0 0
    %66 = vmatprep.subr.bf16.mxu0 0
    %67 = vmatpush1.bf16.msra.mxu0 0
    %68 = vmatprep.subr.bf16.mxu0 0
    %69 = vmatpush1.bf16.msra.mxu0 0
    %70 = vmatprep.subr.bf16.mxu0 0
    %71 = vmatpush1.bf16.msra.mxu0 0
    %72 = vmatprep.subr.bf16.mxu0 0
    %73 = vmatpush1.bf16.msra.mxu0 0
    %74 = vmatprep.subr.bf16.mxu0 0
    %75 = vmatpush1.bf16.msra.mxu0 0
    %76 = vmatprep.subr.bf16.mxu0 0
    %77 = vmatpush1.bf16.msra.mxu0 0
    %78 = vmatprep.subr.bf16.mxu0 0
    %79 = vmatpush1.bf16.msra.mxu0 0
    %80 = vmatprep.mubr.bf16.mxu0 0
    %81 = vmatmul.mubr.bf16.gmra.mrb[0].mxu0 %v46
    %v82 = vpop.f32.mrb[0].mxu0
    %v83 = vadd.f32 0.0, %v82
    %v84 = vpop.f32.mrb[0].mxu0
    %v85 = vpop.f32.mrb[0].mxu0
    %v86 = vadd.f32 0.0, %v85
    %v87 = vpop.f32.mrb[0].mxu0
    %88 = vdwg.mxu0
    %v89 = vadd.f32 %v30, %v83
    %v90 = vadd.f32 %v31, %v86
    %vm91 = vcmask 269312
    %92 = vst.msk [vmem:[#allocation2] sm:$0xff] %vm91, %v89
    %93 = vst.msk [vmem:[#allocation2 + $0x8] sm:$0xff] %vm91, %v90
    // Predicated region
    $region18: #{esm2_forward.39} parent=1 // pred_check
      %p94 = pneg %p16
    $region19: #{esm2_forward.39} parent=1 // pred_check_branch
      %96 = sbr.rel (%p94) target = $region21
    $region20: #{esm2_forward.39} parent=1 // pred_region
      %v97 = vld [vmem:[#allocation2] sm:$0xff]
      %v98 = vld [vmem:[#allocation2 + $0x8] sm:$0xff]
      %v99 = vld [vmem:[%s2] sm:$0x1]
      %v101 = vlaneseq
      %v102 = vshrl.u32 %v101, 7
      %v103 = vsub.s32 0, %v102
      %v104 = vrot.slane %v99, %v103
      %v106 = vadd.f32 %v97, %v104
      %v107 = vadd.f32 %v98, %v104
      %108 = vst.msk [vmem:[#allocation3] sm:$0xff] %vm91, %v106
      %109 = vst.msk [vmem:[#allocation3 + $0x8] sm:$0xff] %vm91, %v107
    $region21: #{esm2_forward.39} parent=1 // pred_fallthru
      _
    // Predicated region
    $region22: #{esm2_forward.39} parent=1 // pred_check
      _
    $region23: #{esm2_forward.39} parent=1 // pred_check_branch
      %111 = sbr.rel (0) target = $region25
    $region24: #{esm2_forward.39} parent=1 // pred_region
      %s113 = ssub.s32 256, 256
      %114 = vsyncadd [#allocation4], %s113
      %s115 = sshll.u32 [#allocation3], 4
      %s116 = int_to_ptr.vmem [resolvable:$true] %s115
      %121 = dma.vmem_to_hbm [thread:$0]  %s116, 256, %s3, [#allocation4], 128, 128, 8
    $region25: #{esm2_forward.39} parent=1 // pred_fallthru
      _
    // Predicated region
    $region26: #{esm2_forward.39} parent=1 // pred_check
      _
    $region27: #{esm2_forward.39} parent=1 // pred_check_branch
      %123 = sbr.rel (0) target = $region29
    $region28: #{esm2_forward.39} parent=1 // pred_region
      %124 = dma.done [#allocation4], 256
    $region29: #{esm2_forward.39} parent=1 // pred_fallthru
      _
    %125 = vsyncpa [#allocation4], 1

</llo_original>
